<compile_context>
chip_gen: v6e
topology: v6e:2x2x1
jax: 0.10.0
libtpu: 0.0.40
codegen_flags: <defaults>
</compile_context>

<pallas_src>
import jax
import jax.numpy as jnp
from jax.experimental import pallas as pl
from jax.experimental.pallas import tpu as pltpu


# ---------------------------------------------------------------------------
# Pallas kernels
# ---------------------------------------------------------------------------
def _matmul_bias_relu_kernel(x_ref, w_ref, b_ref, o_ref):
    """o = relu(x @ w + b); x:(TM,K) bf16, w:(K,N) bf16, b:(1,N) f32."""
    acc = jnp.dot(x_ref[...], w_ref[...], preferred_element_type=jnp.float32)
    o_ref[...] = jnp.maximum(acc + b_ref[...], 0.0).astype(o_ref.dtype)


def _tail_kernel(x_ref, w3_ref, b3_ref, w1_ref, b1_ref, w2_ref, b2_ref, o_ref):
    """conv3 (as matmul) + relu, fc1 + relu, fc2 + relu — all weights in VMEM."""
    h = jnp.dot(x_ref[...], w3_ref[...], preferred_element_type=jnp.float32)
    h = jnp.maximum(h + b3_ref[...], 0.0).astype(jnp.bfloat16)      # conv3
    h = jnp.dot(h, w1_ref[...], preferred_element_type=jnp.float32)
    h = jnp.maximum(h + b1_ref[...], 0.0).astype(jnp.bfloat16)      # fc1
    h = jnp.dot(h, w2_ref[...], preferred_element_type=jnp.float32)
    o_ref[...] = jnp.maximum(h + b2_ref[...], 0.0)                  # fc2 (f32 out)


# ---------------------------------------------------------------------------
# Helpers
# ---------------------------------------------------------------------------
def _round_up(x, m):
    return ((x + m - 1) // m) * m


def _cdiv(a, b):
    return -(-a // b)


def _grid_steps(m, tm_cap):
    """>=2 balanced steps (v7x has 2 TensorCores), TM a multiple of 8."""
    steps = max(2, _cdiv(m, tm_cap))
    if steps % 2:
        steps += 1
    tm = _round_up(_cdiv(m, steps), 8)
    return steps, tm, steps * tm


def _pad_to(x, rows, cols):
    r, c = x.shape
    if rows > r or cols > c:
        x = jnp.pad(x, ((0, rows - r), (0, cols - c)))
    return x


def _im2col_nhwc(x, kh, kw, stride):
    """x:(B,H,W,C) -> (B*OH*OW, kh*kw*C), per-row order (kh, kw, c)."""
    B, H, W, C = x.shape
    OH = (H - kh) // stride + 1
    OW = (W - kw) // stride + 1
    cols = []
    for i in range(kh):
        for j in range(kw):
            cols.append(
                x[:, i : i + stride * (OH - 1) + 1 : stride,
                      j : j + stride * (OW - 1) + 1 : stride, :]
            )
    p = jnp.stack(cols, axis=3)                    # (B, OH, OW, kh*kw, C)
    return p.reshape(B * OH * OW, kh * kw * C), OH, OW


# ---------------------------------------------------------------------------
# Layer wrappers
# ---------------------------------------------------------------------------
def _conv_layer(x_nhwc, w_flat, b_row, *, out_channels, kh=5, kw=5, stride=2):
    """Conv (VALID, stride 2) + bias + ReLU via im2col matmul.

    x_nhwc : (B, H, W, C_in) bf16 — true channel width (no 128 carry)
    w_flat : (Kp, 128) bf16, Kp = kh*kw*C_in rounded up to 128
    b_row  : (1, 128) f32
    returns: (B, OH, OW, out_channels) bf16
    """
    B = x_nhwc.shape[0]
    patches, OH, OW = _im2col_nhwc(x_nhwc, kh, kw, stride)
    M, _ = patches.shape
    Kp, N = w_flat.shape
    steps, TM, Mp = _grid_steps(M, 512)
    patches = _pad_to(patches, Mp, Kp)

    y = pl.pallas_call(
        _matmul_bias_relu_kernel,
        out_shape=jax.ShapeDtypeStruct((Mp, N), jnp.bfloat16),
        grid=(steps,),
        in_specs=[
            pl.BlockSpec((TM, Kp), lambda i: (i, 0)),
            pl.BlockSpec((Kp, N), lambda i: (0, 0)),
            pl.BlockSpec((1, N), lambda i: (0, 0)),
        ],
        out_specs=pl.BlockSpec((TM, N), lambda i: (i, 0)),
        compiler_params=pltpu.CompilerParams(
            dimension_semantics=("parallel",)),
    )(patches, w_flat, b_row)
    # Slice back to real channels; XLA fuses this into the next layer's im2col.
    return y[:M, :out_channels].reshape(B, OH, OW, out_channels)


def _fused_tail(x_flat, p):
    """conv3 + relu + fc1 + relu + fc2 + relu in one pallas_call."""
    M, _ = x_flat.shape
    K3, N3 = p["conv3_w"].shape          # (1280, 128)
    N1 = p["fc1_w"].shape[1]             # 384
    N2 = p["fc2_w"].shape[1]             # 384 (padded from 320)
    steps, TM, Mp = _grid_steps(M, 256)
    x_flat = _pad_to(x_flat, Mp, K3)

    out = pl.pallas_call(
        _tail_kernel,
        out_shape=jax.ShapeDtypeStruct((Mp, N2), jnp.float32),
        grid=(steps,),
        in_specs=[
            pl.BlockSpec((TM, K3), lambda i: (i, 0)),
            pl.BlockSpec((K3, N3), lambda i: (0, 0)),
            pl.BlockSpec((1, N3), lambda i: (0, 0)),
            pl.BlockSpec((N3, N1), lambda i: (0, 0)),
            pl.BlockSpec((1, N1), lambda i: (0, 0)),
            pl.BlockSpec((N1, N2), lambda i: (0, 0)),
            pl.BlockSpec((1, N2), lambda i: (0, 0)),
        ],
        out_specs=pl.BlockSpec((TM, N2), lambda i: (i, 0)),
        compiler_params=pltpu.CompilerParams(
            dimension_semantics=("parallel",)),
    )(x_flat, p["conv3_w"], p["conv3_b"], p["fc1_w"], p["fc1_b"],
      p["fc2_w"], p["fc2_b"])
    return out[:M]


# ---------------------------------------------------------------------------
# Parameters (PyTorch-layout) and one-time re-packing for the kernels
# ---------------------------------------------------------------------------
def _conv_sizes(width, height):
    s1 = ((width - 5) // 2 + 1, (height - 5) // 2 + 1)
    s2 = ((s1[0] - 5) // 2 + 1, (s1[1] - 5) // 2 + 1)
    s3 = ((s2[0] - 5) // 2 + 1, (s2[1] - 5) // 2 + 1)
    return s1, s2, s3


def init_params(width, height, key):
    _, _, size_3 = _conv_sizes(width, height)
    fc_input = size_3[0] * size_3[1] * 64
    keys = jax.random.split(key, 12)

    def w(k, shape, scale=0.05):
        return (scale * jax.random.normal(k, shape)).astype(jnp.float32)

    return {
        "conv1_w": w(keys[0], (32, 1, 5, 5)),   "conv1_b": w(keys[1], (32,)),
        "conv2_w": w(keys[2], (48, 32, 5, 5)),  "conv2_b": w(keys[3], (48,)),
        "conv3_w": w(keys[4], (64, 48, 5, 5)),  "conv3_b": w(keys[5], (64,)),
        "fc1_w": w(keys[6], (384, fc_input)),   "fc1_b": w(keys[7], (384,)),
        "fc2_w": w(keys[8], (320, 384)),        "fc2_b": w(keys[9], (320,)),
        "fc3_w": w(keys[10], (250, 320)),       "fc3_b": w(keys[11], (250,)),
    }


def prepare_params(params, width, height):
    """One-time repack: im2col-flattened bf16 conv weights (K padded to a
    multiple of 128, output channels padded to 128), pre-transposed bf16 fc
    weights (fc2 output padded to 384), f32 biases as (1, N) rows."""
    _, size_2, size_3 = _conv_sizes(width, height)
    assert size_3 == (1, 1) and size_2 == (5, 5), (
        "fused conv3+fc tail assumes a 5x5 conv2 output / 1x1 conv3 output "
        "(e.g. 29x29 input)")

    def conv_prep(w, b, k_pad, n_pad=128):
        OC, IC, kh, kw = w.shape
        wf = jnp.transpose(w, (2, 3, 1, 0)).reshape(kh * kw * IC, OC)
        wf = jnp.pad(wf, ((0, k_pad - kh * kw * IC), (0, n_pad - OC)))
        bf = jnp.pad(b, (0, n_pad - OC)).reshape(1, n_pad)
        return wf.astype(jnp.bfloat16), bf.astype(jnp.float32)

    c1w, c1b = conv_prep(params["conv1_w"], params["conv1_b"], k_pad=128)   # K=25
    c2w, c2b = conv_prep(params["conv2_w"], params["conv2_b"], k_pad=896)   # K=800
    c3w, c3b = conv_prep(params["conv3_w"], params["conv3_b"], k_pad=1280)  # K=1200

    # fc1: conv3 output is (B, 64) (1x1 spatial) padded to 128 lanes in-kernel.
    w1 = jnp.pad(params["fc1_w"].T, ((0, 128 - 64), (0, 0))).astype(jnp.bfloat16)
    b1 = params["fc1_b"].reshape(1, 384).astype(jnp.float32)
    # fc2: (320,384) -> (384,384) lane-dense output, last 64 cols zero.
    w2 = jnp.pad(params["fc2_w"].T, ((0, 0), (0, 384 - 320))).astype(jnp.bfloat16)
    b2 = jnp.pad(params["fc2_b"], (0, 384 - 320)).reshape(1, 384).astype(jnp.float32)

    return {"conv1_w": c1w, "conv1_b": c1b,
            "conv2_w": c2w, "conv2_b": c2b,
            "conv3_w": c3w, "conv3_b": c3b,
            "fc1_w": w1, "fc1_b": b1, "fc2_w": w2, "fc2_b": b2}


# ---------------------------------------------------------------------------
# Forward
# ---------------------------------------------------------------------------
@jax.jit
def cnn_forward(x, p):
    """x: (B, 1, W, H) NCHW float32; returns relu(fc2(...)) of shape (B, 320)."""
    B = x.shape[0]
    x = jnp.transpose(x, (0, 2, 3, 1)).astype(jnp.bfloat16)   # NCHW -> NHWC
    x = _conv_layer(x, p["conv1_w"], p["conv1_b"], out_channels=32)
    x = _conv_layer(x, p["conv2_w"], p["conv2_b"], out_channels=48)
    x = x.reshape(B, -1)                                      # (B, 5*5*48)=(B,1200)
    x = _fused_tail(x, p)                                     # conv3 + fc1 + fc2
    # Reference computes softmax(fc3(x)) and discards it -> dead code, omitted.
    return x[:, :320]


# ---------------------------------------------------------------------------
# Pure-JAX f32 reference (uses original PyTorch-layout params)
# ---------------------------------------------------------------------------
def ref_forward(x, params):
    def conv(x, w, b):
        y = jax.lax.conv_general_dilated(
            x, w, window_strides=(2, 2), padding="VALID",
            dimension_numbers=("NCHW", "OIHW", "NCHW"))
        return jax.nn.relu(y + b[None, :, None, None])

    x = conv(x, params["conv1_w"], params["conv1_b"])
    x = conv(x, params["conv2_w"], params["conv2_b"])
    x = conv(x, params["conv3_w"], params["conv3_b"])
    x = x.reshape(x.shape[0], -1)
    x = jax.nn.relu(x @ params["fc1_w"].T + params["fc1_b"])
    x = jax.nn.relu(x @ params["fc2_w"].T + params["fc2_b"])
    return x


if __name__ == "__main__":
    WIDTH = HEIGHT = 29   # smallest spatial size surviving three stride-2 5x5 convs
    BATCH = 2

    key = jax.random.PRNGKey(0)
    k_params, k_x = jax.random.split(key)
    params = init_params(WIDTH, HEIGHT, k_params)
    prepped = prepare_params(params, WIDTH, HEIGHT)     # one-time weight repack
    x = jax.random.normal(k_x, (BATCH, 1, WIDTH, HEIGHT), dtype=jnp.float32)

    out = jax.block_until_ready(cnn_forward(x, prepped))
    ref = jax.block_until_ready(ref_forward(x, params))

    assert out.shape == (BATCH, 320), out.shape
    # bf16 MXU inputs (f32 accumulation) -> loosened tolerance vs the f32 reference.
    assert jnp.allclose(out.astype(jnp.float32), ref, rtol=2e-2, atol=2e-2), \
        "mismatch vs reference"

    print("KERNEL_OK")
</pallas_src>

<mosaic_0001>
module attributes {stable_mosaic.version = 11 : i64} {
  func.func @_matmul_bias_relu_kernel(%arg0: i32, %arg1: memref<176x128xbf16, #tpu.memory_space<vmem>>, %arg2: memref<128x128xbf16, #tpu.memory_space<vmem>>, %arg3: memref<1x128xf32, #tpu.memory_space<vmem>>, %arg4: memref<176x128xbf16, #tpu.memory_space<vmem>>) attributes {dimension_semantics = [#tpu.dimension_semantics<parallel>], iteration_bounds = array<i64: 2>, scalar_prefetch = 0 : i64, scratch_operands = 0 : i64, tpu.core_type = #tpu.core_type<tc>, window_params = [{transform_indices = @transform_0, window_bounds = array<i64: 176, 128>}, {pipeline_mode = #tpu.pipeline_mode<synchronous>, transform_indices = @transform_1, window_bounds = array<i64: 128, 128>}, {pipeline_mode = #tpu.pipeline_mode<synchronous>, transform_indices = @transform_2, window_bounds = array<i64: 1, 128>}, {transform_indices = @transform_3, window_bounds = array<i64: 176, 128>}]} {
    %c0 = arith.constant 0 : index
    %c0_0 = arith.constant 0 : index
    %0 = vector.load %arg1[%c0, %c0_0] : memref<176x128xbf16, #tpu.memory_space<vmem>>, vector<176x128xbf16>
    %c0_1 = arith.constant 0 : index
    %c0_2 = arith.constant 0 : index
    %1 = vector.load %arg2[%c0_1, %c0_2] : memref<128x128xbf16, #tpu.memory_space<vmem>>, vector<128x128xbf16>
    %cst = arith.constant dense<0.000000e+00> : vector<176x128xf32>
    %2 = tpu.matmul %0, %1, %cst {dimension_numbers = #tpu.dot_dimension_numbers<[1], [0], [0], [1], [0, 0, 1, 1], [], []>} : vector<176x128xbf16>, vector<128x128xbf16>, vector<176x128xf32> -> vector<176x128xf32>
    %c0_3 = arith.constant 0 : index
    %c0_4 = arith.constant 0 : index
    %3 = vector.load %arg3[%c0_3, %c0_4] : memref<1x128xf32, #tpu.memory_space<vmem>>, vector<1x128xf32>
    %4 = vector.broadcast %3 : vector<1x128xf32> to vector<176x128xf32>
    %5 = arith.addf %2, %4 : vector<176x128xf32>
    %cst_5 = arith.constant 0.000000e+00 : f32
    %6 = vector.broadcast %cst_5 : f32 to vector<176x128xf32>
    %7 = arith.maximumf %5, %6 : vector<176x128xf32>
    %8 = arith.truncf %7 : vector<176x128xf32> to vector<176x128xbf16>
    %c0_6 = arith.constant 0 : index
    %c0_7 = arith.constant 0 : index
    %9 = vector.load %arg4[%c0_6, %c0_7] : memref<176x128xbf16, #tpu.memory_space<vmem>>, vector<176x128xbf16>
    tpu.vector_store %arg4[%c0_6, %c0_7], %8 {strides = array<i32>} : memref<176x128xbf16, #tpu.memory_space<vmem>>, vector<176x128xbf16>,
    return
  }
  func.func @transform_0(%arg0: i32) -> (i32, i32) {
    %c0_i32 = arith.constant 0 : i32
    %c0_i32_0 = arith.constant 0 : i32
    return %arg0, %c0_i32 : i32, i32
  }
  func.func @transform_1(%arg0: i32) -> (i32, i32) {
    %c0_i32 = arith.constant 0 : i32
    %c0_i32_0 = arith.constant 0 : i32
    %c0_i32_1 = arith.constant 0 : i32
    return %c0_i32, %c0_i32_0 : i32, i32
  }
  func.func @transform_2(%arg0: i32) -> (i32, i32) {
    %c0_i32 = arith.constant 0 : i32
    %c0_i32_0 = arith.constant 0 : i32
    %c0_i32_1 = arith.constant 0 : i32
    return %c0_i32, %c0_i32_0 : i32, i32
  }
  func.func @transform_3(%arg0: i32) -> (i32, i32) {
    %c0_i32 = arith.constant 0 : i32
    %c0_i32_0 = arith.constant 0 : i32
    return %arg0, %c0_i32 : i32, i32
  }
}

module attributes {stable_mosaic.version = 11 : i64} {
  func.func @_matmul_bias_relu_kernel(%arg0: i32, %arg1: memref<32x896xbf16, #tpu.memory_space<vmem>>, %arg2: memref<896x128xbf16, #tpu.memory_space<vmem>>, %arg3: memref<1x128xf32, #tpu.memory_space<vmem>>, %arg4: memref<32x128xbf16, #tpu.memory_space<vmem>>) attributes {dimension_semantics = [#tpu.dimension_semantics<parallel>], iteration_bounds = array<i64: 2>, scalar_prefetch = 0 : i64, scratch_operands = 0 : i64, tpu.core_type = #tpu.core_type<tc>, window_params = [{transform_indices = @transform_0, window_bounds = array<i64: 32, 896>}, {pipeline_mode = #tpu.pipeline_mode<synchronous>, transform_indices = @transform_1, window_bounds = array<i64: 896, 128>}, {pipeline_mode = #tpu.pipeline_mode<synchronous>, transform_indices = @transform_2, window_bounds = array<i64: 1, 128>}, {transform_indices = @transform_3, window_bounds = array<i64: 32, 128>}]} {
    %c0 = arith.constant 0 : index
    %c0_0 = arith.constant 0 : index
    %0 = vector.load %arg1[%c0, %c0_0] : memref<32x896xbf16, #tpu.memory_space<vmem>>, vector<32x896xbf16>
    %c0_1 = arith.constant 0 : index
    %c0_2 = arith.constant 0 : index
    %1 = vector.load %arg2[%c0_1, %c0_2] : memref<896x128xbf16, #tpu.memory_space<vmem>>, vector<896x128xbf16>
    %cst = arith.constant dense<0.000000e+00> : vector<32x128xf32>
    %2 = tpu.matmul %0, %1, %cst {dimension_numbers = #tpu.dot_dimension_numbers<[1], [0], [0], [1], [0, 0, 1, 1], [], []>} : vector<32x896xbf16>, vector<896x128xbf16>, vector<32x128xf32> -> vector<32x128xf32>
    %c0_3 = arith.constant 0 : index
    %c0_4 = arith.constant 0 : index
    %3 = vector.load %arg3[%c0_3, %c0_4] : memref<1x128xf32, #tpu.memory_space<vmem>>, vector<1x128xf32>
    %4 = vector.broadcast %3 : vector<1x128xf32> to vector<32x128xf32>
    %5 = arith.addf %2, %4 : vector<32x128xf32>
    %cst_5 = arith.constant 0.000000e+00 : f32
    %6 = vector.broadcast %cst_5 : f32 to vector<32x128xf32>
    %7 = arith.maximumf %5, %6 : vector<32x128xf32>
    %8 = arith.truncf %7 : vector<32x128xf32> to vector<32x128xbf16>
    %c0_6 = arith.constant 0 : index
    %c0_7 = arith.constant 0 : index
    %9 = vector.load %arg4[%c0_6, %c0_7] : memref<32x128xbf16, #tpu.memory_space<vmem>>, vector<32x128xbf16>
    tpu.vector_store %arg4[%c0_6, %c0_7], %8 {strides = array<i32>} : memref<32x128xbf16, #tpu.memory_space<vmem>>, vector<32x128xbf16>,
    return
  }
  func.func @transform_0(%arg0: i32) -> (i32, i32) {
    %c0_i32 = arith.constant 0 : i32
    %c0_i32_0 = arith.constant 0 : i32
    return %arg0, %c0_i32 : i32, i32
  }
  func.func @transform_1(%arg0: i32) -> (i32, i32) {
    %c0_i32 = arith.constant 0 : i32
    %c0_i32_0 = arith.constant 0 : i32
    %c0_i32_1 = arith.constant 0 : i32
    return %c0_i32, %c0_i32_0 : i32, i32
  }
  func.func @transform_2(%arg0: i32) -> (i32, i32) {
    %c0_i32 = arith.constant 0 : i32
    %c0_i32_0 = arith.constant 0 : i32
    %c0_i32_1 = arith.constant 0 : i32
    return %c0_i32, %c0_i32_0 : i32, i32
  }
  func.func @transform_3(%arg0: i32) -> (i32, i32) {
    %c0_i32 = arith.constant 0 : i32
    %c0_i32_0 = arith.constant 0 : i32
    return %arg0, %c0_i32 : i32, i32
  }
}

module attributes {stable_mosaic.version = 11 : i64} {
  func.func @_tail_kernel(%arg0: i32, %arg1: memref<8x1280xbf16, #tpu.memory_space<vmem>>, %arg2: memref<1280x128xbf16, #tpu.memory_space<vmem>>, %arg3: memref<1x128xf32, #tpu.memory_space<vmem>>, %arg4: memref<128x384xbf16, #tpu.memory_space<vmem>>, %arg5: memref<1x384xf32, #tpu.memory_space<vmem>>, %arg6: memref<384x384xbf16, #tpu.memory_space<vmem>>, %arg7: memref<1x384xf32, #tpu.memory_space<vmem>>, %arg8: memref<8x384xf32, #tpu.memory_space<vmem>>) attributes {dimension_semantics = [#tpu.dimension_semantics<parallel>], iteration_bounds = array<i64: 2>, scalar_prefetch = 0 : i64, scratch_operands = 0 : i64, tpu.core_type = #tpu.core_type<tc>, window_params = [{transform_indices = @transform_0, window_bounds = array<i64: 8, 1280>}, {pipeline_mode = #tpu.pipeline_mode<synchronous>, transform_indices = @transform_1, window_bounds = array<i64: 1280, 128>}, {pipeline_mode = #tpu.pipeline_mode<synchronous>, transform_indices = @transform_2, window_bounds = array<i64: 1, 128>}, {pipeline_mode = #tpu.pipeline_mode<synchronous>, transform_indices = @transform_3, window_bounds = array<i64: 128, 384>}, {pipeline_mode = #tpu.pipeline_mode<synchronous>, transform_indices = @transform_4, window_bounds = array<i64: 1, 384>}, {pipeline_mode = #tpu.pipeline_mode<synchronous>, transform_indices = @transform_5, window_bounds = array<i64: 384, 384>}, {pipeline_mode = #tpu.pipeline_mode<synchronous>, transform_indices = @transform_6, window_bounds = array<i64: 1, 384>}, {transform_indices = @transform_7, window_bounds = array<i64: 8, 384>}]} {
    %c0 = arith.constant 0 : index
    %c0_0 = arith.constant 0 : index
    %0 = vector.load %arg1[%c0, %c0_0] : memref<8x1280xbf16, #tpu.memory_space<vmem>>, vector<8x1280xbf16>
    %c0_1 = arith.constant 0 : index
    %c0_2 = arith.constant 0 : index
    %1 = vector.load %arg2[%c0_1, %c0_2] : memref<1280x128xbf16, #tpu.memory_space<vmem>>, vector<1280x128xbf16>
    %cst = arith.constant dense<0.000000e+00> : vector<8x128xf32>
    %2 = tpu.matmul %0, %1, %cst {dimension_numbers = #tpu.dot_dimension_numbers<[1], [0], [0], [1], [0, 0, 1, 1], [], []>} : vector<8x1280xbf16>, vector<1280x128xbf16>, vector<8x128xf32> -> vector<8x128xf32>
    %c0_3 = arith.constant 0 : index
    %c0_4 = arith.constant 0 : index
    %3 = vector.load %arg3[%c0_3, %c0_4] : memref<1x128xf32, #tpu.memory_space<vmem>>, vector<1x128xf32>
    %4 = vector.broadcast %3 : vector<1x128xf32> to vector<8x128xf32>
    %5 = arith.addf %2, %4 : vector<8x128xf32>
    %cst_5 = arith.constant 0.000000e+00 : f32
    %6 = vector.broadcast %cst_5 : f32 to vector<8x128xf32>
    %7 = arith.maximumf %5, %6 : vector<8x128xf32>
    %8 = arith.truncf %7 : vector<8x128xf32> to vector<8x128xbf16>
    %c0_6 = arith.constant 0 : index
    %c0_7 = arith.constant 0 : index
    %9 = vector.load %arg4[%c0_6, %c0_7] : memref<128x384xbf16, #tpu.memory_space<vmem>>, vector<128x384xbf16>
    %cst_8 = arith.constant dense<0.000000e+00> : vector<8x384xf32>
    %10 = tpu.matmul %8, %9, %cst_8 {dimension_numbers = #tpu.dot_dimension_numbers<[1], [0], [0], [1], [0, 0, 1, 1], [], []>} : vector<8x128xbf16>, vector<128x384xbf16>, vector<8x384xf32> -> vector<8x384xf32>
    %c0_9 = arith.constant 0 : index
    %c0_10 = arith.constant 0 : index
    %11 = vector.load %arg5[%c0_9, %c0_10] : memref<1x384xf32, #tpu.memory_space<vmem>>, vector<1x384xf32>
    %12 = vector.broadcast %11 : vector<1x384xf32> to vector<8x384xf32>
    %13 = arith.addf %10, %12 : vector<8x384xf32>
    %cst_11 = arith.constant 0.000000e+00 : f32
    %14 = vector.broadcast %cst_11 : f32 to vector<8x384xf32>
    %15 = arith.maximumf %13, %14 : vector<8x384xf32>
    %16 = arith.truncf %15 : vector<8x384xf32> to vector<8x384xbf16>
    %c0_12 = arith.constant 0 : index
    %c0_13 = arith.constant 0 : index
    %17 = vector.load %arg6[%c0_12, %c0_13] : memref<384x384xbf16, #tpu.memory_space<vmem>>, vector<384x384xbf16>
    %cst_14 = arith.constant dense<0.000000e+00> : vector<8x384xf32>
    %18 = tpu.matmul %16, %17, %cst_14 {dimension_numbers = #tpu.dot_dimension_numbers<[1], [0], [0], [1], [0, 0, 1, 1], [], []>} : vector<8x384xbf16>, vector<384x384xbf16>, vector<8x384xf32> -> vector<8x384xf32>
    %c0_15 = arith.constant 0 : index
    %c0_16 = arith.constant 0 : index
    %19 = vector.load %arg7[%c0_15, %c0_16] : memref<1x384xf32, #tpu.memory_space<vmem>>, vector<1x384xf32>
    %20 = vector.broadcast %19 : vector<1x384xf32> to vector<8x384xf32>
    %21 = arith.addf %18, %20 : vector<8x384xf32>
    %cst_17 = arith.constant 0.000000e+00 : f32
    %22 = vector.broadcast %cst_17 : f32 to vector<8x384xf32>
    %23 = arith.maximumf %21, %22 : vector<8x384xf32>
    %c0_18 = arith.constant 0 : index
    %c0_19 = arith.constant 0 : index
    %24 = vector.load %arg8[%c0_18, %c0_19] : memref<8x384xf32, #tpu.memory_space<vmem>>, vector<8x384xf32>
    tpu.vector_store %arg8[%c0_18, %c0_19], %23 {strides = array<i32>} : memref<8x384xf32, #tpu.memory_space<vmem>>, vector<8x384xf32>,
    return
  }
  func.func @transform_0(%arg0: i32) -> (i32, i32) {
    %c0_i32 = arith.constant 0 : i32
    %c0_i32_0 = arith.constant 0 : i32
    return %arg0, %c0_i32 : i32, i32
  }
  func.func @transform_1(%arg0: i32) -> (i32, i32) {
    %c0_i32 = arith.constant 0 : i32
    %c0_i32_0 = arith.constant 0 : i32
    %c0_i32_1 = arith.constant 0 : i32
    return %c0_i32, %c0_i32_0 : i32, i32
  }
  func.func @transform_2(%arg0: i32) -> (i32, i32) {
    %c0_i32 = arith.constant 0 : i32
    %c0_i32_0 = arith.constant 0 : i32
    %c0_i32_1 = arith.constant 0 : i32
    return %c0_i32, %c0_i32_0 : i32, i32
  }
  func.func @transform_3(%arg0: i32) -> (i32, i32) {
    %c0_i32 = arith.constant 0 : i32
    %c0_i32_0 = arith.constant 0 : i32
    %c0_i32_1 = arith.constant 0 : i32
    return %c0_i32, %c0_i32_0 : i32, i32
  }
  func.func @transform_4(%arg0: i32) -> (i32, i32) {
    %c0_i32 = arith.constant 0 : i32
    %c0_i32_0 = arith.constant 0 : i32
    %c0_i32_1 = arith.constant 0 : i32
    return %c0_i32, %c0_i32_0 : i32, i32
  }
  func.func @transform_5(%arg0: i32) -> (i32, i32) {
    %c0_i32 = arith.constant 0 : i32
    %c0_i32_0 = arith.constant 0 : i32
    %c0_i32_1 = arith.constant 0 : i32
    return %c0_i32, %c0_i32_0 : i32, i32
  }
  func.func @transform_6(%arg0: i32) -> (i32, i32) {
    %c0_i32 = arith.constant 0 : i32
    %c0_i32_0 = arith.constant 0 : i32
    %c0_i32_1 = arith.constant 0 : i32
    return %c0_i32, %c0_i32_0 : i32, i32
  }
  func.func @transform_7(%arg0: i32) -> (i32, i32) {
    %c0_i32 = arith.constant 0 : i32
    %c0_i32_0 = arith.constant 0 : i32
    return %arg0, %c0_i32 : i32, i32
  }
}

</mosaic_0001>

<llo_original>
// kernel: cnn_forward.3
$region0: #{cnn_forward.3}
  #allocation0 [shape = 'u32[]', space=smem, size = 0x4, offset = 0x4, fixed_abs, tag = 'smem constant byte address 0x4 - core index']
  #allocation1 [shape = 'u32[144,128]{1,0:T(1,128)}', space=vmem, size = 0x12000, scoped, tag = 'internal scratch']
  %s0 = inlined_call_operand.vmem [shape: bf16[352,128], index: 0, kind: input, shape index: {}]
  %s1 = inlined_call_operand.vmem [shape: bf16[128,128], index: 1, kind: input, shape index: {}]
  %s2 = inlined_call_operand.vmem [shape: f32[1,128], index: 2, kind: input, shape index: {}]
  %s3 = inlined_call_operand.vmem [shape: bf16[352,128], index: 3, kind: output, shape index: {}]
  %s4 = sld [smem:[#allocation0]]
  $region45: #{cnn_forward.3} parent=0
    _
  %s6 = ssub.s32 1, %s4
  %s7 = scalar_select 0, %s6, %s4
  loop: start=0, step=1, limit=4
  $region2: #{cnn_forward.3} parent=0 // loop_pre_header
    _
  $region3: #{cnn_forward.3} parent=0 // loop_header
    %s9 = sphi 0, %s13
    %p10 = scmp.ge.s32.totalorder %s9, 4
    %s19 = sphi 0, %s21
    %s22 = sphi 0, %s19
    %s23 = sphi 0, %s22
    %s39 = sphi 0, %s23
    %s43 = sphi 0, %s43
    %s45 = sphi 0, %s43
    %s46 = sphi 0, %s45
    %s60 = sphi 0, %s46
    %s64 = sphi 0, %s64
    %s66 = sphi 0, %s64
    %s67 = sphi 0, %s66
    %s81 = sphi 0, %s67
    %s87 = sphi 0, %s89
    %s90 = sphi 0, %s87
    %s91 = sphi 0, %s90
    %s107 = sphi 0, %s91
  $region4: #{cnn_forward.3} parent=0 // loop_header_branch
    %12 = sbr.rel (%p10) target = $region8
  $region5: #{cnn_forward.3} parent=0 // loop_body
    %s14 = ssub.s32 %s9, 1
    %s15 = ssub.s32 %s9, 2
    %s16 = sadd.s32 %s9, 1
    %s17 = ssub.s32 %s9, %s16
    %p18 = scmp.eq.s32.totalorder %s17, 0
    %s20 = sadd.s32 %s19, 1
    %s21 = scalar_select %p18, %s19, %s20
    %p24 = pneg %p18
    %p25 = scmp.eq.s32.totalorder %s9, 1
    %p26 = por %p24, %p25
    %p27 = scmp.ne.s32.totalorder %s19, %s22
    %p28 = scmp.eq.s32.totalorder %s9, 0
    %p29 = por %p27, %p28
    %p30 = scmp.ne.s32.totalorder %s19, %s22
    %p31 = scmp.eq.s32.totalorder %s14, 1
    %p32 = por %p30, %p31
    %p33 = scmp.ne.s32.totalorder %s22, %s23
    %p34 = scmp.eq.s32.totalorder %s14, 0
    %p35 = por %p33, %p34
    %p36 = scmp.ne.s32.totalorder %s22, %s23
    %p37 = scmp.eq.s32.totalorder %s15, 1
    %p38 = por %p36, %p37
    %p40 = scmp.ne.s32.totalorder %s23, %s39
    %p41 = scmp.eq.s32.totalorder %s15, 0
    %p42 = por %p40, %p41
    %s44 = sadd.s32 %s43, 1
    %p47 = scmp.eq.s32.totalorder %s9, 1
    %p48 = scmp.ne.s32.totalorder %s43, %s45
    %p49 = scmp.eq.s32.totalorder %s9, 0
    %p50 = por %p48, %p49
    %p51 = scmp.ne.s32.totalorder %s43, %s45
    %p52 = scmp.eq.s32.totalorder %s14, 1
    %p53 = por %p51, %p52
    %p54 = scmp.ne.s32.totalorder %s45, %s46
    %p55 = scmp.eq.s32.totalorder %s14, 0
    %p56 = por %p54, %p55
    %p57 = scmp.ne.s32.totalorder %s45, %s46
    %p58 = scmp.eq.s32.totalorder %s15, 1
    %p59 = por %p57, %p58
    %p61 = scmp.ne.s32.totalorder %s46, %s60
    %p62 = scmp.eq.s32.totalorder %s15, 0
    %p63 = por %p61, %p62
    %s65 = sadd.s32 %s64, 1
    %p68 = scmp.eq.s32.totalorder %s9, 1
    %p69 = scmp.ne.s32.totalorder %s64, %s66
    %p70 = scmp.eq.s32.totalorder %s9, 0
    %p71 = por %p69, %p70
    %p72 = scmp.ne.s32.totalorder %s64, %s66
    %p73 = scmp.eq.s32.totalorder %s14, 1
    %p74 = por %p72, %p73
    %p75 = scmp.ne.s32.totalorder %s66, %s67
    %p76 = scmp.eq.s32.totalorder %s14, 0
    %p77 = por %p75, %p76
    %p78 = scmp.ne.s32.totalorder %s66, %s67
    %p79 = scmp.eq.s32.totalorder %s15, 1
    %p80 = por %p78, %p79
    %p82 = scmp.ne.s32.totalorder %s67, %s81
    %p83 = scmp.eq.s32.totalorder %s15, 0
    %p84 = por %p82, %p83
    %s85 = ssub.s32 %s9, %s16
    %p86 = scmp.eq.s32.totalorder %s85, 0
    %s88 = sadd.s32 %s87, 1
    %s89 = scalar_select %p86, %s87, %s88
    %p92 = pneg %p86
    %p93 = scmp.eq.s32.totalorder %s9, 1
    %p94 = por %p92, %p93
    %p95 = scmp.ne.s32.totalorder %s87, %s90
    %p96 = scmp.eq.s32.totalorder %s9, 0
    %p97 = por %p95, %p96
    %p98 = scmp.ne.s32.totalorder %s87, %s90
    %p99 = scmp.eq.s32.totalorder %s14, 1
    %p100 = por %p98, %p99
    %p101 = scmp.ne.s32.totalorder %s90, %s91
    %p102 = scmp.eq.s32.totalorder %s14, 0
    %p103 = por %p101, %p102
    %p104 = scmp.ne.s32.totalorder %s90, %s91
    %p105 = scmp.eq.s32.totalorder %s15, 1
    %p106 = por %p104, %p105
    %p108 = scmp.ne.s32.totalorder %s91, %s107
    %p109 = scmp.eq.s32.totalorder %s15, 0
    %p110 = por %p108, %p109
    %p111 = scmp.le.s32.totalorder 1, %s9
    %p112 = scmp.lt.s32.totalorder %s9, 3
    %p113 = pnand %p111, %p112
    %p114 = pneg %p113
    // Predicated region
    $region9: #{cnn_forward.3} parent=5 // pred_check
      _
    $region10: #{cnn_forward.3} parent=5 // pred_check_branch
      %116 = sbr.rel (%p113) target = $region12
    $region11: #{cnn_forward.3} parent=5 // pred_region
      %s117 = ssub.s32 %s9, 1
      // Predicated region
      $region13: #{cnn_forward.3} parent=11 // pred_check
        %p118 = pneg %p56
      $region14: #{cnn_forward.3} parent=11 // pred_check_branch
        %120 = sbr.rel (%p118) target = $region16
      $region15: #{cnn_forward.3} parent=11 // pred_region
        _
      $region16: #{cnn_forward.3} parent=11 // pred_fallthru
        _
      // Predicated region
      $region17: #{cnn_forward.3} parent=11 // pred_check
        %p121 = pneg %p77
      $region18: #{cnn_forward.3} parent=11 // pred_check_branch
        %123 = sbr.rel (%p121) target = $region20
      $region19: #{cnn_forward.3} parent=11 // pred_region
        _
      $region20: #{cnn_forward.3} parent=11 // pred_fallthru
        _
    $region12: #{cnn_forward.3} parent=5 // pred_fallthru
      _
    %p124 = scmp.lt.s32.totalorder %s9, 2
    // Predicated region
    $region21: #{cnn_forward.3} parent=5 // pred_check
      %p125 = pneg %p124
    $region22: #{cnn_forward.3} parent=5 // pred_check_branch
      %127 = sbr.rel (%p125) target = $region24
    $region23: #{cnn_forward.3} parent=5 // pred_region
      // Predicated region
      $region25: #{cnn_forward.3} parent=23 // pred_check
        %p128 = pneg %p29
      $region26: #{cnn_forward.3} parent=23 // pred_check_branch
        %130 = sbr.rel (%p128) target = $region28
      $region27: #{cnn_forward.3} parent=23 // pred_region
        %s131 = smul.u32 22, %s9
        %p132 = scmp.lt.s32.totalorder %s131, 43
        %s133 = scalar_select %p132, %s131, 43
        %s134 = smul.addr %s133, 4
        %s135 = scalar_lea.vmem %s0, %s134
        %s136 = smul.u32 22, %s9
      $region28: #{cnn_forward.3} parent=23 // pred_fallthru
        _
    $region24: #{cnn_forward.3} parent=5 // pred_fallthru
      _
    %p137 = scmp.le.s32.totalorder 1, %s9
    %p138 = scmp.lt.s32.totalorder %s9, 3
    %p139 = pnand %p137, %p138
    %p140 = pneg %p139
    // Predicated region
    $region29: #{cnn_forward.3} parent=5 // pred_check
      _
    $region30: #{cnn_forward.3} parent=5 // pred_check_branch
      %142 = sbr.rel (%p139) target = $region32
    $region31: #{cnn_forward.3} parent=5 // pred_region
      %s143 = ssub.s32 %s9, 1
      %s144 = smul.u32 22, %s14
      %p145 = scmp.lt.s32.totalorder %s144, 43
      %s146 = scalar_select %p145, %s144, 43
      %s147 = smul.addr %s146, 4
      %s148 = scalar_lea.vmem %s0, %s147
      %p149 = pneg %p35
      %p150 = pneg %p32
      %p151 = pneg %p56
      %p152 = pneg %p53
      %p153 = pneg %p77
      %p154 = pneg %p74
      %p155 = pneg %p103
      %p156 = pneg %p100
      %s157 = smul.u32 22, %s14
      %p158 = scmp.lt.s32.totalorder %s157, 43
      %s159 = scalar_select %p158, %s157, 43
      %s160 = smul.addr %s159, 4
      %s161 = scalar_lea.vmem %s3, %s160
      %s162 = smul.u32 22, %s14
      %p163 = scmp.lt.s32.totalorder %s162, 43
      %s164 = scalar_select %p163, %s162, 43
      %s165 = smul.addr %s164, 4
      %s166 = scalar_lea.vmem %s0, %s165
      %s167 = smul.u32 22, %s14
      %s168 = smul.u32 22, %s14
      %p169 = scmp.lt.s32.totalorder %s168, 43
      %s170 = scalar_select %p169, %s168, 43
      %s171 = smul.addr %s170, 4
      %s172 = scalar_lea.vmem %s3, %s171
      %s173 = smul.u32 22, %s14
      %v175 = vld [vmem:[%s166] sm:$0xf]
      %v176 = vld [vmem:[%s166 + $0x4] sm:$0xf]
      %v177 = vld [vmem:[%s166 + $0x8] sm:$0xf]
      %v178 = vld [vmem:[%s166 + $0xc] sm:$0xf]
      %v179 = vld [vmem:[%s166 + $0x10] sm:$0xf]
      %v180 = vld [vmem:[%s166 + $0x14] sm:$0xf]
      %v181 = vld [vmem:[%s166 + $0x18] sm:$0xf]
      %v182 = vld [vmem:[%s166 + $0x1c] sm:$0xf]
      %v183 = vld [vmem:[%s166 + $0x20] sm:$0xf]
      %v184 = vld [vmem:[%s166 + $0x24] sm:$0xf]
      %v185 = vld [vmem:[%s166 + $0x28] sm:$0xf]
      %v186 = vld [vmem:[%s166 + $0x2c] sm:$0xf]
      %v187 = vld [vmem:[%s166 + $0x30] sm:$0xf]
      %v188 = vld [vmem:[%s166 + $0x34] sm:$0xf]
      %v189 = vld [vmem:[%s166 + $0x38] sm:$0xf]
      %v190 = vld [vmem:[%s166 + $0x3c] sm:$0xf]
      %v191 = vld [vmem:[%s166 + $0x40] sm:$0xf]
      %v192 = vld [vmem:[%s166 + $0x44] sm:$0xf]
      %v193 = vld [vmem:[%s166 + $0x48] sm:$0xf]
      %v194 = vld [vmem:[%s166 + $0x4c] sm:$0xf]
      %v195 = vld [vmem:[%s166 + $0x50] sm:$0xf]
      %v196 = vld [vmem:[%s166 + $0x54] sm:$0xf]
      %v197 = vld [vmem:[%s1] sm:$0xf]
      %v198 = vld [vmem:[%s1 + $0x4] sm:$0xf]
      %v199 = vld [vmem:[%s1 + $0x8] sm:$0xf]
      %v200 = vld [vmem:[%s1 + $0xc] sm:$0xf]
      %v201 = vld [vmem:[%s1 + $0x10] sm:$0xf]
      %v202 = vld [vmem:[%s1 + $0x14] sm:$0xf]
      %v203 = vld [vmem:[%s1 + $0x18] sm:$0xf]
      %v204 = vld [vmem:[%s1 + $0x1c] sm:$0xf]
      %v205 = vld [vmem:[%s1 + $0x20] sm:$0xf]
      %v206 = vld [vmem:[%s1 + $0x24] sm:$0xf]
      %v207 = vld [vmem:[%s1 + $0x28] sm:$0xf]
      %v208 = vld [vmem:[%s1 + $0x2c] sm:$0xf]
      %v209 = vld [vmem:[%s1 + $0x30] sm:$0xf]
      %v210 = vld [vmem:[%s1 + $0x34] sm:$0xf]
      %v211 = vld [vmem:[%s1 + $0x38] sm:$0xf]
      %v212 = vld [vmem:[%s1 + $0x3c] sm:$0xf]
      %v213 = vld [vmem:[%s2] sm:$0x1]
      %v215 = vlaneseq
      %v216 = vshrl.u32 %v215, 7
      %v217 = vsub.s32 0, %v216
      %v218 = vrot.slane %v213, %v217
      %v242 = vunpack.c.l.b16 %v175
      %v243 = vunpack.c.l.b16 %v176
      %v244 = vunpack.c.l.b16 %v177
      %v245 = vunpack.c.l.b16 %v178
      %v246 = vunpack.c.l.b16 %v179
      %v247 = vunpack.c.l.b16 %v180
      %v248 = vunpack.c.l.b16 %v181
      %v249 = vunpack.c.l.b16 %v182
      %v250 = vunpack.c.l.b16 %v183
      %v251 = vunpack.c.l.b16 %v184
      %v252 = vunpack.c.l.b16 %v185
      %v253 = vunpack.c.l.b16 %v186
      %v254 = vunpack.c.l.b16 %v187
      %v255 = vunpack.c.l.b16 %v188
      %v256 = vunpack.c.l.b16 %v189
      %v257 = vunpack.c.l.b16 %v190
      %v258 = vunpack.c.l.b16 %v191
      %v259 = vunpack.c.l.b16 %v192
      %v260 = vunpack.c.l.b16 %v193
      %v261 = vunpack.c.l.b16 %v194
      %v262 = vunpack.c.l.b16 %v195
      %v263 = vunpack.c.l.b16 %v196
      %v264 = vpack.c.b16 %v243, %v242
      %v265 = vpack.c.b16 %v245, %v244
      %v266 = vpack.c.b16 %v247, %v246
      %v267 = vpack.c.b16 %v249, %v248
      %v268 = vpack.c.b16 %v251, %v250
      %v269 = vpack.c.b16 %v253, %v252
      %v270 = vpack.c.b16 %v255, %v254
      %v271 = vpack.c.b16 %v257, %v256
      %v272 = vpack.c.b16 %v259, %v258
      %v273 = vpack.c.b16 %v261, %v260
      %v274 = vpack.c.b16 %v263, %v262
      %v302 = vunpack.c.l.b16 %v197
      %v303 = vunpack.c.l.b16 %v198
      %v304 = vunpack.c.l.b16 %v199
      %v305 = vunpack.c.l.b16 %v200
      %v306 = vunpack.c.l.b16 %v201
      %v307 = vunpack.c.l.b16 %v202
      %v308 = vunpack.c.l.b16 %v203
      %v309 = vunpack.c.l.b16 %v204
      %v310 = vunpack.c.l.b16 %v205
      %v311 = vunpack.c.l.b16 %v206
      %v312 = vunpack.c.l.b16 %v207
      %v313 = vunpack.c.l.b16 %v208
      %v314 = vunpack.c.l.b16 %v209
      %v315 = vunpack.c.l.b16 %v210
      %v316 = vunpack.c.l.b16 %v211
      %v317 = vunpack.c.l.b16 %v212
      %v318 = vpack.c.b16 %v303, %v302
      %v319 = vpack.c.b16 %v305, %v304
      %v320 = vpack.c.b16 %v307, %v306
      %v321 = vpack.c.b16 %v309, %v308
      %v322 = vpack.c.b16 %v311, %v310
      %v323 = vpack.c.b16 %v313, %v312
      %v324 = vpack.c.b16 %v315, %v314
      %v325 = vpack.c.b16 %v317, %v316
      %334 = vmatprep.subr.bf16.mxu0 0
      %335 = vmatpush1.bf16.msra.mxu0 %v325
      %336 = vmatprep.subr.bf16.mxu0 0
      %337 = vmatpush1.bf16.msra.mxu0 %v324
      %338 = vmatprep.subr.bf16.mxu0 0
      %339 = vmatpush1.bf16.msra.mxu0 %v323
      %340 = vmatprep.subr.bf16.mxu0 0
      %341 = vmatpush1.bf16.msra.mxu0 %v322
      %342 = vmatprep.subr.bf16.mxu0 0
      %343 = vmatpush1.bf16.msra.mxu0 %v321
      %344 = vmatprep.subr.bf16.mxu0 0
      %345 = vmatpush1.bf16.msra.mxu0 %v320
      %346 = vmatprep.subr.bf16.mxu0 0
      %347 = vmatpush1.bf16.msra.mxu0 %v319
      %348 = vmatprep.subr.bf16.mxu0 0
      %349 = vmatpush1.bf16.msra.mxu0 %v318
      %350 = vmatprep.subr.bf16.mxu0 0
      %351 = vmatpush2.bf16.msra.mxu0 0
      %352 = vmatprep.subr.bf16.mxu0 0
      %353 = vmatpush2.bf16.msra.mxu0 0
      %354 = vmatprep.subr.bf16.mxu0 0
      %355 = vmatpush2.bf16.msra.mxu0 0
      %356 = vmatprep.subr.bf16.mxu0 0
      %357 = vmatpush2.bf16.msra.mxu0 0
      %358 = vmatprep.subr.bf16.mxu0 0
      %359 = vmatpush2.bf16.msra.mxu0 0
      %360 = vmatprep.subr.bf16.mxu0 0
      %361 = vmatpush2.bf16.msra.mxu0 0
      %362 = vmatprep.subr.bf16.mxu0 0
      %363 = vmatpush2.bf16.msra.mxu0 0
      %364 = vmatprep.subr.bf16.mxu0 0
      %365 = vmatpush2.bf16.msra.mxu0 0
      %366 = vmatprep.mubr.bf16.mxu0 0
      %367 = vmatmul.mubr.bf16.gmra.mxu0 %v264
      %v368 = vpop.f32.mrf.mxu0
      %v369 = vadd.f32 %v218, %v368
      %v370 = vpop.f32.mrf.mxu0
      %v371 = vpop.f32.mrf.mxu0
      %v372 = vadd.f32 %v218, %v371
      %v373 = vpop.f32.mrf.mxu0
      %374 = vmatprep.mubr.bf16.mxu0 0
      %375 = vmatmul.mubr.bf16.gmra.mxu0 %v265
      %v376 = vpop.f32.mrf.mxu0
      %v377 = vadd.f32 %v218, %v376
      %v378 = vpop.f32.mrf.mxu0
      %v379 = vpop.f32.mrf.mxu0
      %v380 = vadd.f32 %v218, %v379
      %v381 = vpop.f32.mrf.mxu0
      %382 = vmatprep.mubr.bf16.mxu0 0
      %383 = vmatmul.mubr.bf16.gmra.mxu0 %v266
      %v384 = vpop.f32.mrf.mxu0
      %v385 = vadd.f32 %v218, %v384
      %v386 = vpop.f32.mrf.mxu0
      %v387 = vpop.f32.mrf.mxu0
      %v388 = vadd.f32 %v218, %v387
      %v389 = vpop.f32.mrf.mxu0
      %390 = vmatprep.mubr.bf16.mxu0 0
      %391 = vmatmul.mubr.bf16.gmra.mxu0 %v267
      %v392 = vpop.f32.mrf.mxu0
      %v393 = vadd.f32 %v218, %v392
      %v394 = vpop.f32.mrf.mxu0
      %v395 = vpop.f32.mrf.mxu0
      %v396 = vadd.f32 %v218, %v395
      %v397 = vpop.f32.mrf.mxu0
      %398 = vmatprep.mubr.bf16.mxu0 0
      %399 = vmatmul.mubr.bf16.gmra.mxu0 %v268
      %v400 = vpop.f32.mrf.mxu0
      %v401 = vadd.f32 %v218, %v400
      %v402 = vpop.f32.mrf.mxu0
      %v403 = vpop.f32.mrf.mxu0
      %v404 = vadd.f32 %v218, %v403
      %v405 = vpop.f32.mrf.mxu0
      %406 = vmatprep.mubr.bf16.mxu0 0
      %407 = vmatmul.mubr.bf16.gmra.mxu0 %v269
      %v408 = vpop.f32.mrf.mxu0
      %v409 = vadd.f32 %v218, %v408
      %v410 = vpop.f32.mrf.mxu0
      %v411 = vpop.f32.mrf.mxu0
      %v412 = vadd.f32 %v218, %v411
      %v413 = vpop.f32.mrf.mxu0
      %414 = vmatprep.mubr.bf16.mxu0 0
      %415 = vmatmul.mubr.bf16.gmra.mxu0 %v270
      %v416 = vpop.f32.mrf.mxu0
      %v417 = vadd.f32 %v218, %v416
      %v418 = vpop.f32.mrf.mxu0
      %v419 = vpop.f32.mrf.mxu0
      %v420 = vadd.f32 %v218, %v419
      %v421 = vpop.f32.mrf.mxu0
      %422 = vmatprep.mubr.bf16.mxu0 0
      %423 = vmatmul.mubr.bf16.gmra.mxu0 %v271
      %v424 = vpop.f32.mrf.mxu0
      %v425 = vadd.f32 %v218, %v424
      %v426 = vpop.f32.mrf.mxu0
      %v427 = vpop.f32.mrf.mxu0
      %v428 = vadd.f32 %v218, %v427
      %v429 = vpop.f32.mrf.mxu0
      %430 = vmatprep.mubr.bf16.mxu0 0
      %431 = vmatmul.mubr.bf16.gmra.mxu0 %v272
      %v432 = vpop.f32.mrf.mxu0
      %v433 = vadd.f32 %v218, %v432
      %v434 = vpop.f32.mrf.mxu0
      %v435 = vpop.f32.mrf.mxu0
      %v436 = vadd.f32 %v218, %v435
      %v437 = vpop.f32.mrf.mxu0
      %438 = vmatprep.mubr.bf16.mxu0 0
      %439 = vmatmul.mubr.bf16.gmra.mxu0 %v273
      %v440 = vpop.f32.mrf.mxu0
      %v441 = vadd.f32 %v218, %v440
      %v442 = vpop.f32.mrf.mxu0
      %v443 = vpop.f32.mrf.mxu0
      %v444 = vadd.f32 %v218, %v443
      %v445 = vpop.f32.mrf.mxu0
      %446 = vmatprep.mubr.bf16.mxu0 0
      %447 = vmatmul.mubr.bf16.gmra.mxu0 %v274
      %v448 = vpop.f32.mrf.mxu0
      %v449 = vadd.f32 %v218, %v448
      %v450 = vpop.f32.mrf.mxu0
      %v451 = vpop.f32.mrf.mxu0
      %v452 = vadd.f32 %v218, %v451
      %v453 = vpop.f32.mrf.mxu0
      %454 = vdwg.mxu0
      %v455 = vmax.f32 %v369, 0.0
      %v456 = vmax.f32 %v372, 0.0
      %v457 = vmax.f32 %v377, 0.0
      %v458 = vmax.f32 %v380, 0.0
      %v459 = vmax.f32 %v385, 0.0
      %v460 = vmax.f32 %v388, 0.0
      %v461 = vmax.f32 %v393, 0.0
      %v462 = vmax.f32 %v396, 0.0
      %v463 = vmax.f32 %v401, 0.0
      %v464 = vmax.f32 %v404, 0.0
      %v465 = vmax.f32 %v409, 0.0
      %v466 = vmax.f32 %v412, 0.0
      %v467 = vmax.f32 %v417, 0.0
      %v468 = vmax.f32 %v420, 0.0
      %v469 = vmax.f32 %v425, 0.0
      %v470 = vmax.f32 %v428, 0.0
      %v471 = vmax.f32 %v433, 0.0
      %v472 = vmax.f32 %v436, 0.0
      %v473 = vmax.f32 %v441, 0.0
      %v474 = vmax.f32 %v444, 0.0
      %v475 = vmax.f32 %v449, 0.0
      %v476 = vmax.f32 %v452, 0.0
      %v477 = vpack.c.bf16 %v456, %v455
      %v478 = vpack.c.bf16 %v458, %v457
      %v479 = vpack.c.bf16 %v460, %v459
      %v480 = vpack.c.bf16 %v462, %v461
      %v481 = vpack.c.bf16 %v464, %v463
      %v482 = vpack.c.bf16 %v466, %v465
      %v483 = vpack.c.bf16 %v468, %v467
      %v484 = vpack.c.bf16 %v470, %v469
      %v485 = vpack.c.bf16 %v472, %v471
      %v486 = vpack.c.bf16 %v474, %v473
      %v487 = vpack.c.bf16 %v476, %v475
      %v499 = vunpack.c.l.b16 %v477
      %v500 = vunpack.c.h.b16 %v477
      %v501 = vunpack.c.l.b16 %v478
      %v502 = vunpack.c.h.b16 %v478
      %v503 = vunpack.c.l.b16 %v479
      %v504 = vunpack.c.h.b16 %v479
      %v505 = vunpack.c.l.b16 %v480
      %v506 = vunpack.c.h.b16 %v480
      %v507 = vunpack.c.l.b16 %v481
      %v508 = vunpack.c.h.b16 %v481
      %v509 = vunpack.c.l.b16 %v482
      %v510 = vunpack.c.h.b16 %v482
      %v511 = vunpack.c.l.b16 %v483
      %v512 = vunpack.c.h.b16 %v483
      %v513 = vunpack.c.l.b16 %v484
      %v514 = vunpack.c.h.b16 %v484
      %v515 = vunpack.c.l.b16 %v485
      %v516 = vunpack.c.h.b16 %v485
      %v517 = vunpack.c.l.b16 %v486
      %v518 = vunpack.c.h.b16 %v486
      %v519 = vunpack.c.l.b16 %v487
      %v520 = vunpack.c.h.b16 %v487
      %v521 = vpack.c.b16 %v499, %v499
      %v522 = vpack.c.b16 %v500, %v500
      %v523 = vpack.c.b16 %v501, %v501
      %v524 = vpack.c.b16 %v502, %v502
      %v525 = vpack.c.b16 %v503, %v503
      %v526 = vpack.c.b16 %v504, %v504
      %v527 = vpack.c.b16 %v505, %v505
      %v528 = vpack.c.b16 %v506, %v506
      %v529 = vpack.c.b16 %v507, %v507
      %v530 = vpack.c.b16 %v508, %v508
      %v531 = vpack.c.b16 %v509, %v509
      %v532 = vpack.c.b16 %v510, %v510
      %v533 = vpack.c.b16 %v511, %v511
      %v534 = vpack.c.b16 %v512, %v512
      %v535 = vpack.c.b16 %v513, %v513
      %v536 = vpack.c.b16 %v514, %v514
      %v537 = vpack.c.b16 %v515, %v515
      %v538 = vpack.c.b16 %v516, %v516
      %v539 = vpack.c.b16 %v517, %v517
      %v540 = vpack.c.b16 %v518, %v518
      %v541 = vpack.c.b16 %v519, %v519
      %v542 = vpack.c.b16 %v520, %v520
      %565 = vst [vmem:[%s172] sm:$0xf] %v521
      %566 = vst [vmem:[%s172 + $0x4] sm:$0xf] %v522
      %567 = vst [vmem:[%s172 + $0x8] sm:$0xf] %v523
      %568 = vst [vmem:[%s172 + $0xc] sm:$0xf] %v524
      %569 = vst [vmem:[%s172 + $0x10] sm:$0xf] %v525
      %570 = vst [vmem:[%s172 + $0x14] sm:$0xf] %v526
      %571 = vst [vmem:[%s172 + $0x18] sm:$0xf] %v527
      %572 = vst [vmem:[%s172 + $0x1c] sm:$0xf] %v528
      %573 = vst [vmem:[%s172 + $0x20] sm:$0xf] %v529
      %574 = vst [vmem:[%s172 + $0x24] sm:$0xf] %v530
      %575 = vst [vmem:[%s172 + $0x28] sm:$0xf] %v531
      %576 = vst [vmem:[%s172 + $0x2c] sm:$0xf] %v532
      %577 = vst [vmem:[%s172 + $0x30] sm:$0xf] %v533
      %578 = vst [vmem:[%s172 + $0x34] sm:$0xf] %v534
      %579 = vst [vmem:[%s172 + $0x38] sm:$0xf] %v535
      %580 = vst [vmem:[%s172 + $0x3c] sm:$0xf] %v536
      %581 = vst [vmem:[%s172 + $0x40] sm:$0xf] %v537
      %582 = vst [vmem:[%s172 + $0x44] sm:$0xf] %v538
      %583 = vst [vmem:[%s172 + $0x48] sm:$0xf] %v539
      %584 = vst [vmem:[%s172 + $0x4c] sm:$0xf] %v540
      %585 = vst [vmem:[%s172 + $0x50] sm:$0xf] %v541
      %586 = vst [vmem:[%s172 + $0x54] sm:$0xf] %v542
      %s587 = smul.u32 22, %s14
      %p588 = scmp.lt.s32.totalorder %s587, 43
      %s589 = scalar_select %p588, %s587, 43
      %s590 = smul.addr %s589, 4
      %s591 = scalar_lea.vmem %s3, %s590
      // Predicated region
      $region33: #{cnn_forward.3} parent=31 // pred_check
        %p592 = pneg %p100
      $region34: #{cnn_forward.3} parent=31 // pred_check_branch
        %594 = sbr.rel (%p592) target = $region36
      $region35: #{cnn_forward.3} parent=31 // pred_region
        %s595 = smul.u32 22, %s14
      $region36: #{cnn_forward.3} parent=31 // pred_fallthru
        _
    $region32: #{cnn_forward.3} parent=5 // pred_fallthru
      _
    %p596 = scmp.le.s32.totalorder 2, %s9
    // Predicated region
    $region37: #{cnn_forward.3} parent=5 // pred_check
      %p597 = pneg %p596
    $region38: #{cnn_forward.3} parent=5 // pred_check_branch
      %599 = sbr.rel (%p597) target = $region40
    $region39: #{cnn_forward.3} parent=5 // pred_region
      %s600 = ssub.s32 %s9, 2
      // Predicated region
      $region41: #{cnn_forward.3} parent=39 // pred_check
        %p601 = pneg %p106
      $region42: #{cnn_forward.3} parent=39 // pred_check_branch
        %603 = sbr.rel (%p601) target = $region44
      $region43: #{cnn_forward.3} parent=39 // pred_region
        %s604 = smul.u32 22, %s15
        %p605 = scmp.lt.s32.totalorder %s604, 43
        %s606 = scalar_select %p605, %s604, 43
        %s607 = smul.addr %s606, 4
        %s608 = scalar_lea.vmem %s3, %s607
      $region44: #{cnn_forward.3} parent=39 // pred_fallthru
        _
    $region40: #{cnn_forward.3} parent=5 // pred_fallthru
      _
  $region6: #{cnn_forward.3} parent=0 // loop_footer
    %s13 = sadd.s32 1, %s9
  $region7: #{cnn_forward.3} parent=0 // loop_footer_branch
    %8 = sbr.rel target = $region3
  $region8: #{cnn_forward.3} parent=0 // loop_exit
    _

// kernel: cnn_forward.4
$region0: #{cnn_forward.4}
  #allocation0 [shape = 'u32[]', space=smem, size = 0x4, offset = 0x4, fixed_abs, tag = 'smem constant byte address 0x4 - core index']
  #allocation1 [shape = 'u32[144,128]{1,0:T(1,128)}', space=vmem, size = 0x12000, scoped, tag = 'internal scratch']
  %s0 = inlined_call_operand.vmem [shape: bf16[64,896], index: 0, kind: input, shape index: {}]
  %s1 = inlined_call_operand.vmem [shape: bf16[896,128], index: 1, kind: input, shape index: {}]
  %s2 = inlined_call_operand.vmem [shape: f32[1,128], index: 2, kind: input, shape index: {}]
  %s3 = inlined_call_operand.vmem [shape: bf16[64,128], index: 3, kind: output, shape index: {}]
  %s4 = sld [smem:[#allocation0]]
  $region45: #{cnn_forward.4} parent=0
    _
  %s6 = ssub.s32 1, %s4
  %s7 = scalar_select 0, %s6, %s4
  loop: start=0, step=1, limit=4
  $region2: #{cnn_forward.4} parent=0 // loop_pre_header
    _
  $region3: #{cnn_forward.4} parent=0 // loop_header
    %s9 = sphi 0, %s13
    %p10 = scmp.ge.s32.totalorder %s9, 4
    %s19 = sphi 0, %s21
    %s22 = sphi 0, %s19
    %s23 = sphi 0, %s22
    %s39 = sphi 0, %s23
    %s43 = sphi 0, %s43
    %s45 = sphi 0, %s43
    %s46 = sphi 0, %s45
    %s60 = sphi 0, %s46
    %s64 = sphi 0, %s64
    %s66 = sphi 0, %s64
    %s67 = sphi 0, %s66
    %s81 = sphi 0, %s67
    %s87 = sphi 0, %s89
    %s90 = sphi 0, %s87
    %s91 = sphi 0, %s90
    %s107 = sphi 0, %s91
  $region4: #{cnn_forward.4} parent=0 // loop_header_branch
    %12 = sbr.rel (%p10) target = $region8
  $region5: #{cnn_forward.4} parent=0 // loop_body
    %s14 = ssub.s32 %s9, 1
    %s15 = ssub.s32 %s9, 2
    %s16 = sadd.s32 %s9, 1
    %s17 = ssub.s32 %s9, %s16
    %p18 = scmp.eq.s32.totalorder %s17, 0
    %s20 = sadd.s32 %s19, 1
    %s21 = scalar_select %p18, %s19, %s20
    %p24 = pneg %p18
    %p25 = scmp.eq.s32.totalorder %s9, 1
    %p26 = por %p24, %p25
    %p27 = scmp.ne.s32.totalorder %s19, %s22
    %p28 = scmp.eq.s32.totalorder %s9, 0
    %p29 = por %p27, %p28
    %p30 = scmp.ne.s32.totalorder %s19, %s22
    %p31 = scmp.eq.s32.totalorder %s14, 1
    %p32 = por %p30, %p31
    %p33 = scmp.ne.s32.totalorder %s22, %s23
    %p34 = scmp.eq.s32.totalorder %s14, 0
    %p35 = por %p33, %p34
    %p36 = scmp.ne.s32.totalorder %s22, %s23
    %p37 = scmp.eq.s32.totalorder %s15, 1
    %p38 = por %p36, %p37
    %p40 = scmp.ne.s32.totalorder %s23, %s39
    %p41 = scmp.eq.s32.totalorder %s15, 0
    %p42 = por %p40, %p41
    %s44 = sadd.s32 %s43, 1
    %p47 = scmp.eq.s32.totalorder %s9, 1
    %p48 = scmp.ne.s32.totalorder %s43, %s45
    %p49 = scmp.eq.s32.totalorder %s9, 0
    %p50 = por %p48, %p49
    %p51 = scmp.ne.s32.totalorder %s43, %s45
    %p52 = scmp.eq.s32.totalorder %s14, 1
    %p53 = por %p51, %p52
    %p54 = scmp.ne.s32.totalorder %s45, %s46
    %p55 = scmp.eq.s32.totalorder %s14, 0
    %p56 = por %p54, %p55
    %p57 = scmp.ne.s32.totalorder %s45, %s46
    %p58 = scmp.eq.s32.totalorder %s15, 1
    %p59 = por %p57, %p58
    %p61 = scmp.ne.s32.totalorder %s46, %s60
    %p62 = scmp.eq.s32.totalorder %s15, 0
    %p63 = por %p61, %p62
    %s65 = sadd.s32 %s64, 1
    %p68 = scmp.eq.s32.totalorder %s9, 1
    %p69 = scmp.ne.s32.totalorder %s64, %s66
    %p70 = scmp.eq.s32.totalorder %s9, 0
    %p71 = por %p69, %p70
    %p72 = scmp.ne.s32.totalorder %s64, %s66
    %p73 = scmp.eq.s32.totalorder %s14, 1
    %p74 = por %p72, %p73
    %p75 = scmp.ne.s32.totalorder %s66, %s67
    %p76 = scmp.eq.s32.totalorder %s14, 0
    %p77 = por %p75, %p76
    %p78 = scmp.ne.s32.totalorder %s66, %s67
    %p79 = scmp.eq.s32.totalorder %s15, 1
    %p80 = por %p78, %p79
    %p82 = scmp.ne.s32.totalorder %s67, %s81
    %p83 = scmp.eq.s32.totalorder %s15, 0
    %p84 = por %p82, %p83
    %s85 = ssub.s32 %s9, %s16
    %p86 = scmp.eq.s32.totalorder %s85, 0
    %s88 = sadd.s32 %s87, 1
    %s89 = scalar_select %p86, %s87, %s88
    %p92 = pneg %p86
    %p93 = scmp.eq.s32.totalorder %s9, 1
    %p94 = por %p92, %p93
    %p95 = scmp.ne.s32.totalorder %s87, %s90
    %p96 = scmp.eq.s32.totalorder %s9, 0
    %p97 = por %p95, %p96
    %p98 = scmp.ne.s32.totalorder %s87, %s90
    %p99 = scmp.eq.s32.totalorder %s14, 1
    %p100 = por %p98, %p99
    %p101 = scmp.ne.s32.totalorder %s90, %s91
    %p102 = scmp.eq.s32.totalorder %s14, 0
    %p103 = por %p101, %p102
    %p104 = scmp.ne.s32.totalorder %s90, %s91
    %p105 = scmp.eq.s32.totalorder %s15, 1
    %p106 = por %p104, %p105
    %p108 = scmp.ne.s32.totalorder %s91, %s107
    %p109 = scmp.eq.s32.totalorder %s15, 0
    %p110 = por %p108, %p109
    %p111 = scmp.le.s32.totalorder 1, %s9
    %p112 = scmp.lt.s32.totalorder %s9, 3
    %p113 = pnand %p111, %p112
    %p114 = pneg %p113
    // Predicated region
    $region9: #{cnn_forward.4} parent=5 // pred_check
      _
    $region10: #{cnn_forward.4} parent=5 // pred_check_branch
      %116 = sbr.rel (%p113) target = $region12
    $region11: #{cnn_forward.4} parent=5 // pred_region
      %s117 = ssub.s32 %s9, 1
      // Predicated region
      $region13: #{cnn_forward.4} parent=11 // pred_check
        %p118 = pneg %p56
      $region14: #{cnn_forward.4} parent=11 // pred_check_branch
        %120 = sbr.rel (%p118) target = $region16
      $region15: #{cnn_forward.4} parent=11 // pred_region
        _
      $region16: #{cnn_forward.4} parent=11 // pred_fallthru
        _
      // Predicated region
      $region17: #{cnn_forward.4} parent=11 // pred_check
        %p121 = pneg %p77
      $region18: #{cnn_forward.4} parent=11 // pred_check_branch
        %123 = sbr.rel (%p121) target = $region20
      $region19: #{cnn_forward.4} parent=11 // pred_region
        _
      $region20: #{cnn_forward.4} parent=11 // pred_fallthru
        _
    $region12: #{cnn_forward.4} parent=5 // pred_fallthru
      _
    %p124 = scmp.lt.s32.totalorder %s9, 2
    // Predicated region
    $region21: #{cnn_forward.4} parent=5 // pred_check
      %p125 = pneg %p124
    $region22: #{cnn_forward.4} parent=5 // pred_check_branch
      %127 = sbr.rel (%p125) target = $region24
    $region23: #{cnn_forward.4} parent=5 // pred_region
      // Predicated region
      $region25: #{cnn_forward.4} parent=23 // pred_check
        %p128 = pneg %p29
      $region26: #{cnn_forward.4} parent=23 // pred_check_branch
        %130 = sbr.rel (%p128) target = $region28
      $region27: #{cnn_forward.4} parent=23 // pred_region
        %s131 = smul.u32 4, %s9
        %p132 = scmp.lt.s32.totalorder %s131, 7
        %s133 = scalar_select %p132, %s131, 7
        %s134 = smul.addr %s133, 7
        %s135 = smul.addr %s134, 4
        %s136 = scalar_lea.vmem %s0, %s135
        %s137 = smul.u32 4, %s9
      $region28: #{cnn_forward.4} parent=23 // pred_fallthru
        _
    $region24: #{cnn_forward.4} parent=5 // pred_fallthru
      _
    %p138 = scmp.le.s32.totalorder 1, %s9
    %p139 = scmp.lt.s32.totalorder %s9, 3
    %p140 = pnand %p138, %p139
    %p141 = pneg %p140
    // Predicated region
    $region29: #{cnn_forward.4} parent=5 // pred_check
      _
    $region30: #{cnn_forward.4} parent=5 // pred_check_branch
      %143 = sbr.rel (%p140) target = $region32
    $region31: #{cnn_forward.4} parent=5 // pred_region
      %s144 = ssub.s32 %s9, 1
      %s145 = smul.u32 4, %s14
      %p146 = scmp.lt.s32.totalorder %s145, 7
      %s147 = scalar_select %p146, %s145, 7
      %s148 = smul.addr %s147, 7
      %s149 = smul.addr %s148, 4
      %s150 = scalar_lea.vmem %s0, %s149
      %p151 = pneg %p35
      %p152 = pneg %p32
      %p153 = pneg %p56
      %p154 = pneg %p53
      %p155 = pneg %p77
      %p156 = pneg %p74
      %p157 = pneg %p103
      %p158 = pneg %p100
      %s159 = smul.u32 4, %s14
      %p160 = scmp.lt.s32.totalorder %s159, 7
      %s161 = scalar_select %p160, %s159, 7
      %s162 = smul.addr %s161, 4
      %s163 = scalar_lea.vmem %s3, %s162
      %s164 = smul.u32 4, %s14
      %p165 = scmp.lt.s32.totalorder %s164, 7
      %s166 = scalar_select %p165, %s164, 7
      %s167 = smul.addr %s166, 7
      %s168 = smul.addr %s167, 4
      %s169 = scalar_lea.vmem %s0, %s168
      %s170 = smul.u32 4, %s14
      %s171 = smul.u32 4, %s14
      %p172 = scmp.lt.s32.totalorder %s171, 7
      %s173 = scalar_select %p172, %s171, 7
      %s174 = smul.addr %s173, 4
      %s175 = scalar_lea.vmem %s3, %s174
      %s176 = smul.u32 4, %s14
      %v178 = vld [vmem:[%s169] sm:$0xff]
      %v179 = vld [vmem:[%s169 + $0x8] sm:$0xff]
      %v180 = vld [vmem:[%s169 + $0x10] sm:$0xff]
      %v181 = vld [vmem:[%s169 + $0x18] sm:$0xf]
      %v182 = vld [vmem:[%s169 + $0x1c] sm:$0xff]
      %v183 = vld [vmem:[%s169 + $0x24] sm:$0xff]
      %v184 = vld [vmem:[%s169 + $0x2c] sm:$0xff]
      %v185 = vld [vmem:[%s169 + $0x34] sm:$0xf]
      %v186 = vld [vmem:[%s169 + $0x38] sm:$0xff]
      %v187 = vld [vmem:[%s169 + $0x40] sm:$0xff]
      %v188 = vld [vmem:[%s169 + $0x48] sm:$0xff]
      %v189 = vld [vmem:[%s169 + $0x50] sm:$0xf]
      %v190 = vld [vmem:[%s169 + $0x54] sm:$0xff]
      %v191 = vld [vmem:[%s169 + $0x5c] sm:$0xff]
      %v192 = vld [vmem:[%s169 + $0x64] sm:$0xff]
      %v193 = vld [vmem:[%s169 + $0x6c] sm:$0xf]
      %v194 = vld [vmem:[%s1] sm:$0xf]
      %v195 = vld [vmem:[%s1 + $0x4] sm:$0xf]
      %v196 = vld [vmem:[%s1 + $0x8] sm:$0xf]
      %v197 = vld [vmem:[%s1 + $0xc] sm:$0xf]
      %v198 = vld [vmem:[%s1 + $0x10] sm:$0xf]
      %v199 = vld [vmem:[%s1 + $0x14] sm:$0xf]
      %v200 = vld [vmem:[%s1 + $0x18] sm:$0xf]
      %v201 = vld [vmem:[%s1 + $0x1c] sm:$0xf]
      %v202 = vld [vmem:[%s1 + $0x20] sm:$0xf]
      %v203 = vld [vmem:[%s1 + $0x24] sm:$0xf]
      %v204 = vld [vmem:[%s1 + $0x28] sm:$0xf]
      %v205 = vld [vmem:[%s1 + $0x2c] sm:$0xf]
      %v206 = vld [vmem:[%s1 + $0x30] sm:$0xf]
      %v207 = vld [vmem:[%s1 + $0x34] sm:$0xf]
      %v208 = vld [vmem:[%s1 + $0x38] sm:$0xf]
      %v209 = vld [vmem:[%s1 + $0x3c] sm:$0xf]
      %v210 = vld [vmem:[%s1 + $0x40] sm:$0xf]
      %v211 = vld [vmem:[%s1 + $0x44] sm:$0xf]
      %v212 = vld [vmem:[%s1 + $0x48] sm:$0xf]
      %v213 = vld [vmem:[%s1 + $0x4c] sm:$0xf]
      %v214 = vld [vmem:[%s1 + $0x50] sm:$0xf]
      %v215 = vld [vmem:[%s1 + $0x54] sm:$0xf]
      %v216 = vld [vmem:[%s1 + $0x58] sm:$0xf]
      %v217 = vld [vmem:[%s1 + $0x5c] sm:$0xf]
      %v218 = vld [vmem:[%s1 + $0x60] sm:$0xf]
      %v219 = vld [vmem:[%s1 + $0x64] sm:$0xf]
      %v220 = vld [vmem:[%s1 + $0x68] sm:$0xf]
      %v221 = vld [vmem:[%s1 + $0x6c] sm:$0xf]
      %v222 = vld [vmem:[%s1 + $0x70] sm:$0xf]
      %v223 = vld [vmem:[%s1 + $0x74] sm:$0xf]
      %v224 = vld [vmem:[%s1 + $0x78] sm:$0xf]
      %v225 = vld [vmem:[%s1 + $0x7c] sm:$0xf]
      %v226 = vld [vmem:[%s1 + $0x80] sm:$0xf]
      %v227 = vld [vmem:[%s1 + $0x84] sm:$0xf]
      %v228 = vld [vmem:[%s1 + $0x88] sm:$0xf]
      %v229 = vld [vmem:[%s1 + $0x8c] sm:$0xf]
      %v230 = vld [vmem:[%s1 + $0x90] sm:$0xf]
      %v231 = vld [vmem:[%s1 + $0x94] sm:$0xf]
      %v232 = vld [vmem:[%s1 + $0x98] sm:$0xf]
      %v233 = vld [vmem:[%s1 + $0x9c] sm:$0xf]
      %v234 = vld [vmem:[%s1 + $0xa0] sm:$0xf]
      %v235 = vld [vmem:[%s1 + $0xa4] sm:$0xf]
      %v236 = vld [vmem:[%s1 + $0xa8] sm:$0xf]
      %v237 = vld [vmem:[%s1 + $0xac] sm:$0xf]
      %v238 = vld [vmem:[%s1 + $0xb0] sm:$0xf]
      %v239 = vld [vmem:[%s1 + $0xb4] sm:$0xf]
      %v240 = vld [vmem:[%s1 + $0xb8] sm:$0xf]
      %v241 = vld [vmem:[%s1 + $0xbc] sm:$0xf]
      %v242 = vld [vmem:[%s1 + $0xc0] sm:$0xf]
      %v243 = vld [vmem:[%s1 + $0xc4] sm:$0xf]
      %v244 = vld [vmem:[%s1 + $0xc8] sm:$0xf]
      %v245 = vld [vmem:[%s1 + $0xcc] sm:$0xf]
      %v246 = vld [vmem:[%s1 + $0xd0] sm:$0xf]
      %v247 = vld [vmem:[%s1 + $0xd4] sm:$0xf]
      %v248 = vld [vmem:[%s1 + $0xd8] sm:$0xf]
      %v249 = vld [vmem:[%s1 + $0xdc] sm:$0xf]
      %v250 = vld [vmem:[%s1 + $0xe0] sm:$0xf]
      %v251 = vld [vmem:[%s1 + $0xe4] sm:$0xf]
      %v252 = vld [vmem:[%s1 + $0xe8] sm:$0xf]
      %v253 = vld [vmem:[%s1 + $0xec] sm:$0xf]
      %v254 = vld [vmem:[%s1 + $0xf0] sm:$0xf]
      %v255 = vld [vmem:[%s1 + $0xf4] sm:$0xf]
      %v256 = vld [vmem:[%s1 + $0xf8] sm:$0xf]
      %v257 = vld [vmem:[%s1 + $0xfc] sm:$0xf]
      %v258 = vld [vmem:[%s1 + $0x100] sm:$0xf]
      %v259 = vld [vmem:[%s1 + $0x104] sm:$0xf]
      %v260 = vld [vmem:[%s1 + $0x108] sm:$0xf]
      %v261 = vld [vmem:[%s1 + $0x10c] sm:$0xf]
      %v262 = vld [vmem:[%s1 + $0x110] sm:$0xf]
      %v263 = vld [vmem:[%s1 + $0x114] sm:$0xf]
      %v264 = vld [vmem:[%s1 + $0x118] sm:$0xf]
      %v265 = vld [vmem:[%s1 + $0x11c] sm:$0xf]
      %v266 = vld [vmem:[%s1 + $0x120] sm:$0xf]
      %v267 = vld [vmem:[%s1 + $0x124] sm:$0xf]
      %v268 = vld [vmem:[%s1 + $0x128] sm:$0xf]
      %v269 = vld [vmem:[%s1 + $0x12c] sm:$0xf]
      %v270 = vld [vmem:[%s1 + $0x130] sm:$0xf]
      %v271 = vld [vmem:[%s1 + $0x134] sm:$0xf]
      %v272 = vld [vmem:[%s1 + $0x138] sm:$0xf]
      %v273 = vld [vmem:[%s1 + $0x13c] sm:$0xf]
      %v274 = vld [vmem:[%s1 + $0x140] sm:$0xf]
      %v275 = vld [vmem:[%s1 + $0x144] sm:$0xf]
      %v276 = vld [vmem:[%s1 + $0x148] sm:$0xf]
      %v277 = vld [vmem:[%s1 + $0x14c] sm:$0xf]
      %v278 = vld [vmem:[%s1 + $0x150] sm:$0xf]
      %v279 = vld [vmem:[%s1 + $0x154] sm:$0xf]
      %v280 = vld [vmem:[%s1 + $0x158] sm:$0xf]
      %v281 = vld [vmem:[%s1 + $0x15c] sm:$0xf]
      %v282 = vld [vmem:[%s1 + $0x160] sm:$0xf]
      %v283 = vld [vmem:[%s1 + $0x164] sm:$0xf]
      %v284 = vld [vmem:[%s1 + $0x168] sm:$0xf]
      %v285 = vld [vmem:[%s1 + $0x16c] sm:$0xf]
      %v286 = vld [vmem:[%s1 + $0x170] sm:$0xf]
      %v287 = vld [vmem:[%s1 + $0x174] sm:$0xf]
      %v288 = vld [vmem:[%s1 + $0x178] sm:$0xf]
      %v289 = vld [vmem:[%s1 + $0x17c] sm:$0xf]
      %v290 = vld [vmem:[%s1 + $0x180] sm:$0xf]
      %v291 = vld [vmem:[%s1 + $0x184] sm:$0xf]
      %v292 = vld [vmem:[%s1 + $0x188] sm:$0xf]
      %v293 = vld [vmem:[%s1 + $0x18c] sm:$0xf]
      %v294 = vld [vmem:[%s1 + $0x190] sm:$0xf]
      %v295 = vld [vmem:[%s1 + $0x194] sm:$0xf]
      %v296 = vld [vmem:[%s1 + $0x198] sm:$0xf]
      %v297 = vld [vmem:[%s1 + $0x19c] sm:$0xf]
      %v298 = vld [vmem:[%s1 + $0x1a0] sm:$0xf]
      %v299 = vld [vmem:[%s1 + $0x1a4] sm:$0xf]
      %v300 = vld [vmem:[%s1 + $0x1a8] sm:$0xf]
      %v301 = vld [vmem:[%s1 + $0x1ac] sm:$0xf]
      %v302 = vld [vmem:[%s1 + $0x1b0] sm:$0xf]
      %v303 = vld [vmem:[%s1 + $0x1b4] sm:$0xf]
      %v304 = vld [vmem:[%s1 + $0x1b8] sm:$0xf]
      %v305 = vld [vmem:[%s1 + $0x1bc] sm:$0xf]
      %v306 = vld [vmem:[%s2] sm:$0x1]
      %v308 = vlaneseq
      %v309 = vshrl.u32 %v308, 7
      %v310 = vsub.s32 0, %v309
      %v311 = vrot.slane %v306, %v310
      %v329 = vunpack.c.l.b16 %v178
      %v330 = vunpack.c.h.b16 %v178
      %v331 = vunpack.c.l.b16 %v179
      %v332 = vunpack.c.h.b16 %v179
      %v333 = vunpack.c.l.b16 %v180
      %v334 = vunpack.c.h.b16 %v180
      %v335 = vunpack.c.l.b16 %v181
      %v336 = vunpack.c.l.b16 %v182
      %v337 = vunpack.c.h.b16 %v182
      %v338 = vunpack.c.l.b16 %v183
      %v339 = vunpack.c.h.b16 %v183
      %v340 = vunpack.c.l.b16 %v184
      %v341 = vunpack.c.h.b16 %v184
      %v342 = vunpack.c.l.b16 %v185
      %v343 = vunpack.c.l.b16 %v186
      %v344 = vunpack.c.h.b16 %v186
      %v345 = vunpack.c.l.b16 %v187
      %v346 = vunpack.c.h.b16 %v187
      %v347 = vunpack.c.l.b16 %v188
      %v348 = vunpack.c.h.b16 %v188
      %v349 = vunpack.c.l.b16 %v189
      %v350 = vunpack.c.l.b16 %v190
      %v351 = vunpack.c.h.b16 %v190
      %v352 = vunpack.c.l.b16 %v191
      %v353 = vunpack.c.h.b16 %v191
      %v354 = vunpack.c.l.b16 %v192
      %v355 = vunpack.c.h.b16 %v192
      %v356 = vunpack.c.l.b16 %v193
      %v357 = vpack.c.b16 %v336, %v329
      %v358 = vpack.c.b16 %v337, %v330
      %v359 = vpack.c.b16 %v338, %v331
      %v360 = vpack.c.b16 %v339, %v332
      %v361 = vpack.c.b16 %v340, %v333
      %v362 = vpack.c.b16 %v341, %v334
      %v363 = vpack.c.b16 %v342, %v335
      %v364 = vpack.c.b16 %v350, %v343
      %v365 = vpack.c.b16 %v351, %v344
      %v366 = vpack.c.b16 %v352, %v345
      %v367 = vpack.c.b16 %v353, %v346
      %v368 = vpack.c.b16 %v354, %v347
      %v369 = vpack.c.b16 %v355, %v348
      %v370 = vpack.c.b16 %v356, %v349
      %v497 = vunpack.c.l.b16 %v194
      %v498 = vunpack.c.l.b16 %v195
      %v499 = vunpack.c.l.b16 %v196
      %v500 = vunpack.c.l.b16 %v197
      %v501 = vunpack.c.l.b16 %v198
      %v502 = vunpack.c.l.b16 %v199
      %v503 = vunpack.c.l.b16 %v200
      %v504 = vunpack.c.l.b16 %v201
      %v505 = vunpack.c.l.b16 %v202
      %v506 = vunpack.c.l.b16 %v203
      %v507 = vunpack.c.l.b16 %v204
      %v508 = vunpack.c.l.b16 %v205
      %v509 = vunpack.c.l.b16 %v206
      %v510 = vunpack.c.l.b16 %v207
      %v511 = vunpack.c.l.b16 %v208
      %v512 = vunpack.c.l.b16 %v209
      %v513 = vunpack.c.l.b16 %v210
      %v514 = vunpack.c.l.b16 %v211
      %v515 = vunpack.c.l.b16 %v212
      %v516 = vunpack.c.l.b16 %v213
      %v517 = vunpack.c.l.b16 %v214
      %v518 = vunpack.c.l.b16 %v215
      %v519 = vunpack.c.l.b16 %v216
      %v520 = vunpack.c.l.b16 %v217
      %v521 = vunpack.c.l.b16 %v218
      %v522 = vunpack.c.l.b16 %v219
      %v523 = vunpack.c.l.b16 %v220
      %v524 = vunpack.c.l.b16 %v221
      %v525 = vunpack.c.l.b16 %v222
      %v526 = vunpack.c.l.b16 %v223
      %v527 = vunpack.c.l.b16 %v224
      %v528 = vunpack.c.l.b16 %v225
      %v529 = vunpack.c.l.b16 %v226
      %v530 = vunpack.c.l.b16 %v227
      %v531 = vunpack.c.l.b16 %v228
      %v532 = vunpack.c.l.b16 %v229
      %v533 = vunpack.c.l.b16 %v230
      %v534 = vunpack.c.l.b16 %v231
      %v535 = vunpack.c.l.b16 %v232
      %v536 = vunpack.c.l.b16 %v233
      %v537 = vunpack.c.l.b16 %v234
      %v538 = vunpack.c.l.b16 %v235
      %v539 = vunpack.c.l.b16 %v236
      %v540 = vunpack.c.l.b16 %v237
      %v541 = vunpack.c.l.b16 %v238
      %v542 = vunpack.c.l.b16 %v239
      %v543 = vunpack.c.l.b16 %v240
      %v544 = vunpack.c.l.b16 %v241
      %v545 = vunpack.c.l.b16 %v242
      %v546 = vunpack.c.l.b16 %v243
      %v547 = vunpack.c.l.b16 %v244
      %v548 = vunpack.c.l.b16 %v245
      %v549 = vunpack.c.l.b16 %v246
      %v550 = vunpack.c.l.b16 %v247
      %v551 = vunpack.c.l.b16 %v248
      %v552 = vunpack.c.l.b16 %v249
      %v553 = vunpack.c.l.b16 %v250
      %v554 = vunpack.c.l.b16 %v251
      %v555 = vunpack.c.l.b16 %v252
      %v556 = vunpack.c.l.b16 %v253
      %v557 = vunpack.c.l.b16 %v254
      %v558 = vunpack.c.l.b16 %v255
      %v559 = vunpack.c.l.b16 %v256
      %v560 = vunpack.c.l.b16 %v257
      %v561 = vunpack.c.l.b16 %v258
      %v562 = vunpack.c.l.b16 %v259
      %v563 = vunpack.c.l.b16 %v260
      %v564 = vunpack.c.l.b16 %v261
      %v565 = vunpack.c.l.b16 %v262
      %v566 = vunpack.c.l.b16 %v263
      %v567 = vunpack.c.l.b16 %v264
      %v568 = vunpack.c.l.b16 %v265
      %v569 = vunpack.c.l.b16 %v266
      %v570 = vunpack.c.l.b16 %v267
      %v571 = vunpack.c.l.b16 %v268
      %v572 = vunpack.c.l.b16 %v269
      %v573 = vunpack.c.l.b16 %v270
      %v574 = vunpack.c.l.b16 %v271
      %v575 = vunpack.c.l.b16 %v272
      %v576 = vunpack.c.l.b16 %v273
      %v577 = vunpack.c.l.b16 %v274
      %v578 = vunpack.c.l.b16 %v275
      %v579 = vunpack.c.l.b16 %v276
      %v580 = vunpack.c.l.b16 %v277
      %v581 = vunpack.c.l.b16 %v278
      %v582 = vunpack.c.l.b16 %v279
      %v583 = vunpack.c.l.b16 %v280
      %v584 = vunpack.c.l.b16 %v281
      %v585 = vunpack.c.l.b16 %v282
      %v586 = vunpack.c.l.b16 %v283
      %v587 = vunpack.c.l.b16 %v284
      %v588 = vunpack.c.l.b16 %v285
      %v589 = vunpack.c.l.b16 %v286
      %v590 = vunpack.c.l.b16 %v287
      %v591 = vunpack.c.l.b16 %v288
      %v592 = vunpack.c.l.b16 %v289
      %v593 = vunpack.c.l.b16 %v290
      %v594 = vunpack.c.l.b16 %v291
      %v595 = vunpack.c.l.b16 %v292
      %v596 = vunpack.c.l.b16 %v293
      %v597 = vunpack.c.l.b16 %v294
      %v598 = vunpack.c.l.b16 %v295
      %v599 = vunpack.c.l.b16 %v296
      %v600 = vunpack.c.l.b16 %v297
      %v601 = vunpack.c.l.b16 %v298
      %v602 = vunpack.c.l.b16 %v299
      %v603 = vunpack.c.l.b16 %v300
      %v604 = vunpack.c.l.b16 %v301
      %v605 = vunpack.c.l.b16 %v302
      %v606 = vunpack.c.l.b16 %v303
      %v607 = vunpack.c.l.b16 %v304
      %v608 = vunpack.c.l.b16 %v305
      %v609 = vpack.c.b16 %v498, %v497
      %v610 = vpack.c.b16 %v500, %v499
      %v611 = vpack.c.b16 %v502, %v501
      %v612 = vpack.c.b16 %v504, %v503
      %v613 = vpack.c.b16 %v506, %v505
      %v614 = vpack.c.b16 %v508, %v507
      %v615 = vpack.c.b16 %v510, %v509
      %v616 = vpack.c.b16 %v512, %v511
      %v617 = vpack.c.b16 %v514, %v513
      %v618 = vpack.c.b16 %v516, %v515
      %v619 = vpack.c.b16 %v518, %v517
      %v620 = vpack.c.b16 %v520, %v519
      %v621 = vpack.c.b16 %v522, %v521
      %v622 = vpack.c.b16 %v524, %v523
      %v623 = vpack.c.b16 %v526, %v525
      %v624 = vpack.c.b16 %v528, %v527
      %v625 = vpack.c.b16 %v530, %v529
      %v626 = vpack.c.b16 %v532, %v531
      %v627 = vpack.c.b16 %v534, %v533
      %v628 = vpack.c.b16 %v536, %v535
      %v629 = vpack.c.b16 %v538, %v537
      %v630 = vpack.c.b16 %v540, %v539
      %v631 = vpack.c.b16 %v542, %v541
      %v632 = vpack.c.b16 %v544, %v543
      %v633 = vpack.c.b16 %v546, %v545
      %v634 = vpack.c.b16 %v548, %v547
      %v635 = vpack.c.b16 %v550, %v549
      %v636 = vpack.c.b16 %v552, %v551
      %v637 = vpack.c.b16 %v554, %v553
      %v638 = vpack.c.b16 %v556, %v555
      %v639 = vpack.c.b16 %v558, %v557
      %v640 = vpack.c.b16 %v560, %v559
      %v641 = vpack.c.b16 %v562, %v561
      %v642 = vpack.c.b16 %v564, %v563
      %v643 = vpack.c.b16 %v566, %v565
      %v644 = vpack.c.b16 %v568, %v567
      %v645 = vpack.c.b16 %v570, %v569
      %v646 = vpack.c.b16 %v572, %v571
      %v647 = vpack.c.b16 %v574, %v573
      %v648 = vpack.c.b16 %v576, %v575
      %v649 = vpack.c.b16 %v578, %v577
      %v650 = vpack.c.b16 %v580, %v579
      %v651 = vpack.c.b16 %v582, %v581
      %v652 = vpack.c.b16 %v584, %v583
      %v653 = vpack.c.b16 %v586, %v585
      %v654 = vpack.c.b16 %v588, %v587
      %v655 = vpack.c.b16 %v590, %v589
      %v656 = vpack.c.b16 %v592, %v591
      %v657 = vpack.c.b16 %v594, %v593
      %v658 = vpack.c.b16 %v596, %v595
      %v659 = vpack.c.b16 %v598, %v597
      %v660 = vpack.c.b16 %v600, %v599
      %v661 = vpack.c.b16 %v602, %v601
      %v662 = vpack.c.b16 %v604, %v603
      %v663 = vpack.c.b16 %v606, %v605
      %v664 = vpack.c.b16 %v608, %v607
      %721 = vmatprep.subr.bf16.mxu0 0
      %722 = vmatpush1.bf16.msra.mxu0 %v616
      %723 = vmatprep.subr.bf16.mxu0 0
      %724 = vmatpush1.bf16.msra.mxu0 %v615
      %725 = vmatprep.subr.bf16.mxu0 0
      %726 = vmatpush1.bf16.msra.mxu0 %v614
      %727 = vmatprep.subr.bf16.mxu0 0
      %728 = vmatpush1.bf16.msra.mxu0 %v613
      %729 = vmatprep.subr.bf16.mxu0 0
      %730 = vmatpush1.bf16.msra.mxu0 %v612
      %731 = vmatprep.subr.bf16.mxu0 0
      %732 = vmatpush1.bf16.msra.mxu0 %v611
      %733 = vmatprep.subr.bf16.mxu0 0
      %734 = vmatpush1.bf16.msra.mxu0 %v610
      %735 = vmatprep.subr.bf16.mxu0 0
      %736 = vmatpush1.bf16.msra.mxu0 %v609
      %737 = vmatprep.subr.bf16.mxu0 0
      %738 = vmatpush2.bf16.msra.mxu0 %v624
      %739 = vmatprep.subr.bf16.mxu0 0
      %740 = vmatpush2.bf16.msra.mxu0 %v623
      %741 = vmatprep.subr.bf16.mxu0 0
      %742 = vmatpush2.bf16.msra.mxu0 %v622
      %743 = vmatprep.subr.bf16.mxu0 0
      %744 = vmatpush2.bf16.msra.mxu0 %v621
      %745 = vmatprep.subr.bf16.mxu0 0
      %746 = vmatpush2.bf16.msra.mxu0 %v620
      %747 = vmatprep.subr.bf16.mxu0 0
      %748 = vmatpush2.bf16.msra.mxu0 %v619
      %749 = vmatprep.subr.bf16.mxu0 0
      %750 = vmatpush2.bf16.msra.mxu0 %v618
      %751 = vmatprep.subr.bf16.mxu0 0
      %752 = vmatpush2.bf16.msra.mxu0 %v617
      %753 = vmatprep.mubr.bf16.mxu0 %v358
      %754 = vmatmul.mubr.bf16.gmra.mxu0 %v357
      %v755 = vpop.f32.mrf.mxu0
      %v756 = vadd.f32 %v311, %v755
      %v757 = vpop.f32.mrf.mxu0
      %v758 = vpop.f32.mrf.mxu0
      %v759 = vadd.f32 %v311, %v758
      %v760 = vpop.f32.mrf.mxu0
      %761 = vmatprep.mubr.bf16.mxu0 %v365
      %762 = vmatmul.mubr.bf16.gmra.mxu0 %v364
      %v763 = vpop.f32.mrf.mxu0
      %v764 = vadd.f32 %v311, %v763
      %v765 = vpop.f32.mrf.mxu0
      %v766 = vpop.f32.mrf.mxu0
      %v767 = vadd.f32 %v311, %v766
      %v768 = vpop.f32.mrf.mxu0
      %769 = vdwg.mxu0
      %770 = vmatprep.subr.bf16.mxu0 0
      %771 = vmatpush1.bf16.msra.mxu0 %v632
      %772 = vmatprep.subr.bf16.mxu0 0
      %773 = vmatpush1.bf16.msra.mxu0 %v631
      %774 = vmatprep.subr.bf16.mxu0 0
      %775 = vmatpush1.bf16.msra.mxu0 %v630
      %776 = vmatprep.subr.bf16.mxu0 0
      %777 = vmatpush1.bf16.msra.mxu0 %v629
      %778 = vmatprep.subr.bf16.mxu0 0
      %779 = vmatpush1.bf16.msra.mxu0 %v628
      %780 = vmatprep.subr.bf16.mxu0 0
      %781 = vmatpush1.bf16.msra.mxu0 %v627
      %782 = vmatprep.subr.bf16.mxu0 0
      %783 = vmatpush1.bf16.msra.mxu0 %v626
      %784 = vmatprep.subr.bf16.mxu0 0
      %785 = vmatpush1.bf16.msra.mxu0 %v625
      %786 = vmatprep.subr.bf16.mxu0 0
      %787 = vmatpush2.bf16.msra.mxu0 %v640
      %788 = vmatprep.subr.bf16.mxu0 0
      %789 = vmatpush2.bf16.msra.mxu0 %v639
      %790 = vmatprep.subr.bf16.mxu0 0
      %791 = vmatpush2.bf16.msra.mxu0 %v638
      %792 = vmatprep.subr.bf16.mxu0 0
      %793 = vmatpush2.bf16.msra.mxu0 %v637
      %794 = vmatprep.subr.bf16.mxu0 0
      %795 = vmatpush2.bf16.msra.mxu0 %v636
      %796 = vmatprep.subr.bf16.mxu0 0
      %797 = vmatpush2.bf16.msra.mxu0 %v635
      %798 = vmatprep.subr.bf16.mxu0 0
      %799 = vmatpush2.bf16.msra.mxu0 %v634
      %800 = vmatprep.subr.bf16.mxu0 0
      %801 = vmatpush2.bf16.msra.mxu0 %v633
      %802 = vmatprep.mubr.bf16.mxu0 %v360
      %803 = vmatmul.mubr.bf16.gmra.mxu0 %v359
      %v804 = vpop.f32.mrf.mxu0
      %v805 = vadd.f32 %v756, %v804
      %v806 = vpop.f32.mrf.mxu0
      %v807 = vpop.f32.mrf.mxu0
      %v808 = vadd.f32 %v759, %v807
      %v809 = vpop.f32.mrf.mxu0
      %810 = vmatprep.mubr.bf16.mxu0 %v367
      %811 = vmatmul.mubr.bf16.gmra.mxu0 %v366
      %v812 = vpop.f32.mrf.mxu0
      %v813 = vadd.f32 %v764, %v812
      %v814 = vpop.f32.mrf.mxu0
      %v815 = vpop.f32.mrf.mxu0
      %v816 = vadd.f32 %v767, %v815
      %v817 = vpop.f32.mrf.mxu0
      %818 = vdwg.mxu0
      %819 = vmatprep.subr.bf16.mxu0 0
      %820 = vmatpush1.bf16.msra.mxu0 %v648
      %821 = vmatprep.subr.bf16.mxu0 0
      %822 = vmatpush1.bf16.msra.mxu0 %v647
      %823 = vmatprep.subr.bf16.mxu0 0
      %824 = vmatpush1.bf16.msra.mxu0 %v646
      %825 = vmatprep.subr.bf16.mxu0 0
      %826 = vmatpush1.bf16.msra.mxu0 %v645
      %827 = vmatprep.subr.bf16.mxu0 0
      %828 = vmatpush1.bf16.msra.mxu0 %v644
      %829 = vmatprep.subr.bf16.mxu0 0
      %830 = vmatpush1.bf16.msra.mxu0 %v643
      %831 = vmatprep.subr.bf16.mxu0 0
      %832 = vmatpush1.bf16.msra.mxu0 %v642
      %833 = vmatprep.subr.bf16.mxu0 0
      %834 = vmatpush1.bf16.msra.mxu0 %v641
      %835 = vmatprep.subr.bf16.mxu0 0
      %836 = vmatpush2.bf16.msra.mxu0 %v656
      %837 = vmatprep.subr.bf16.mxu0 0
      %838 = vmatpush2.bf16.msra.mxu0 %v655
      %839 = vmatprep.subr.bf16.mxu0 0
      %840 = vmatpush2.bf16.msra.mxu0 %v654
      %841 = vmatprep.subr.bf16.mxu0 0
      %842 = vmatpush2.bf16.msra.mxu0 %v653
      %843 = vmatprep.subr.bf16.mxu0 0
      %844 = vmatpush2.bf16.msra.mxu0 %v652
      %845 = vmatprep.subr.bf16.mxu0 0
      %846 = vmatpush2.bf16.msra.mxu0 %v651
      %847 = vmatprep.subr.bf16.mxu0 0
      %848 = vmatpush2.bf16.msra.mxu0 %v650
      %849 = vmatprep.subr.bf16.mxu0 0
      %850 = vmatpush2.bf16.msra.mxu0 %v649
      %851 = vmatprep.mubr.bf16.mxu0 %v362
      %852 = vmatmul.mubr.bf16.gmra.mxu0 %v361
      %v853 = vpop.f32.mrf.mxu0
      %v854 = vadd.f32 %v805, %v853
      %v855 = vpop.f32.mrf.mxu0
      %v856 = vpop.f32.mrf.mxu0
      %v857 = vadd.f32 %v808, %v856
      %v858 = vpop.f32.mrf.mxu0
      %859 = vmatprep.mubr.bf16.mxu0 %v369
      %860 = vmatmul.mubr.bf16.gmra.mxu0 %v368
      %v861 = vpop.f32.mrf.mxu0
      %v862 = vadd.f32 %v813, %v861
      %v863 = vpop.f32.mrf.mxu0
      %v864 = vpop.f32.mrf.mxu0
      %v865 = vadd.f32 %v816, %v864
      %v866 = vpop.f32.mrf.mxu0
      %867 = vdwg.mxu0
      %868 = vmatprep.subr.bf16.mxu0 0
      %869 = vmatpush1.bf16.msra.mxu0 %v664
      %870 = vmatprep.subr.bf16.mxu0 0
      %871 = vmatpush1.bf16.msra.mxu0 %v663
      %872 = vmatprep.subr.bf16.mxu0 0
      %873 = vmatpush1.bf16.msra.mxu0 %v662
      %874 = vmatprep.subr.bf16.mxu0 0
      %875 = vmatpush1.bf16.msra.mxu0 %v661
      %876 = vmatprep.subr.bf16.mxu0 0
      %877 = vmatpush1.bf16.msra.mxu0 %v660
      %878 = vmatprep.subr.bf16.mxu0 0
      %879 = vmatpush1.bf16.msra.mxu0 %v659
      %880 = vmatprep.subr.bf16.mxu0 0
      %881 = vmatpush1.bf16.msra.mxu0 %v658
      %882 = vmatprep.subr.bf16.mxu0 0
      %883 = vmatpush1.bf16.msra.mxu0 %v657
      %884 = vmatprep.subr.bf16.mxu0 0
      %885 = vmatpush2.bf16.msra.mxu0 0
      %886 = vmatprep.subr.bf16.mxu0 0
      %887 = vmatpush2.bf16.msra.mxu0 0
      %888 = vmatprep.subr.bf16.mxu0 0
      %889 = vmatpush2.bf16.msra.mxu0 0
      %890 = vmatprep.subr.bf16.mxu0 0
      %891 = vmatpush2.bf16.msra.mxu0 0
      %892 = vmatprep.subr.bf16.mxu0 0
      %893 = vmatpush2.bf16.msra.mxu0 0
      %894 = vmatprep.subr.bf16.mxu0 0
      %895 = vmatpush2.bf16.msra.mxu0 0
      %896 = vmatprep.subr.bf16.mxu0 0
      %897 = vmatpush2.bf16.msra.mxu0 0
      %898 = vmatprep.subr.bf16.mxu0 0
      %899 = vmatpush2.bf16.msra.mxu0 0
      %900 = vmatprep.mubr.bf16.mxu0 0
      %901 = vmatmul.mubr.bf16.gmra.mxu0 %v363
      %v902 = vpop.f32.mrf.mxu0
      %v903 = vadd.f32 %v854, %v902
      %v904 = vpop.f32.mrf.mxu0
      %v905 = vpop.f32.mrf.mxu0
      %v906 = vadd.f32 %v857, %v905
      %v907 = vpop.f32.mrf.mxu0
      %908 = vmatprep.mubr.bf16.mxu0 0
      %909 = vmatmul.mubr.bf16.gmra.mxu0 %v370
      %v910 = vpop.f32.mrf.mxu0
      %v911 = vadd.f32 %v862, %v910
      %v912 = vpop.f32.mrf.mxu0
      %v913 = vpop.f32.mrf.mxu0
      %v914 = vadd.f32 %v865, %v913
      %v915 = vpop.f32.mrf.mxu0
      %916 = vdwg.mxu0
      %v917 = vmax.f32 %v903, 0.0
      %v918 = vmax.f32 %v906, 0.0
      %v919 = vmax.f32 %v911, 0.0
      %v920 = vmax.f32 %v914, 0.0
      %v921 = vpack.c.bf16 %v918, %v917
      %v922 = vpack.c.bf16 %v920, %v919
      %v925 = vunpack.c.l.b16 %v921
      %v926 = vunpack.c.h.b16 %v921
      %v927 = vunpack.c.l.b16 %v922
      %v928 = vunpack.c.h.b16 %v922
      %v929 = vpack.c.b16 %v925, %v925
      %v930 = vpack.c.b16 %v926, %v926
      %v931 = vpack.c.b16 %v927, %v927
      %v932 = vpack.c.b16 %v928, %v928
      %937 = vst [vmem:[%s175] sm:$0xf] %v929
      %938 = vst [vmem:[%s175 + $0x4] sm:$0xf] %v930
      %939 = vst [vmem:[%s175 + $0x8] sm:$0xf] %v931
      %940 = vst [vmem:[%s175 + $0xc] sm:$0xf] %v932
      %s941 = smul.u32 4, %s14
      %p942 = scmp.lt.s32.totalorder %s941, 7
      %s943 = scalar_select %p942, %s941, 7
      %s944 = smul.addr %s943, 4
      %s945 = scalar_lea.vmem %s3, %s944
      // Predicated region
      $region33: #{cnn_forward.4} parent=31 // pred_check
        %p946 = pneg %p100
      $region34: #{cnn_forward.4} parent=31 // pred_check_branch
        %948 = sbr.rel (%p946) target = $region36
      $region35: #{cnn_forward.4} parent=31 // pred_region
        %s949 = smul.u32 4, %s14
      $region36: #{cnn_forward.4} parent=31 // pred_fallthru
        _
    $region32: #{cnn_forward.4} parent=5 // pred_fallthru
      _
    %p950 = scmp.le.s32.totalorder 2, %s9
    // Predicated region
    $region37: #{cnn_forward.4} parent=5 // pred_check
      %p951 = pneg %p950
    $region38: #{cnn_forward.4} parent=5 // pred_check_branch
      %953 = sbr.rel (%p951) target = $region40
    $region39: #{cnn_forward.4} parent=5 // pred_region
      %s954 = ssub.s32 %s9, 2
      // Predicated region
      $region41: #{cnn_forward.4} parent=39 // pred_check
        %p955 = pneg %p106
      $region42: #{cnn_forward.4} parent=39 // pred_check_branch
        %957 = sbr.rel (%p955) target = $region44
      $region43: #{cnn_forward.4} parent=39 // pred_region
        %s958 = smul.u32 4, %s15
        %p959 = scmp.lt.s32.totalorder %s958, 7
        %s960 = scalar_select %p959, %s958, 7
        %s961 = smul.addr %s960, 4
        %s962 = scalar_lea.vmem %s3, %s961
      $region44: #{cnn_forward.4} parent=39 // pred_fallthru
        _
    $region40: #{cnn_forward.4} parent=5 // pred_fallthru
      _
  $region6: #{cnn_forward.4} parent=0 // loop_footer
    %s13 = sadd.s32 1, %s9
  $region7: #{cnn_forward.4} parent=0 // loop_footer_branch
    %8 = sbr.rel target = $region3
  $region8: #{cnn_forward.4} parent=0 // loop_exit
    _

// kernel: cnn_forward.5
$region0: #{cnn_forward.5}
  #allocation0 [shape = 'u32[]', space=smem, size = 0x4, offset = 0x4, fixed_abs, tag = 'smem constant byte address 0x4 - core index']
  #allocation1 [shape = 'u32[144,128]{1,0:T(1,128)}', space=vmem, size = 0x12000, scoped, tag = 'internal scratch']
  %s0 = inlined_call_operand.vmem [shape: bf16[16,1280], index: 0, kind: input, shape index: {}]
  %s1 = inlined_call_operand.vmem [shape: bf16[1280,128], index: 1, kind: input, shape index: {}]
  %s2 = inlined_call_operand.vmem [shape: f32[1,128], index: 2, kind: input, shape index: {}]
  %s3 = inlined_call_operand.vmem [shape: bf16[128,384], index: 3, kind: input, shape index: {}]
  %s4 = inlined_call_operand.vmem [shape: f32[1,384], index: 4, kind: input, shape index: {}]
  %s5 = inlined_call_operand.vmem [shape: bf16[384,384], index: 5, kind: input, shape index: {}]
  %s6 = inlined_call_operand.vmem [shape: f32[1,384], index: 6, kind: input, shape index: {}]
  %s7 = inlined_call_operand.vmem [shape: f32[16,384], index: 7, kind: output, shape index: {}]
  %s8 = sld [smem:[#allocation0]]
  $region61: #{cnn_forward.5} parent=0
    _
  %s10 = ssub.s32 1, %s8
  %s11 = scalar_select 0, %s10, %s8
  loop: start=0, step=1, limit=4
  $region2: #{cnn_forward.5} parent=0 // loop_pre_header
    _
  $region3: #{cnn_forward.5} parent=0 // loop_header
    %s13 = sphi 0, %s17
    %p14 = scmp.ge.s32.totalorder %s13, 4
    %s23 = sphi 0, %s25
    %s26 = sphi 0, %s23
    %s27 = sphi 0, %s26
    %s43 = sphi 0, %s27
    %s47 = sphi 0, %s47
    %s49 = sphi 0, %s47
    %s50 = sphi 0, %s49
    %s64 = sphi 0, %s50
    %s68 = sphi 0, %s68
    %s70 = sphi 0, %s68
    %s71 = sphi 0, %s70
    %s85 = sphi 0, %s71
    %s89 = sphi 0, %s89
    %s91 = sphi 0, %s89
    %s92 = sphi 0, %s91
    %s106 = sphi 0, %s92
    %s110 = sphi 0, %s110
    %s112 = sphi 0, %s110
    %s113 = sphi 0, %s112
    %s127 = sphi 0, %s113
    %s131 = sphi 0, %s131
    %s133 = sphi 0, %s131
    %s134 = sphi 0, %s133
    %s148 = sphi 0, %s134
    %s152 = sphi 0, %s152
    %s154 = sphi 0, %s152
    %s155 = sphi 0, %s154
    %s169 = sphi 0, %s155
    %s175 = sphi 0, %s177
    %s178 = sphi 0, %s175
    %s179 = sphi 0, %s178
    %s195 = sphi 0, %s179
  $region4: #{cnn_forward.5} parent=0 // loop_header_branch
    %16 = sbr.rel (%p14) target = $region8
  $region5: #{cnn_forward.5} parent=0 // loop_body
    %s18 = ssub.s32 %s13, 1
    %s19 = ssub.s32 %s13, 2
    %s20 = sadd.s32 %s13, 1
    %s21 = ssub.s32 %s13, %s20
    %p22 = scmp.eq.s32.totalorder %s21, 0
    %s24 = sadd.s32 %s23, 1
    %s25 = scalar_select %p22, %s23, %s24
    %p28 = pneg %p22
    %p29 = scmp.eq.s32.totalorder %s13, 1
    %p30 = por %p28, %p29
    %p31 = scmp.ne.s32.totalorder %s23, %s26
    %p32 = scmp.eq.s32.totalorder %s13, 0
    %p33 = por %p31, %p32
    %p34 = scmp.ne.s32.totalorder %s23, %s26
    %p35 = scmp.eq.s32.totalorder %s18, 1
    %p36 = por %p34, %p35
    %p37 = scmp.ne.s32.totalorder %s26, %s27
    %p38 = scmp.eq.s32.totalorder %s18, 0
    %p39 = por %p37, %p38
    %p40 = scmp.ne.s32.totalorder %s26, %s27
    %p41 = scmp.eq.s32.totalorder %s19, 1
    %p42 = por %p40, %p41
    %p44 = scmp.ne.s32.totalorder %s27, %s43
    %p45 = scmp.eq.s32.totalorder %s19, 0
    %p46 = por %p44, %p45
    %s48 = sadd.s32 %s47, 1
    %p51 = scmp.eq.s32.totalorder %s13, 1
    %p52 = scmp.ne.s32.totalorder %s47, %s49
    %p53 = scmp.eq.s32.totalorder %s13, 0
    %p54 = por %p52, %p53
    %p55 = scmp.ne.s32.totalorder %s47, %s49
    %p56 = scmp.eq.s32.totalorder %s18, 1
    %p57 = por %p55, %p56
    %p58 = scmp.ne.s32.totalorder %s49, %s50
    %p59 = scmp.eq.s32.totalorder %s18, 0
    %p60 = por %p58, %p59
    %p61 = scmp.ne.s32.totalorder %s49, %s50
    %p62 = scmp.eq.s32.totalorder %s19, 1
    %p63 = por %p61, %p62
    %p65 = scmp.ne.s32.totalorder %s50, %s64
    %p66 = scmp.eq.s32.totalorder %s19, 0
    %p67 = por %p65, %p66
    %s69 = sadd.s32 %s68, 1
    %p72 = scmp.eq.s32.totalorder %s13, 1
    %p73 = scmp.ne.s32.totalorder %s68, %s70
    %p74 = scmp.eq.s32.totalorder %s13, 0
    %p75 = por %p73, %p74
    %p76 = scmp.ne.s32.totalorder %s68, %s70
    %p77 = scmp.eq.s32.totalorder %s18, 1
    %p78 = por %p76, %p77
    %p79 = scmp.ne.s32.totalorder %s70, %s71
    %p80 = scmp.eq.s32.totalorder %s18, 0
    %p81 = por %p79, %p80
    %p82 = scmp.ne.s32.totalorder %s70, %s71
    %p83 = scmp.eq.s32.totalorder %s19, 1
    %p84 = por %p82, %p83
    %p86 = scmp.ne.s32.totalorder %s71, %s85
    %p87 = scmp.eq.s32.totalorder %s19, 0
    %p88 = por %p86, %p87
    %s90 = sadd.s32 %s89, 1
    %p93 = scmp.eq.s32.totalorder %s13, 1
    %p94 = scmp.ne.s32.totalorder %s89, %s91
    %p95 = scmp.eq.s32.totalorder %s13, 0
    %p96 = por %p94, %p95
    %p97 = scmp.ne.s32.totalorder %s89, %s91
    %p98 = scmp.eq.s32.totalorder %s18, 1
    %p99 = por %p97, %p98
    %p100 = scmp.ne.s32.totalorder %s91, %s92
    %p101 = scmp.eq.s32.totalorder %s18, 0
    %p102 = por %p100, %p101
    %p103 = scmp.ne.s32.totalorder %s91, %s92
    %p104 = scmp.eq.s32.totalorder %s19, 1
    %p105 = por %p103, %p104
    %p107 = scmp.ne.s32.totalorder %s92, %s106
    %p108 = scmp.eq.s32.totalorder %s19, 0
    %p109 = por %p107, %p108
    %s111 = sadd.s32 %s110, 1
    %p114 = scmp.eq.s32.totalorder %s13, 1
    %p115 = scmp.ne.s32.totalorder %s110, %s112
    %p116 = scmp.eq.s32.totalorder %s13, 0
    %p117 = por %p115, %p116
    %p118 = scmp.ne.s32.totalorder %s110, %s112
    %p119 = scmp.eq.s32.totalorder %s18, 1
    %p120 = por %p118, %p119
    %p121 = scmp.ne.s32.totalorder %s112, %s113
    %p122 = scmp.eq.s32.totalorder %s18, 0
    %p123 = por %p121, %p122
    %p124 = scmp.ne.s32.totalorder %s112, %s113
    %p125 = scmp.eq.s32.totalorder %s19, 1
    %p126 = por %p124, %p125
    %p128 = scmp.ne.s32.totalorder %s113, %s127
    %p129 = scmp.eq.s32.totalorder %s19, 0
    %p130 = por %p128, %p129
    %s132 = sadd.s32 %s131, 1
    %p135 = scmp.eq.s32.totalorder %s13, 1
    %p136 = scmp.ne.s32.totalorder %s131, %s133
    %p137 = scmp.eq.s32.totalorder %s13, 0
    %p138 = por %p136, %p137
    %p139 = scmp.ne.s32.totalorder %s131, %s133
    %p140 = scmp.eq.s32.totalorder %s18, 1
    %p141 = por %p139, %p140
    %p142 = scmp.ne.s32.totalorder %s133, %s134
    %p143 = scmp.eq.s32.totalorder %s18, 0
    %p144 = por %p142, %p143
    %p145 = scmp.ne.s32.totalorder %s133, %s134
    %p146 = scmp.eq.s32.totalorder %s19, 1
    %p147 = por %p145, %p146
    %p149 = scmp.ne.s32.totalorder %s134, %s148
    %p150 = scmp.eq.s32.totalorder %s19, 0
    %p151 = por %p149, %p150
    %s153 = sadd.s32 %s152, 1
    %p156 = scmp.eq.s32.totalorder %s13, 1
    %p157 = scmp.ne.s32.totalorder %s152, %s154
    %p158 = scmp.eq.s32.totalorder %s13, 0
    %p159 = por %p157, %p158
    %p160 = scmp.ne.s32.totalorder %s152, %s154
    %p161 = scmp.eq.s32.totalorder %s18, 1
    %p162 = por %p160, %p161
    %p163 = scmp.ne.s32.totalorder %s154, %s155
    %p164 = scmp.eq.s32.totalorder %s18, 0
    %p165 = por %p163, %p164
    %p166 = scmp.ne.s32.totalorder %s154, %s155
    %p167 = scmp.eq.s32.totalorder %s19, 1
    %p168 = por %p166, %p167
    %p170 = scmp.ne.s32.totalorder %s155, %s169
    %p171 = scmp.eq.s32.totalorder %s19, 0
    %p172 = por %p170, %p171
    %s173 = ssub.s32 %s13, %s20
    %p174 = scmp.eq.s32.totalorder %s173, 0
    %s176 = sadd.s32 %s175, 1
    %s177 = scalar_select %p174, %s175, %s176
    %p180 = pneg %p174
    %p181 = scmp.eq.s32.totalorder %s13, 1
    %p182 = por %p180, %p181
    %p183 = scmp.ne.s32.totalorder %s175, %s178
    %p184 = scmp.eq.s32.totalorder %s13, 0
    %p185 = por %p183, %p184
    %p186 = scmp.ne.s32.totalorder %s175, %s178
    %p187 = scmp.eq.s32.totalorder %s18, 1
    %p188 = por %p186, %p187
    %p189 = scmp.ne.s32.totalorder %s178, %s179
    %p190 = scmp.eq.s32.totalorder %s18, 0
    %p191 = por %p189, %p190
    %p192 = scmp.ne.s32.totalorder %s178, %s179
    %p193 = scmp.eq.s32.totalorder %s19, 1
    %p194 = por %p192, %p193
    %p196 = scmp.ne.s32.totalorder %s179, %s195
    %p197 = scmp.eq.s32.totalorder %s19, 0
    %p198 = por %p196, %p197
    %p199 = scmp.le.s32.totalorder 1, %s13
    %p200 = scmp.lt.s32.totalorder %s13, 3
    %p201 = pnand %p199, %p200
    %p202 = pneg %p201
    // Predicated region
    $region9: #{cnn_forward.5} parent=5 // pred_check
      _
    $region10: #{cnn_forward.5} parent=5 // pred_check_branch
      %204 = sbr.rel (%p201) target = $region12
    $region11: #{cnn_forward.5} parent=5 // pred_region
      %s205 = ssub.s32 %s13, 1
      // Predicated region
      $region13: #{cnn_forward.5} parent=11 // pred_check
        %p206 = pneg %p60
      $region14: #{cnn_forward.5} parent=11 // pred_check_branch
        %208 = sbr.rel (%p206) target = $region16
      $region15: #{cnn_forward.5} parent=11 // pred_region
        _
      $region16: #{cnn_forward.5} parent=11 // pred_fallthru
        _
      // Predicated region
      $region17: #{cnn_forward.5} parent=11 // pred_check
        %p209 = pneg %p81
      $region18: #{cnn_forward.5} parent=11 // pred_check_branch
        %211 = sbr.rel (%p209) target = $region20
      $region19: #{cnn_forward.5} parent=11 // pred_region
        _
      $region20: #{cnn_forward.5} parent=11 // pred_fallthru
        _
      // Predicated region
      $region21: #{cnn_forward.5} parent=11 // pred_check
        %p212 = pneg %p102
      $region22: #{cnn_forward.5} parent=11 // pred_check_branch
        %214 = sbr.rel (%p212) target = $region24
      $region23: #{cnn_forward.5} parent=11 // pred_region
        _
      $region24: #{cnn_forward.5} parent=11 // pred_fallthru
        _
      // Predicated region
      $region25: #{cnn_forward.5} parent=11 // pred_check
        %p215 = pneg %p123
      $region26: #{cnn_forward.5} parent=11 // pred_check_branch
        %217 = sbr.rel (%p215) target = $region28
      $region27: #{cnn_forward.5} parent=11 // pred_region
        _
      $region28: #{cnn_forward.5} parent=11 // pred_fallthru
        _
      // Predicated region
      $region29: #{cnn_forward.5} parent=11 // pred_check
        %p218 = pneg %p144
      $region30: #{cnn_forward.5} parent=11 // pred_check_branch
        %220 = sbr.rel (%p218) target = $region32
      $region31: #{cnn_forward.5} parent=11 // pred_region
        _
      $region32: #{cnn_forward.5} parent=11 // pred_fallthru
        _
      // Predicated region
      $region33: #{cnn_forward.5} parent=11 // pred_check
        %p221 = pneg %p165
      $region34: #{cnn_forward.5} parent=11 // pred_check_branch
        %223 = sbr.rel (%p221) target = $region36
      $region35: #{cnn_forward.5} parent=11 // pred_region
        _
      $region36: #{cnn_forward.5} parent=11 // pred_fallthru
        _
    $region12: #{cnn_forward.5} parent=5 // pred_fallthru
      _
    %p224 = scmp.lt.s32.totalorder %s13, 2
    // Predicated region
    $region37: #{cnn_forward.5} parent=5 // pred_check
      %p225 = pneg %p224
    $region38: #{cnn_forward.5} parent=5 // pred_check_branch
      %227 = sbr.rel (%p225) target = $region40
    $region39: #{cnn_forward.5} parent=5 // pred_region
      // Predicated region
      $region41: #{cnn_forward.5} parent=39 // pred_check
        %p228 = pneg %p33
      $region42: #{cnn_forward.5} parent=39 // pred_check_branch
        %230 = sbr.rel (%p228) target = $region44
      $region43: #{cnn_forward.5} parent=39 // pred_region
        %p231 = scmp.lt.s32.totalorder %s13, 1
        %s232 = scalar_select %p231, %s13, 1
        %s233 = smul.addr %s232, 10
        %s234 = smul.addr %s233, 4
        %s235 = scalar_lea.vmem %s0, %s234
      $region44: #{cnn_forward.5} parent=39 // pred_fallthru
        _
    $region40: #{cnn_forward.5} parent=5 // pred_fallthru
      _
    %p236 = scmp.le.s32.totalorder 1, %s13
    %p237 = scmp.lt.s32.totalorder %s13, 3
    %p238 = pnand %p236, %p237
    %p239 = pneg %p238
    // Predicated region
    $region45: #{cnn_forward.5} parent=5 // pred_check
      _
    $region46: #{cnn_forward.5} parent=5 // pred_check_branch
      %241 = sbr.rel (%p238) target = $region48
    $region47: #{cnn_forward.5} parent=5 // pred_region
      %s242 = ssub.s32 %s13, 1
      %p243 = scmp.lt.s32.totalorder %s18, 1
      %s244 = scalar_select %p243, %s18, 1
      %s245 = smul.addr %s244, 10
      %s246 = smul.addr %s245, 4
      %s247 = scalar_lea.vmem %s0, %s246
      %p248 = pneg %p39
      %p249 = pneg %p36
      %p250 = pneg %p60
      %p251 = pneg %p57
      %p252 = pneg %p81
      %p253 = pneg %p78
      %p254 = pneg %p102
      %p255 = pneg %p99
      %p256 = pneg %p123
      %p257 = pneg %p120
      %p258 = pneg %p144
      %p259 = pneg %p141
      %p260 = pneg %p165
      %p261 = pneg %p162
      %p262 = pneg %p191
      %p263 = pneg %p188
      %p264 = scmp.lt.s32.totalorder %s18, 1
      %s265 = scalar_select %p264, %s18, 1
      %s266 = smul.addr %s265, 3
      %s267 = smul.addr %s266, 8
      %s268 = scalar_lea.vmem %s7, %s267
      %p269 = scmp.lt.s32.totalorder %s18, 1
      %s270 = scalar_select %p269, %s18, 1
      %s271 = smul.addr %s270, 10
      %s272 = smul.addr %s271, 4
      %s273 = scalar_lea.vmem %s0, %s272
      %p274 = scmp.lt.s32.totalorder %s18, 1
      %s275 = scalar_select %p274, %s18, 1
      %s276 = smul.addr %s275, 3
      %s277 = smul.addr %s276, 8
      %s278 = scalar_lea.vmem %s7, %s277
      %v280 = vld [vmem:[%s273] sm:$0xff]
      %v281 = vld [vmem:[%s273 + $0x8] sm:$0xff]
      %v282 = vld [vmem:[%s273 + $0x10] sm:$0xff]
      %v283 = vld [vmem:[%s273 + $0x18] sm:$0xff]
      %v284 = vld [vmem:[%s273 + $0x20] sm:$0xff]
      %v285 = vld [vmem:[%s1] sm:$0xf]
      %v286 = vld [vmem:[%s1 + $0x4] sm:$0xf]
      %v287 = vld [vmem:[%s1 + $0x8] sm:$0xf]
      %v288 = vld [vmem:[%s1 + $0xc] sm:$0xf]
      %v289 = vld [vmem:[%s1 + $0x10] sm:$0xf]
      %v290 = vld [vmem:[%s1 + $0x14] sm:$0xf]
      %v291 = vld [vmem:[%s1 + $0x18] sm:$0xf]
      %v292 = vld [vmem:[%s1 + $0x1c] sm:$0xf]
      %v293 = vld [vmem:[%s1 + $0x20] sm:$0xf]
      %v294 = vld [vmem:[%s1 + $0x24] sm:$0xf]
      %v295 = vld [vmem:[%s1 + $0x28] sm:$0xf]
      %v296 = vld [vmem:[%s1 + $0x2c] sm:$0xf]
      %v297 = vld [vmem:[%s1 + $0x30] sm:$0xf]
      %v298 = vld [vmem:[%s1 + $0x34] sm:$0xf]
      %v299 = vld [vmem:[%s1 + $0x38] sm:$0xf]
      %v300 = vld [vmem:[%s1 + $0x3c] sm:$0xf]
      %v301 = vld [vmem:[%s1 + $0x40] sm:$0xf]
      %v302 = vld [vmem:[%s1 + $0x44] sm:$0xf]
      %v303 = vld [vmem:[%s1 + $0x48] sm:$0xf]
      %v304 = vld [vmem:[%s1 + $0x4c] sm:$0xf]
      %v305 = vld [vmem:[%s1 + $0x50] sm:$0xf]
      %v306 = vld [vmem:[%s1 + $0x54] sm:$0xf]
      %v307 = vld [vmem:[%s1 + $0x58] sm:$0xf]
      %v308 = vld [vmem:[%s1 + $0x5c] sm:$0xf]
      %v309 = vld [vmem:[%s1 + $0x60] sm:$0xf]
      %v310 = vld [vmem:[%s1 + $0x64] sm:$0xf]
      %v311 = vld [vmem:[%s1 + $0x68] sm:$0xf]
      %v312 = vld [vmem:[%s1 + $0x6c] sm:$0xf]
      %v313 = vld [vmem:[%s1 + $0x70] sm:$0xf]
      %v314 = vld [vmem:[%s1 + $0x74] sm:$0xf]
      %v315 = vld [vmem:[%s1 + $0x78] sm:$0xf]
      %v316 = vld [vmem:[%s1 + $0x7c] sm:$0xf]
      %v317 = vld [vmem:[%s1 + $0x80] sm:$0xf]
      %v318 = vld [vmem:[%s1 + $0x84] sm:$0xf]
      %v319 = vld [vmem:[%s1 + $0x88] sm:$0xf]
      %v320 = vld [vmem:[%s1 + $0x8c] sm:$0xf]
      %v321 = vld [vmem:[%s1 + $0x90] sm:$0xf]
      %v322 = vld [vmem:[%s1 + $0x94] sm:$0xf]
      %v323 = vld [vmem:[%s1 + $0x98] sm:$0xf]
      %v324 = vld [vmem:[%s1 + $0x9c] sm:$0xf]
      %v325 = vld [vmem:[%s1 + $0xa0] sm:$0xf]
      %v326 = vld [vmem:[%s1 + $0xa4] sm:$0xf]
      %v327 = vld [vmem:[%s1 + $0xa8] sm:$0xf]
      %v328 = vld [vmem:[%s1 + $0xac] sm:$0xf]
      %v329 = vld [vmem:[%s1 + $0xb0] sm:$0xf]
      %v330 = vld [vmem:[%s1 + $0xb4] sm:$0xf]
      %v331 = vld [vmem:[%s1 + $0xb8] sm:$0xf]
      %v332 = vld [vmem:[%s1 + $0xbc] sm:$0xf]
      %v333 = vld [vmem:[%s1 + $0xc0] sm:$0xf]
      %v334 = vld [vmem:[%s1 + $0xc4] sm:$0xf]
      %v335 = vld [vmem:[%s1 + $0xc8] sm:$0xf]
      %v336 = vld [vmem:[%s1 + $0xcc] sm:$0xf]
      %v337 = vld [vmem:[%s1 + $0xd0] sm:$0xf]
      %v338 = vld [vmem:[%s1 + $0xd4] sm:$0xf]
      %v339 = vld [vmem:[%s1 + $0xd8] sm:$0xf]
      %v340 = vld [vmem:[%s1 + $0xdc] sm:$0xf]
      %v341 = vld [vmem:[%s1 + $0xe0] sm:$0xf]
      %v342 = vld [vmem:[%s1 + $0xe4] sm:$0xf]
      %v343 = vld [vmem:[%s1 + $0xe8] sm:$0xf]
      %v344 = vld [vmem:[%s1 + $0xec] sm:$0xf]
      %v345 = vld [vmem:[%s1 + $0xf0] sm:$0xf]
      %v346 = vld [vmem:[%s1 + $0xf4] sm:$0xf]
      %v347 = vld [vmem:[%s1 + $0xf8] sm:$0xf]
      %v348 = vld [vmem:[%s1 + $0xfc] sm:$0xf]
      %v349 = vld [vmem:[%s1 + $0x100] sm:$0xf]
      %v350 = vld [vmem:[%s1 + $0x104] sm:$0xf]
      %v351 = vld [vmem:[%s1 + $0x108] sm:$0xf]
      %v352 = vld [vmem:[%s1 + $0x10c] sm:$0xf]
      %v353 = vld [vmem:[%s1 + $0x110] sm:$0xf]
      %v354 = vld [vmem:[%s1 + $0x114] sm:$0xf]
      %v355 = vld [vmem:[%s1 + $0x118] sm:$0xf]
      %v356 = vld [vmem:[%s1 + $0x11c] sm:$0xf]
      %v357 = vld [vmem:[%s1 + $0x120] sm:$0xf]
      %v358 = vld [vmem:[%s1 + $0x124] sm:$0xf]
      %v359 = vld [vmem:[%s1 + $0x128] sm:$0xf]
      %v360 = vld [vmem:[%s1 + $0x12c] sm:$0xf]
      %v361 = vld [vmem:[%s1 + $0x130] sm:$0xf]
      %v362 = vld [vmem:[%s1 + $0x134] sm:$0xf]
      %v363 = vld [vmem:[%s1 + $0x138] sm:$0xf]
      %v364 = vld [vmem:[%s1 + $0x13c] sm:$0xf]
      %v365 = vld [vmem:[%s1 + $0x140] sm:$0xf]
      %v366 = vld [vmem:[%s1 + $0x144] sm:$0xf]
      %v367 = vld [vmem:[%s1 + $0x148] sm:$0xf]
      %v368 = vld [vmem:[%s1 + $0x14c] sm:$0xf]
      %v369 = vld [vmem:[%s1 + $0x150] sm:$0xf]
      %v370 = vld [vmem:[%s1 + $0x154] sm:$0xf]
      %v371 = vld [vmem:[%s1 + $0x158] sm:$0xf]
      %v372 = vld [vmem:[%s1 + $0x15c] sm:$0xf]
      %v373 = vld [vmem:[%s1 + $0x160] sm:$0xf]
      %v374 = vld [vmem:[%s1 + $0x164] sm:$0xf]
      %v375 = vld [vmem:[%s1 + $0x168] sm:$0xf]
      %v376 = vld [vmem:[%s1 + $0x16c] sm:$0xf]
      %v377 = vld [vmem:[%s1 + $0x170] sm:$0xf]
      %v378 = vld [vmem:[%s1 + $0x174] sm:$0xf]
      %v379 = vld [vmem:[%s1 + $0x178] sm:$0xf]
      %v380 = vld [vmem:[%s1 + $0x17c] sm:$0xf]
      %v381 = vld [vmem:[%s1 + $0x180] sm:$0xf]
      %v382 = vld [vmem:[%s1 + $0x184] sm:$0xf]
      %v383 = vld [vmem:[%s1 + $0x188] sm:$0xf]
      %v384 = vld [vmem:[%s1 + $0x18c] sm:$0xf]
      %v385 = vld [vmem:[%s1 + $0x190] sm:$0xf]
      %v386 = vld [vmem:[%s1 + $0x194] sm:$0xf]
      %v387 = vld [vmem:[%s1 + $0x198] sm:$0xf]
      %v388 = vld [vmem:[%s1 + $0x19c] sm:$0xf]
      %v389 = vld [vmem:[%s1 + $0x1a0] sm:$0xf]
      %v390 = vld [vmem:[%s1 + $0x1a4] sm:$0xf]
      %v391 = vld [vmem:[%s1 + $0x1a8] sm:$0xf]
      %v392 = vld [vmem:[%s1 + $0x1ac] sm:$0xf]
      %v393 = vld [vmem:[%s1 + $0x1b0] sm:$0xf]
      %v394 = vld [vmem:[%s1 + $0x1b4] sm:$0xf]
      %v395 = vld [vmem:[%s1 + $0x1b8] sm:$0xf]
      %v396 = vld [vmem:[%s1 + $0x1bc] sm:$0xf]
      %v397 = vld [vmem:[%s1 + $0x1c0] sm:$0xf]
      %v398 = vld [vmem:[%s1 + $0x1c4] sm:$0xf]
      %v399 = vld [vmem:[%s1 + $0x1c8] sm:$0xf]
      %v400 = vld [vmem:[%s1 + $0x1cc] sm:$0xf]
      %v401 = vld [vmem:[%s1 + $0x1d0] sm:$0xf]
      %v402 = vld [vmem:[%s1 + $0x1d4] sm:$0xf]
      %v403 = vld [vmem:[%s1 + $0x1d8] sm:$0xf]
      %v404 = vld [vmem:[%s1 + $0x1dc] sm:$0xf]
      %v405 = vld [vmem:[%s1 + $0x1e0] sm:$0xf]
      %v406 = vld [vmem:[%s1 + $0x1e4] sm:$0xf]
      %v407 = vld [vmem:[%s1 + $0x1e8] sm:$0xf]
      %v408 = vld [vmem:[%s1 + $0x1ec] sm:$0xf]
      %v409 = vld [vmem:[%s1 + $0x1f0] sm:$0xf]
      %v410 = vld [vmem:[%s1 + $0x1f4] sm:$0xf]
      %v411 = vld [vmem:[%s1 + $0x1f8] sm:$0xf]
      %v412 = vld [vmem:[%s1 + $0x1fc] sm:$0xf]
      %v413 = vld [vmem:[%s1 + $0x200] sm:$0xf]
      %v414 = vld [vmem:[%s1 + $0x204] sm:$0xf]
      %v415 = vld [vmem:[%s1 + $0x208] sm:$0xf]
      %v416 = vld [vmem:[%s1 + $0x20c] sm:$0xf]
      %v417 = vld [vmem:[%s1 + $0x210] sm:$0xf]
      %v418 = vld [vmem:[%s1 + $0x214] sm:$0xf]
      %v419 = vld [vmem:[%s1 + $0x218] sm:$0xf]
      %v420 = vld [vmem:[%s1 + $0x21c] sm:$0xf]
      %v421 = vld [vmem:[%s1 + $0x220] sm:$0xf]
      %v422 = vld [vmem:[%s1 + $0x224] sm:$0xf]
      %v423 = vld [vmem:[%s1 + $0x228] sm:$0xf]
      %v424 = vld [vmem:[%s1 + $0x22c] sm:$0xf]
      %v425 = vld [vmem:[%s1 + $0x230] sm:$0xf]
      %v426 = vld [vmem:[%s1 + $0x234] sm:$0xf]
      %v427 = vld [vmem:[%s1 + $0x238] sm:$0xf]
      %v428 = vld [vmem:[%s1 + $0x23c] sm:$0xf]
      %v429 = vld [vmem:[%s1 + $0x240] sm:$0xf]
      %v430 = vld [vmem:[%s1 + $0x244] sm:$0xf]
      %v431 = vld [vmem:[%s1 + $0x248] sm:$0xf]
      %v432 = vld [vmem:[%s1 + $0x24c] sm:$0xf]
      %v433 = vld [vmem:[%s1 + $0x250] sm:$0xf]
      %v434 = vld [vmem:[%s1 + $0x254] sm:$0xf]
      %v435 = vld [vmem:[%s1 + $0x258] sm:$0xf]
      %v436 = vld [vmem:[%s1 + $0x25c] sm:$0xf]
      %v437 = vld [vmem:[%s1 + $0x260] sm:$0xf]
      %v438 = vld [vmem:[%s1 + $0x264] sm:$0xf]
      %v439 = vld [vmem:[%s1 + $0x268] sm:$0xf]
      %v440 = vld [vmem:[%s1 + $0x26c] sm:$0xf]
      %v441 = vld [vmem:[%s1 + $0x270] sm:$0xf]
      %v442 = vld [vmem:[%s1 + $0x274] sm:$0xf]
      %v443 = vld [vmem:[%s1 + $0x278] sm:$0xf]
      %v444 = vld [vmem:[%s1 + $0x27c] sm:$0xf]
      %v445 = vld [vmem:[%s2] sm:$0x1]
      %v447 = vlaneseq
      %v448 = vshrl.u32 %v447, 7
      %v449 = vsub.s32 0, %v448
      %v450 = vrot.slane %v445, %v449
      %v457 = vunpack.c.l.b16 %v280
      %v458 = vunpack.c.h.b16 %v280
      %v459 = vunpack.c.l.b16 %v281
      %v460 = vunpack.c.h.b16 %v281
      %v461 = vunpack.c.l.b16 %v282
      %v462 = vunpack.c.h.b16 %v282
      %v463 = vunpack.c.l.b16 %v283
      %v464 = vunpack.c.h.b16 %v283
      %v465 = vunpack.c.l.b16 %v284
      %v466 = vunpack.c.h.b16 %v284
      %v467 = vpack.c.b16 %v457, %v457
      %v468 = vpack.c.b16 %v458, %v458
      %v469 = vpack.c.b16 %v459, %v459
      %v470 = vpack.c.b16 %v460, %v460
      %v471 = vpack.c.b16 %v461, %v461
      %v472 = vpack.c.b16 %v462, %v462
      %v473 = vpack.c.b16 %v463, %v463
      %v474 = vpack.c.b16 %v464, %v464
      %v475 = vpack.c.b16 %v465, %v465
      %v476 = vpack.c.b16 %v466, %v466
      %v647 = vunpack.c.l.b16 %v285
      %v648 = vunpack.c.l.b16 %v286
      %v649 = vunpack.c.l.b16 %v287
      %v650 = vunpack.c.l.b16 %v288
      %v651 = vunpack.c.l.b16 %v289
      %v652 = vunpack.c.l.b16 %v290
      %v653 = vunpack.c.l.b16 %v291
      %v654 = vunpack.c.l.b16 %v292
      %v655 = vunpack.c.l.b16 %v293
      %v656 = vunpack.c.l.b16 %v294
      %v657 = vunpack.c.l.b16 %v295
      %v658 = vunpack.c.l.b16 %v296
      %v659 = vunpack.c.l.b16 %v297
      %v660 = vunpack.c.l.b16 %v298
      %v661 = vunpack.c.l.b16 %v299
      %v662 = vunpack.c.l.b16 %v300
      %v663 = vunpack.c.l.b16 %v301
      %v664 = vunpack.c.l.b16 %v302
      %v665 = vunpack.c.l.b16 %v303
      %v666 = vunpack.c.l.b16 %v304
      %v667 = vunpack.c.l.b16 %v305
      %v668 = vunpack.c.l.b16 %v306
      %v669 = vunpack.c.l.b16 %v307
      %v670 = vunpack.c.l.b16 %v308
      %v671 = vunpack.c.l.b16 %v309
      %v672 = vunpack.c.l.b16 %v310
      %v673 = vunpack.c.l.b16 %v311
      %v674 = vunpack.c.l.b16 %v312
      %v675 = vunpack.c.l.b16 %v313
      %v676 = vunpack.c.l.b16 %v314
      %v677 = vunpack.c.l.b16 %v315
      %v678 = vunpack.c.l.b16 %v316
      %v679 = vunpack.c.l.b16 %v317
      %v680 = vunpack.c.l.b16 %v318
      %v681 = vunpack.c.l.b16 %v319
      %v682 = vunpack.c.l.b16 %v320
      %v683 = vunpack.c.l.b16 %v321
      %v684 = vunpack.c.l.b16 %v322
      %v685 = vunpack.c.l.b16 %v323
      %v686 = vunpack.c.l.b16 %v324
      %v687 = vunpack.c.l.b16 %v325
      %v688 = vunpack.c.l.b16 %v326
      %v689 = vunpack.c.l.b16 %v327
      %v690 = vunpack.c.l.b16 %v328
      %v691 = vunpack.c.l.b16 %v329
      %v692 = vunpack.c.l.b16 %v330
      %v693 = vunpack.c.l.b16 %v331
      %v694 = vunpack.c.l.b16 %v332
      %v695 = vunpack.c.l.b16 %v333
      %v696 = vunpack.c.l.b16 %v334
      %v697 = vunpack.c.l.b16 %v335
      %v698 = vunpack.c.l.b16 %v336
      %v699 = vunpack.c.l.b16 %v337
      %v700 = vunpack.c.l.b16 %v338
      %v701 = vunpack.c.l.b16 %v339
      %v702 = vunpack.c.l.b16 %v340
      %v703 = vunpack.c.l.b16 %v341
      %v704 = vunpack.c.l.b16 %v342
      %v705 = vunpack.c.l.b16 %v343
      %v706 = vunpack.c.l.b16 %v344
      %v707 = vunpack.c.l.b16 %v345
      %v708 = vunpack.c.l.b16 %v346
      %v709 = vunpack.c.l.b16 %v347
      %v710 = vunpack.c.l.b16 %v348
      %v711 = vunpack.c.l.b16 %v349
      %v712 = vunpack.c.l.b16 %v350
      %v713 = vunpack.c.l.b16 %v351
      %v714 = vunpack.c.l.b16 %v352
      %v715 = vunpack.c.l.b16 %v353
      %v716 = vunpack.c.l.b16 %v354
      %v717 = vunpack.c.l.b16 %v355
      %v718 = vunpack.c.l.b16 %v356
      %v719 = vunpack.c.l.b16 %v357
      %v720 = vunpack.c.l.b16 %v358
      %v721 = vunpack.c.l.b16 %v359
      %v722 = vunpack.c.l.b16 %v360
      %v723 = vunpack.c.l.b16 %v361
      %v724 = vunpack.c.l.b16 %v362
      %v725 = vunpack.c.l.b16 %v363
      %v726 = vunpack.c.l.b16 %v364
      %v727 = vunpack.c.l.b16 %v365
      %v728 = vunpack.c.l.b16 %v366
      %v729 = vunpack.c.l.b16 %v367
      %v730 = vunpack.c.l.b16 %v368
      %v731 = vunpack.c.l.b16 %v369
      %v732 = vunpack.c.l.b16 %v370
      %v733 = vunpack.c.l.b16 %v371
      %v734 = vunpack.c.l.b16 %v372
      %v735 = vunpack.c.l.b16 %v373
      %v736 = vunpack.c.l.b16 %v374
      %v737 = vunpack.c.l.b16 %v375
      %v738 = vunpack.c.l.b16 %v376
      %v739 = vunpack.c.l.b16 %v377
      %v740 = vunpack.c.l.b16 %v378
      %v741 = vunpack.c.l.b16 %v379
      %v742 = vunpack.c.l.b16 %v380
      %v743 = vunpack.c.l.b16 %v381
      %v744 = vunpack.c.l.b16 %v382
      %v745 = vunpack.c.l.b16 %v383
      %v746 = vunpack.c.l.b16 %v384
      %v747 = vunpack.c.l.b16 %v385
      %v748 = vunpack.c.l.b16 %v386
      %v749 = vunpack.c.l.b16 %v387
      %v750 = vunpack.c.l.b16 %v388
      %v751 = vunpack.c.l.b16 %v389
      %v752 = vunpack.c.l.b16 %v390
      %v753 = vunpack.c.l.b16 %v391
      %v754 = vunpack.c.l.b16 %v392
      %v755 = vunpack.c.l.b16 %v393
      %v756 = vunpack.c.l.b16 %v394
      %v757 = vunpack.c.l.b16 %v395
      %v758 = vunpack.c.l.b16 %v396
      %v759 = vunpack.c.l.b16 %v397
      %v760 = vunpack.c.l.b16 %v398
      %v761 = vunpack.c.l.b16 %v399
      %v762 = vunpack.c.l.b16 %v400
      %v763 = vunpack.c.l.b16 %v401
      %v764 = vunpack.c.l.b16 %v402
      %v765 = vunpack.c.l.b16 %v403
      %v766 = vunpack.c.l.b16 %v404
      %v767 = vunpack.c.l.b16 %v405
      %v768 = vunpack.c.l.b16 %v406
      %v769 = vunpack.c.l.b16 %v407
      %v770 = vunpack.c.l.b16 %v408
      %v771 = vunpack.c.l.b16 %v409
      %v772 = vunpack.c.l.b16 %v410
      %v773 = vunpack.c.l.b16 %v411
      %v774 = vunpack.c.l.b16 %v412
      %v775 = vunpack.c.l.b16 %v413
      %v776 = vunpack.c.l.b16 %v414
      %v777 = vunpack.c.l.b16 %v415
      %v778 = vunpack.c.l.b16 %v416
      %v779 = vunpack.c.l.b16 %v417
      %v780 = vunpack.c.l.b16 %v418
      %v781 = vunpack.c.l.b16 %v419
      %v782 = vunpack.c.l.b16 %v420
      %v783 = vunpack.c.l.b16 %v421
      %v784 = vunpack.c.l.b16 %v422
      %v785 = vunpack.c.l.b16 %v423
      %v786 = vunpack.c.l.b16 %v424
      %v787 = vunpack.c.l.b16 %v425
      %v788 = vunpack.c.l.b16 %v426
      %v789 = vunpack.c.l.b16 %v427
      %v790 = vunpack.c.l.b16 %v428
      %v791 = vunpack.c.l.b16 %v429
      %v792 = vunpack.c.l.b16 %v430
      %v793 = vunpack.c.l.b16 %v431
      %v794 = vunpack.c.l.b16 %v432
      %v795 = vunpack.c.l.b16 %v433
      %v796 = vunpack.c.l.b16 %v434
      %v797 = vunpack.c.l.b16 %v435
      %v798 = vunpack.c.l.b16 %v436
      %v799 = vunpack.c.l.b16 %v437
      %v800 = vunpack.c.l.b16 %v438
      %v801 = vunpack.c.l.b16 %v439
      %v802 = vunpack.c.l.b16 %v440
      %v803 = vunpack.c.l.b16 %v441
      %v804 = vunpack.c.l.b16 %v442
      %v805 = vunpack.c.l.b16 %v443
      %v806 = vunpack.c.l.b16 %v444
      %v807 = vpack.c.b16 %v648, %v647
      %v808 = vpack.c.b16 %v650, %v649
      %v809 = vpack.c.b16 %v652, %v651
      %v810 = vpack.c.b16 %v654, %v653
      %v811 = vpack.c.b16 %v656, %v655
      %v812 = vpack.c.b16 %v658, %v657
      %v813 = vpack.c.b16 %v660, %v659
      %v814 = vpack.c.b16 %v662, %v661
      %v815 = vpack.c.b16 %v664, %v663
      %v816 = vpack.c.b16 %v666, %v665
      %v817 = vpack.c.b16 %v668, %v667
      %v818 = vpack.c.b16 %v670, %v669
      %v819 = vpack.c.b16 %v672, %v671
      %v820 = vpack.c.b16 %v674, %v673
      %v821 = vpack.c.b16 %v676, %v675
      %v822 = vpack.c.b16 %v678, %v677
      %v823 = vpack.c.b16 %v680, %v679
      %v824 = vpack.c.b16 %v682, %v681
      %v825 = vpack.c.b16 %v684, %v683
      %v826 = vpack.c.b16 %v686, %v685
      %v827 = vpack.c.b16 %v688, %v687
      %v828 = vpack.c.b16 %v690, %v689
      %v829 = vpack.c.b16 %v692, %v691
      %v830 = vpack.c.b16 %v694, %v693
      %v831 = vpack.c.b16 %v696, %v695
      %v832 = vpack.c.b16 %v698, %v697
      %v833 = vpack.c.b16 %v700, %v699
      %v834 = vpack.c.b16 %v702, %v701
      %v835 = vpack.c.b16 %v704, %v703
      %v836 = vpack.c.b16 %v706, %v705
      %v837 = vpack.c.b16 %v708, %v707
      %v838 = vpack.c.b16 %v710, %v709
      %v839 = vpack.c.b16 %v712, %v711
      %v840 = vpack.c.b16 %v714, %v713
      %v841 = vpack.c.b16 %v716, %v715
      %v842 = vpack.c.b16 %v718, %v717
      %v843 = vpack.c.b16 %v720, %v719
      %v844 = vpack.c.b16 %v722, %v721
      %v845 = vpack.c.b16 %v724, %v723
      %v846 = vpack.c.b16 %v726, %v725
      %v847 = vpack.c.b16 %v728, %v727
      %v848 = vpack.c.b16 %v730, %v729
      %v849 = vpack.c.b16 %v732, %v731
      %v850 = vpack.c.b16 %v734, %v733
      %v851 = vpack.c.b16 %v736, %v735
      %v852 = vpack.c.b16 %v738, %v737
      %v853 = vpack.c.b16 %v740, %v739
      %v854 = vpack.c.b16 %v742, %v741
      %v855 = vpack.c.b16 %v744, %v743
      %v856 = vpack.c.b16 %v746, %v745
      %v857 = vpack.c.b16 %v748, %v747
      %v858 = vpack.c.b16 %v750, %v749
      %v859 = vpack.c.b16 %v752, %v751
      %v860 = vpack.c.b16 %v754, %v753
      %v861 = vpack.c.b16 %v756, %v755
      %v862 = vpack.c.b16 %v758, %v757
      %v863 = vpack.c.b16 %v760, %v759
      %v864 = vpack.c.b16 %v762, %v761
      %v865 = vpack.c.b16 %v764, %v763
      %v866 = vpack.c.b16 %v766, %v765
      %v867 = vpack.c.b16 %v768, %v767
      %v868 = vpack.c.b16 %v770, %v769
      %v869 = vpack.c.b16 %v772, %v771
      %v870 = vpack.c.b16 %v774, %v773
      %v871 = vpack.c.b16 %v776, %v775
      %v872 = vpack.c.b16 %v778, %v777
      %v873 = vpack.c.b16 %v780, %v779
      %v874 = vpack.c.b16 %v782, %v781
      %v875 = vpack.c.b16 %v784, %v783
      %v876 = vpack.c.b16 %v786, %v785
      %v877 = vpack.c.b16 %v788, %v787
      %v878 = vpack.c.b16 %v790, %v789
      %v879 = vpack.c.b16 %v792, %v791
      %v880 = vpack.c.b16 %v794, %v793
      %v881 = vpack.c.b16 %v796, %v795
      %v882 = vpack.c.b16 %v798, %v797
      %v883 = vpack.c.b16 %v800, %v799
      %v884 = vpack.c.b16 %v802, %v801
      %v885 = vpack.c.b16 %v804, %v803
      %v886 = vpack.c.b16 %v806, %v805
      %967 = vmatprep.subr.bf16.mxu0 0
      %968 = vmatpush1.bf16.msra.mxu0 %v814
      %969 = vmatprep.subr.bf16.mxu0 0
      %970 = vmatpush1.bf16.msra.mxu0 %v813
      %971 = vmatprep.subr.bf16.mxu0 0
      %972 = vmatpush1.bf16.msra.mxu0 %v812
      %973 = vmatprep.subr.bf16.mxu0 0
      %974 = vmatpush1.bf16.msra.mxu0 %v811
      %975 = vmatprep.subr.bf16.mxu0 0
      %976 = vmatpush1.bf16.msra.mxu0 %v810
      %977 = vmatprep.subr.bf16.mxu0 0
      %978 = vmatpush1.bf16.msra.mxu0 %v809
      %979 = vmatprep.subr.bf16.mxu0 0
      %980 = vmatpush1.bf16.msra.mxu0 %v808
      %981 = vmatprep.subr.bf16.mxu0 0
      %982 = vmatpush1.bf16.msra.mxu0 %v807
      %983 = vmatprep.subr.bf16.mxu0 0
      %984 = vmatpush2.bf16.msra.mxu0 %v822
      %985 = vmatprep.subr.bf16.mxu0 0
      %986 = vmatpush2.bf16.msra.mxu0 %v821
      %987 = vmatprep.subr.bf16.mxu0 0
      %988 = vmatpush2.bf16.msra.mxu0 %v820
      %989 = vmatprep.subr.bf16.mxu0 0
      %990 = vmatpush2.bf16.msra.mxu0 %v819
      %991 = vmatprep.subr.bf16.mxu0 0
      %992 = vmatpush2.bf16.msra.mxu0 %v818
      %993 = vmatprep.subr.bf16.mxu0 0
      %994 = vmatpush2.bf16.msra.mxu0 %v817
      %995 = vmatprep.subr.bf16.mxu0 0
      %996 = vmatpush2.bf16.msra.mxu0 %v816
      %997 = vmatprep.subr.bf16.mxu0 0
      %998 = vmatpush2.bf16.msra.mxu0 %v815
      %999 = vmatprep.mubr.bf16.mxu0 %v468
      %1000 = vmatmul.mubr.bf16.gmra.mxu0 %v467
      %v1001 = vpop.f32.mrf.mxu0
      %v1002 = vadd.f32 %v450, %v1001
      %v1003 = vpop.f32.mrf.mxu0
      %v1004 = vpop.f32.mrf.mxu0
      %v1005 = vpop.f32.mrf.mxu0
      %1006 = vdwg.mxu0
      %1007 = vmatprep.subr.bf16.mxu0 0
      %1008 = vmatpush1.bf16.msra.mxu0 %v830
      %1009 = vmatprep.subr.bf16.mxu0 0
      %1010 = vmatpush1.bf16.msra.mxu0 %v829
      %1011 = vmatprep.subr.bf16.mxu0 0
      %1012 = vmatpush1.bf16.msra.mxu0 %v828
      %1013 = vmatprep.subr.bf16.mxu0 0
      %1014 = vmatpush1.bf16.msra.mxu0 %v827
      %1015 = vmatprep.subr.bf16.mxu0 0
      %1016 = vmatpush1.bf16.msra.mxu0 %v826
      %1017 = vmatprep.subr.bf16.mxu0 0
      %1018 = vmatpush1.bf16.msra.mxu0 %v825
      %1019 = vmatprep.subr.bf16.mxu0 0
      %1020 = vmatpush1.bf16.msra.mxu0 %v824
      %1021 = vmatprep.subr.bf16.mxu0 0
      %1022 = vmatpush1.bf16.msra.mxu0 %v823
      %1023 = vmatprep.subr.bf16.mxu0 0
      %1024 = vmatpush2.bf16.msra.mxu0 %v838
      %1025 = vmatprep.subr.bf16.mxu0 0
      %1026 = vmatpush2.bf16.msra.mxu0 %v837
      %1027 = vmatprep.subr.bf16.mxu0 0
      %1028 = vmatpush2.bf16.msra.mxu0 %v836
      %1029 = vmatprep.subr.bf16.mxu0 0
      %1030 = vmatpush2.bf16.msra.mxu0 %v835
      %1031 = vmatprep.subr.bf16.mxu0 0
      %1032 = vmatpush2.bf16.msra.mxu0 %v834
      %1033 = vmatprep.subr.bf16.mxu0 0
      %1034 = vmatpush2.bf16.msra.mxu0 %v833
      %1035 = vmatprep.subr.bf16.mxu0 0
      %1036 = vmatpush2.bf16.msra.mxu0 %v832
      %1037 = vmatprep.subr.bf16.mxu0 0
      %1038 = vmatpush2.bf16.msra.mxu0 %v831
      %1039 = vmatprep.mubr.bf16.mxu0 %v470
      %1040 = vmatmul.mubr.bf16.gmra.mxu0 %v469
      %v1041 = vpop.f32.mrf.mxu0
      %v1042 = vadd.f32 %v1002, %v1041
      %v1043 = vpop.f32.mrf.mxu0
      %v1044 = vpop.f32.mrf.mxu0
      %v1045 = vpop.f32.mrf.mxu0
      %1046 = vdwg.mxu0
      %1047 = vmatprep.subr.bf16.mxu0 0
      %1048 = vmatpush1.bf16.msra.mxu0 %v846
      %1049 = vmatprep.subr.bf16.mxu0 0
      %1050 = vmatpush1.bf16.msra.mxu0 %v845
      %1051 = vmatprep.subr.bf16.mxu0 0
      %1052 = vmatpush1.bf16.msra.mxu0 %v844
      %1053 = vmatprep.subr.bf16.mxu0 0
      %1054 = vmatpush1.bf16.msra.mxu0 %v843
      %1055 = vmatprep.subr.bf16.mxu0 0
      %1056 = vmatpush1.bf16.msra.mxu0 %v842
      %1057 = vmatprep.subr.bf16.mxu0 0
      %1058 = vmatpush1.bf16.msra.mxu0 %v841
      %1059 = vmatprep.subr.bf16.mxu0 0
      %1060 = vmatpush1.bf16.msra.mxu0 %v840
      %1061 = vmatprep.subr.bf16.mxu0 0
      %1062 = vmatpush1.bf16.msra.mxu0 %v839
      %1063 = vmatprep.subr.bf16.mxu0 0
      %1064 = vmatpush2.bf16.msra.mxu0 %v854
      %1065 = vmatprep.subr.bf16.mxu0 0
      %1066 = vmatpush2.bf16.msra.mxu0 %v853
      %1067 = vmatprep.subr.bf16.mxu0 0
      %1068 = vmatpush2.bf16.msra.mxu0 %v852
      %1069 = vmatprep.subr.bf16.mxu0 0
      %1070 = vmatpush2.bf16.msra.mxu0 %v851
      %1071 = vmatprep.subr.bf16.mxu0 0
      %1072 = vmatpush2.bf16.msra.mxu0 %v850
      %1073 = vmatprep.subr.bf16.mxu0 0
      %1074 = vmatpush2.bf16.msra.mxu0 %v849
      %1075 = vmatprep.subr.bf16.mxu0 0
      %1076 = vmatpush2.bf16.msra.mxu0 %v848
      %1077 = vmatprep.subr.bf16.mxu0 0
      %1078 = vmatpush2.bf16.msra.mxu0 %v847
      %1079 = vmatprep.mubr.bf16.mxu0 %v472
      %1080 = vmatmul.mubr.bf16.gmra.mxu0 %v471
      %v1081 = vpop.f32.mrf.mxu0
      %v1082 = vadd.f32 %v1042, %v1081
      %v1083 = vpop.f32.mrf.mxu0
      %v1084 = vpop.f32.mrf.mxu0
      %v1085 = vpop.f32.mrf.mxu0
      %1086 = vdwg.mxu0
      %1087 = vmatprep.subr.bf16.mxu0 0
      %1088 = vmatpush1.bf16.msra.mxu0 %v862
      %1089 = vmatprep.subr.bf16.mxu0 0
      %1090 = vmatpush1.bf16.msra.mxu0 %v861
      %1091 = vmatprep.subr.bf16.mxu0 0
      %1092 = vmatpush1.bf16.msra.mxu0 %v860
      %1093 = vmatprep.subr.bf16.mxu0 0
      %1094 = vmatpush1.bf16.msra.mxu0 %v859
      %1095 = vmatprep.subr.bf16.mxu0 0
      %1096 = vmatpush1.bf16.msra.mxu0 %v858
      %1097 = vmatprep.subr.bf16.mxu0 0
      %1098 = vmatpush1.bf16.msra.mxu0 %v857
      %1099 = vmatprep.subr.bf16.mxu0 0
      %1100 = vmatpush1.bf16.msra.mxu0 %v856
      %1101 = vmatprep.subr.bf16.mxu0 0
      %1102 = vmatpush1.bf16.msra.mxu0 %v855
      %1103 = vmatprep.subr.bf16.mxu0 0
      %1104 = vmatpush2.bf16.msra.mxu0 %v870
      %1105 = vmatprep.subr.bf16.mxu0 0
      %1106 = vmatpush2.bf16.msra.mxu0 %v869
      %1107 = vmatprep.subr.bf16.mxu0 0
      %1108 = vmatpush2.bf16.msra.mxu0 %v868
      %1109 = vmatprep.subr.bf16.mxu0 0
      %1110 = vmatpush2.bf16.msra.mxu0 %v867
      %1111 = vmatprep.subr.bf16.mxu0 0
      %1112 = vmatpush2.bf16.msra.mxu0 %v866
      %1113 = vmatprep.subr.bf16.mxu0 0
      %1114 = vmatpush2.bf16.msra.mxu0 %v865
      %1115 = vmatprep.subr.bf16.mxu0 0
      %1116 = vmatpush2.bf16.msra.mxu0 %v864
      %1117 = vmatprep.subr.bf16.mxu0 0
      %1118 = vmatpush2.bf16.msra.mxu0 %v863
      %1119 = vmatprep.mubr.bf16.mxu0 %v474
      %1120 = vmatmul.mubr.bf16.gmra.mxu0 %v473
      %v1121 = vpop.f32.mrf.mxu0
      %v1122 = vadd.f32 %v1082, %v1121
      %v1123 = vpop.f32.mrf.mxu0
      %v1124 = vpop.f32.mrf.mxu0
      %v1125 = vpop.f32.mrf.mxu0
      %1126 = vdwg.mxu0
      %1127 = vmatprep.subr.bf16.mxu0 0
      %1128 = vmatpush1.bf16.msra.mxu0 %v878
      %1129 = vmatprep.subr.bf16.mxu0 0
      %1130 = vmatpush1.bf16.msra.mxu0 %v877
      %1131 = vmatprep.subr.bf16.mxu0 0
      %1132 = vmatpush1.bf16.msra.mxu0 %v876
      %1133 = vmatprep.subr.bf16.mxu0 0
      %1134 = vmatpush1.bf16.msra.mxu0 %v875
      %1135 = vmatprep.subr.bf16.mxu0 0
      %1136 = vmatpush1.bf16.msra.mxu0 %v874
      %1137 = vmatprep.subr.bf16.mxu0 0
      %1138 = vmatpush1.bf16.msra.mxu0 %v873
      %1139 = vmatprep.subr.bf16.mxu0 0
      %1140 = vmatpush1.bf16.msra.mxu0 %v872
      %1141 = vmatprep.subr.bf16.mxu0 0
      %1142 = vmatpush1.bf16.msra.mxu0 %v871
      %1143 = vmatprep.subr.bf16.mxu0 0
      %1144 = vmatpush2.bf16.msra.mxu0 %v886
      %1145 = vmatprep.subr.bf16.mxu0 0
      %1146 = vmatpush2.bf16.msra.mxu0 %v885
      %1147 = vmatprep.subr.bf16.mxu0 0
      %1148 = vmatpush2.bf16.msra.mxu0 %v884
      %1149 = vmatprep.subr.bf16.mxu0 0
      %1150 = vmatpush2.bf16.msra.mxu0 %v883
      %1151 = vmatprep.subr.bf16.mxu0 0
      %1152 = vmatpush2.bf16.msra.mxu0 %v882
      %1153 = vmatprep.subr.bf16.mxu0 0
      %1154 = vmatpush2.bf16.msra.mxu0 %v881
      %1155 = vmatprep.subr.bf16.mxu0 0
      %1156 = vmatpush2.bf16.msra.mxu0 %v880
      %1157 = vmatprep.subr.bf16.mxu0 0
      %1158 = vmatpush2.bf16.msra.mxu0 %v879
      %1159 = vmatprep.mubr.bf16.mxu0 %v476
      %1160 = vmatmul.mubr.bf16.gmra.mxu0 %v475
      %v1161 = vpop.f32.mrf.mxu0
      %v1162 = vadd.f32 %v1122, %v1161
      %v1163 = vpop.f32.mrf.mxu0
      %v1164 = vpop.f32.mrf.mxu0
      %v1165 = vpop.f32.mrf.mxu0
      %1166 = vdwg.mxu0
      %v1167 = vmax.f32 %v1162, 0.0
      %v1168 = vpack.c.bf16 %v1167, %v1167
      %v1169 = vld [vmem:[%s3] sm:$0xff]
      %v1170 = vld [vmem:[%s3 + $0x8] sm:$0xf]
      %v1171 = vld [vmem:[%s3 + $0xc] sm:$0xff]
      %v1172 = vld [vmem:[%s3 + $0x14] sm:$0xf]
      %v1173 = vld [vmem:[%s3 + $0x18] sm:$0xff]
      %v1174 = vld [vmem:[%s3 + $0x20] sm:$0xf]
      %v1175 = vld [vmem:[%s3 + $0x24] sm:$0xff]
      %v1176 = vld [vmem:[%s3 + $0x2c] sm:$0xf]
      %v1177 = vld [vmem:[%s3 + $0x30] sm:$0xff]
      %v1178 = vld [vmem:[%s3 + $0x38] sm:$0xf]
      %v1179 = vld [vmem:[%s3 + $0x3c] sm:$0xff]
      %v1180 = vld [vmem:[%s3 + $0x44] sm:$0xf]
      %v1181 = vld [vmem:[%s3 + $0x48] sm:$0xff]
      %v1182 = vld [vmem:[%s3 + $0x50] sm:$0xf]
      %v1183 = vld [vmem:[%s3 + $0x54] sm:$0xff]
      %v1184 = vld [vmem:[%s3 + $0x5c] sm:$0xf]
      %v1185 = vld [vmem:[%s3 + $0x60] sm:$0xff]
      %v1186 = vld [vmem:[%s3 + $0x68] sm:$0xf]
      %v1187 = vld [vmem:[%s3 + $0x6c] sm:$0xff]
      %v1188 = vld [vmem:[%s3 + $0x74] sm:$0xf]
      %v1189 = vld [vmem:[%s3 + $0x78] sm:$0xff]
      %v1190 = vld [vmem:[%s3 + $0x80] sm:$0xf]
      %v1191 = vld [vmem:[%s3 + $0x84] sm:$0xff]
      %v1192 = vld [vmem:[%s3 + $0x8c] sm:$0xf]
      %v1193 = vld [vmem:[%s3 + $0x90] sm:$0xff]
      %v1194 = vld [vmem:[%s3 + $0x98] sm:$0xf]
      %v1195 = vld [vmem:[%s3 + $0x9c] sm:$0xff]
      %v1196 = vld [vmem:[%s3 + $0xa4] sm:$0xf]
      %v1197 = vld [vmem:[%s3 + $0xa8] sm:$0xff]
      %v1198 = vld [vmem:[%s3 + $0xb0] sm:$0xf]
      %v1199 = vld [vmem:[%s3 + $0xb4] sm:$0xff]
      %v1200 = vld [vmem:[%s3 + $0xbc] sm:$0xf]
      %v1201 = vld [vmem:[%s4] sm:$0x7]
      %v1203 = vlaneseq
      %v1204 = vshrl.u32 %v1203, 7
      %v1205 = vsub.s32 0, %v1204
      %v1206 = vrot.slane %v1201, %v1205
      %v1207 = vlaneseq
      %v1208 = vshrl.u32 %v1207, 7
      %v1209 = vsub.s32 1, %v1208
      %v1210 = vrot.slane %v1201, %v1209
      %v1211 = vlaneseq
      %v1212 = vshrl.u32 %v1211, 7
      %v1213 = vsub.s32 2, %v1212
      %v1214 = vrot.slane %v1201, %v1213
      %v1250 = vunpack.c.l.b16 %v1169
      %v1251 = vunpack.c.h.b16 %v1169
      %v1252 = vunpack.c.l.b16 %v1170
      %v1253 = vunpack.c.l.b16 %v1171
      %v1254 = vunpack.c.h.b16 %v1171
      %v1255 = vunpack.c.l.b16 %v1172
      %v1256 = vunpack.c.l.b16 %v1173
      %v1257 = vunpack.c.h.b16 %v1173
      %v1258 = vunpack.c.l.b16 %v1174
      %v1259 = vunpack.c.l.b16 %v1175
      %v1260 = vunpack.c.h.b16 %v1175
      %v1261 = vunpack.c.l.b16 %v1176
      %v1262 = vunpack.c.l.b16 %v1177
      %v1263 = vunpack.c.h.b16 %v1177
      %v1264 = vunpack.c.l.b16 %v1178
      %v1265 = vunpack.c.l.b16 %v1179
      %v1266 = vunpack.c.h.b16 %v1179
      %v1267 = vunpack.c.l.b16 %v1180
      %v1268 = vunpack.c.l.b16 %v1181
      %v1269 = vunpack.c.h.b16 %v1181
      %v1270 = vunpack.c.l.b16 %v1182
      %v1271 = vunpack.c.l.b16 %v1183
      %v1272 = vunpack.c.h.b16 %v1183
      %v1273 = vunpack.c.l.b16 %v1184
      %v1274 = vunpack.c.l.b16 %v1185
      %v1275 = vunpack.c.h.b16 %v1185
      %v1276 = vunpack.c.l.b16 %v1186
      %v1277 = vunpack.c.l.b16 %v1187
      %v1278 = vunpack.c.h.b16 %v1187
      %v1279 = vunpack.c.l.b16 %v1188
      %v1280 = vunpack.c.l.b16 %v1189
      %v1281 = vunpack.c.h.b16 %v1189
      %v1282 = vunpack.c.l.b16 %v1190
      %v1283 = vunpack.c.l.b16 %v1191
      %v1284 = vunpack.c.h.b16 %v1191
      %v1285 = vunpack.c.l.b16 %v1192
      %v1286 = vunpack.c.l.b16 %v1193
      %v1287 = vunpack.c.h.b16 %v1193
      %v1288 = vunpack.c.l.b16 %v1194
      %v1289 = vunpack.c.l.b16 %v1195
      %v1290 = vunpack.c.h.b16 %v1195
      %v1291 = vunpack.c.l.b16 %v1196
      %v1292 = vunpack.c.l.b16 %v1197
      %v1293 = vunpack.c.h.b16 %v1197
      %v1294 = vunpack.c.l.b16 %v1198
      %v1295 = vunpack.c.l.b16 %v1199
      %v1296 = vunpack.c.h.b16 %v1199
      %v1297 = vunpack.c.l.b16 %v1200
      %v1298 = vpack.c.b16 %v1253, %v1250
      %v1299 = vpack.c.b16 %v1254, %v1251
      %v1300 = vpack.c.b16 %v1255, %v1252
      %v1301 = vpack.c.b16 %v1259, %v1256
      %v1302 = vpack.c.b16 %v1260, %v1257
      %v1303 = vpack.c.b16 %v1261, %v1258
      %v1304 = vpack.c.b16 %v1265, %v1262
      %v1305 = vpack.c.b16 %v1266, %v1263
      %v1306 = vpack.c.b16 %v1267, %v1264
      %v1307 = vpack.c.b16 %v1271, %v1268
      %v1308 = vpack.c.b16 %v1272, %v1269
      %v1309 = vpack.c.b16 %v1273, %v1270
      %v1310 = vpack.c.b16 %v1277, %v1274
      %v1311 = vpack.c.b16 %v1278, %v1275
      %v1312 = vpack.c.b16 %v1279, %v1276
      %v1313 = vpack.c.b16 %v1283, %v1280
      %v1314 = vpack.c.b16 %v1284, %v1281
      %v1315 = vpack.c.b16 %v1285, %v1282
      %v1316 = vpack.c.b16 %v1289, %v1286
      %v1317 = vpack.c.b16 %v1290, %v1287
      %v1318 = vpack.c.b16 %v1291, %v1288
      %v1319 = vpack.c.b16 %v1295, %v1292
      %v1320 = vpack.c.b16 %v1296, %v1293
      %v1321 = vpack.c.b16 %v1297, %v1294
      %1346 = vmatprep.subr.bf16.mxu0 %v1320
      %1347 = vmatpush1.bf16.msra.mxu0 %v1319
      %1348 = vmatprep.subr.bf16.mxu0 %v1317
      %1349 = vmatpush1.bf16.msra.mxu0 %v1316
      %1350 = vmatprep.subr.bf16.mxu0 %v1314
      %1351 = vmatpush1.bf16.msra.mxu0 %v1313
      %1352 = vmatprep.subr.bf16.mxu0 %v1311
      %1353 = vmatpush1.bf16.msra.mxu0 %v1310
      %1354 = vmatprep.subr.bf16.mxu0 %v1308
      %1355 = vmatpush1.bf16.msra.mxu0 %v1307
      %1356 = vmatprep.subr.bf16.mxu0 %v1305
      %1357 = vmatpush1.bf16.msra.mxu0 %v1304
      %1358 = vmatprep.subr.bf16.mxu0 %v1302
      %1359 = vmatpush1.bf16.msra.mxu0 %v1301
      %1360 = vmatprep.subr.bf16.mxu0 %v1299
      %1361 = vmatpush1.bf16.msra.mxu0 %v1298
      %1362 = vmatprep.subr.bf16.mxu0 0
      %1363 = vmatpush2.bf16.msra.mxu0 0
      %1364 = vmatprep.subr.bf16.mxu0 0
      %1365 = vmatpush2.bf16.msra.mxu0 0
      %1366 = vmatprep.subr.bf16.mxu0 0
      %1367 = vmatpush2.bf16.msra.mxu0 0
      %1368 = vmatprep.subr.bf16.mxu0 0
      %1369 = vmatpush2.bf16.msra.mxu0 0
      %1370 = vmatprep.subr.bf16.mxu0 0
      %1371 = vmatpush2.bf16.msra.mxu0 0
      %1372 = vmatprep.subr.bf16.mxu0 0
      %1373 = vmatpush2.bf16.msra.mxu0 0
      %1374 = vmatprep.subr.bf16.mxu0 0
      %1375 = vmatpush2.bf16.msra.mxu0 0
      %1376 = vmatprep.subr.bf16.mxu0 0
      %1377 = vmatpush2.bf16.msra.mxu0 0
      %1378 = vmatprep.mubr.bf16.mxu0 0
      %1379 = vmatmul.mubr.bf16.gmra.mxu0 %v1168
      %v1380 = vpop.f32.mrf.mxu0
      %v1381 = vadd.f32 %v1206, %v1380
      %v1382 = vpop.f32.mrf.mxu0
      %v1383 = vadd.f32 %v1210, %v1382
      %v1384 = vpop.f32.mrf.mxu0
      %v1385 = vpop.f32.mrf.mxu0
      %1386 = vdwg.mxu0
      %1387 = vmatprep.subr.bf16.mxu0 0
      %1388 = vmatpush1.bf16.msra.mxu0 %v1321
      %1389 = vmatprep.subr.bf16.mxu0 0
      %1390 = vmatpush1.bf16.msra.mxu0 %v1318
      %1391 = vmatprep.subr.bf16.mxu0 0
      %1392 = vmatpush1.bf16.msra.mxu0 %v1315
      %1393 = vmatprep.subr.bf16.mxu0 0
      %1394 = vmatpush1.bf16.msra.mxu0 %v1312
      %1395 = vmatprep.subr.bf16.mxu0 0
      %1396 = vmatpush1.bf16.msra.mxu0 %v1309
      %1397 = vmatprep.subr.bf16.mxu0 0
      %1398 = vmatpush1.bf16.msra.mxu0 %v1306
      %1399 = vmatprep.subr.bf16.mxu0 0
      %1400 = vmatpush1.bf16.msra.mxu0 %v1303
      %1401 = vmatprep.subr.bf16.mxu0 0
      %1402 = vmatpush1.bf16.msra.mxu0 %v1300
      %1403 = vmatprep.subr.bf16.mxu0 0
      %1404 = vmatpush2.bf16.msra.mxu0 0
      %1405 = vmatprep.subr.bf16.mxu0 0
      %1406 = vmatpush2.bf16.msra.mxu0 0
      %1407 = vmatprep.subr.bf16.mxu0 0
      %1408 = vmatpush2.bf16.msra.mxu0 0
      %1409 = vmatprep.subr.bf16.mxu0 0
      %1410 = vmatpush2.bf16.msra.mxu0 0
      %1411 = vmatprep.subr.bf16.mxu0 0
      %1412 = vmatpush2.bf16.msra.mxu0 0
      %1413 = vmatprep.subr.bf16.mxu0 0
      %1414 = vmatpush2.bf16.msra.mxu0 0
      %1415 = vmatprep.subr.bf16.mxu0 0
      %1416 = vmatpush2.bf16.msra.mxu0 0
      %1417 = vmatprep.subr.bf16.mxu0 0
      %1418 = vmatpush2.bf16.msra.mxu0 0
      %1419 = vmatprep.mubr.bf16.mxu0 0
      %1420 = vmatmul.mubr.bf16.gmra.mxu0 %v1168
      %v1421 = vpop.f32.mrf.mxu0
      %v1422 = vadd.f32 %v1214, %v1421
      %v1423 = vpop.f32.mrf.mxu0
      %v1424 = vpop.f32.mrf.mxu0
      %v1425 = vpop.f32.mrf.mxu0
      %1426 = vdwg.mxu0
      %v1427 = vmax.f32 %v1381, 0.0
      %v1428 = vmax.f32 %v1383, 0.0
      %v1429 = vmax.f32 %v1422, 0.0
      %v1430 = vpack.c.bf16 %v1427, %v1427
      %v1431 = vpack.c.bf16 %v1428, %v1428
      %v1432 = vpack.c.bf16 %v1429, %v1429
      %v1433 = vld [vmem:[%s5] sm:$0xff]
      %v1434 = vld [vmem:[%s5 + $0x8] sm:$0xf]
      %v1435 = vld [vmem:[%s5 + $0xc] sm:$0xff]
      %v1436 = vld [vmem:[%s5 + $0x14] sm:$0xf]
      %v1437 = vld [vmem:[%s5 + $0x18] sm:$0xff]
      %v1438 = vld [vmem:[%s5 + $0x20] sm:$0xf]
      %v1439 = vld [vmem:[%s5 + $0x24] sm:$0xff]
      %v1440 = vld [vmem:[%s5 + $0x2c] sm:$0xf]
      %v1441 = vld [vmem:[%s5 + $0x30] sm:$0xff]
      %v1442 = vld [vmem:[%s5 + $0x38] sm:$0xf]
      %v1443 = vld [vmem:[%s5 + $0x3c] sm:$0xff]
      %v1444 = vld [vmem:[%s5 + $0x44] sm:$0xf]
      %v1445 = vld [vmem:[%s5 + $0x48] sm:$0xff]
      %v1446 = vld [vmem:[%s5 + $0x50] sm:$0xf]
      %v1447 = vld [vmem:[%s5 + $0x54] sm:$0xff]
      %v1448 = vld [vmem:[%s5 + $0x5c] sm:$0xf]
      %v1449 = vld [vmem:[%s5 + $0x60] sm:$0xff]
      %v1450 = vld [vmem:[%s5 + $0x68] sm:$0xf]
      %v1451 = vld [vmem:[%s5 + $0x6c] sm:$0xff]
      %v1452 = vld [vmem:[%s5 + $0x74] sm:$0xf]
      %v1453 = vld [vmem:[%s5 + $0x78] sm:$0xff]
      %v1454 = vld [vmem:[%s5 + $0x80] sm:$0xf]
      %v1455 = vld [vmem:[%s5 + $0x84] sm:$0xff]
      %v1456 = vld [vmem:[%s5 + $0x8c] sm:$0xf]
      %v1457 = vld [vmem:[%s5 + $0x90] sm:$0xff]
      %v1458 = vld [vmem:[%s5 + $0x98] sm:$0xf]
      %v1459 = vld [vmem:[%s5 + $0x9c] sm:$0xff]
      %v1460 = vld [vmem:[%s5 + $0xa4] sm:$0xf]
      %v1461 = vld [vmem:[%s5 + $0xa8] sm:$0xff]
      %v1462 = vld [vmem:[%s5 + $0xb0] sm:$0xf]
      %v1463 = vld [vmem:[%s5 + $0xb4] sm:$0xff]
      %v1464 = vld [vmem:[%s5 + $0xbc] sm:$0xf]
      %v1465 = vld [vmem:[%s5 + $0xc0] sm:$0xff]
      %v1466 = vld [vmem:[%s5 + $0xc8] sm:$0xf]
      %v1467 = vld [vmem:[%s5 + $0xcc] sm:$0xff]
      %v1468 = vld [vmem:[%s5 + $0xd4] sm:$0xf]
      %v1469 = vld [vmem:[%s5 + $0xd8] sm:$0xff]
      %v1470 = vld [vmem:[%s5 + $0xe0] sm:$0xf]
      %v1471 = vld [vmem:[%s5 + $0xe4] sm:$0xff]
      %v1472 = vld [vmem:[%s5 + $0xec] sm:$0xf]
      %v1473 = vld [vmem:[%s5 + $0xf0] sm:$0xff]
      %v1474 = vld [vmem:[%s5 + $0xf8] sm:$0xf]
      %v1475 = vld [vmem:[%s5 + $0xfc] sm:$0xff]
      %v1476 = vld [vmem:[%s5 + $0x104] sm:$0xf]
      %v1477 = vld [vmem:[%s5 + $0x108] sm:$0xff]
      %v1478 = vld [vmem:[%s5 + $0x110] sm:$0xf]
      %v1479 = vld [vmem:[%s5 + $0x114] sm:$0xff]
      %v1480 = vld [vmem:[%s5 + $0x11c] sm:$0xf]
      %v1481 = vld [vmem:[%s5 + $0x120] sm:$0xff]
      %v1482 = vld [vmem:[%s5 + $0x128] sm:$0xf]
      %v1483 = vld [vmem:[%s5 + $0x12c] sm:$0xff]
      %v1484 = vld [vmem:[%s5 + $0x134] sm:$0xf]
      %v1485 = vld [vmem:[%s5 + $0x138] sm:$0xff]
      %v1486 = vld [vmem:[%s5 + $0x140] sm:$0xf]
      %v1487 = vld [vmem:[%s5 + $0x144] sm:$0xff]
      %v1488 = vld [vmem:[%s5 + $0x14c] sm:$0xf]
      %v1489 = vld [vmem:[%s5 + $0x150] sm:$0xff]
      %v1490 = vld [vmem:[%s5 + $0x158] sm:$0xf]
      %v1491 = vld [vmem:[%s5 + $0x15c] sm:$0xff]
      %v1492 = vld [vmem:[%s5 + $0x164] sm:$0xf]
      %v1493 = vld [vmem:[%s5 + $0x168] sm:$0xff]
      %v1494 = vld [vmem:[%s5 + $0x170] sm:$0xf]
      %v1495 = vld [vmem:[%s5 + $0x174] sm:$0xff]
      %v1496 = vld [vmem:[%s5 + $0x17c] sm:$0xf]
      %v1497 = vld [vmem:[%s5 + $0x180] sm:$0xff]
      %v1498 = vld [vmem:[%s5 + $0x188] sm:$0xf]
      %v1499 = vld [vmem:[%s5 + $0x18c] sm:$0xff]
      %v1500 = vld [vmem:[%s5 + $0x194] sm:$0xf]
      %v1501 = vld [vmem:[%s5 + $0x198] sm:$0xff]
      %v1502 = vld [vmem:[%s5 + $0x1a0] sm:$0xf]
      %v1503 = vld [vmem:[%s5 + $0x1a4] sm:$0xff]
      %v1504 = vld [vmem:[%s5 + $0x1ac] sm:$0xf]
      %v1505 = vld [vmem:[%s5 + $0x1b0] sm:$0xff]
      %v1506 = vld [vmem:[%s5 + $0x1b8] sm:$0xf]
      %v1507 = vld [vmem:[%s5 + $0x1bc] sm:$0xff]
      %v1508 = vld [vmem:[%s5 + $0x1c4] sm:$0xf]
      %v1509 = vld [vmem:[%s5 + $0x1c8] sm:$0xff]
      %v1510 = vld [vmem:[%s5 + $0x1d0] sm:$0xf]
      %v1511 = vld [vmem:[%s5 + $0x1d4] sm:$0xff]
      %v1512 = vld [vmem:[%s5 + $0x1dc] sm:$0xf]
      %v1513 = vld [vmem:[%s5 + $0x1e0] sm:$0xff]
      %v1514 = vld [vmem:[%s5 + $0x1e8] sm:$0xf]
      %v1515 = vld [vmem:[%s5 + $0x1ec] sm:$0xff]
      %v1516 = vld [vmem:[%s5 + $0x1f4] sm:$0xf]
      %v1517 = vld [vmem:[%s5 + $0x1f8] sm:$0xff]
      %v1518 = vld [vmem:[%s5 + $0x200] sm:$0xf]
      %v1519 = vld [vmem:[%s5 + $0x204] sm:$0xff]
      %v1520 = vld [vmem:[%s5 + $0x20c] sm:$0xf]
      %v1521 = vld [vmem:[%s5 + $0x210] sm:$0xff]
      %v1522 = vld [vmem:[%s5 + $0x218] sm:$0xf]
      %v1523 = vld [vmem:[%s5 + $0x21c] sm:$0xff]
      %v1524 = vld [vmem:[%s5 + $0x224] sm:$0xf]
      %v1525 = vld [vmem:[%s5 + $0x228] sm:$0xff]
      %v1526 = vld [vmem:[%s5 + $0x230] sm:$0xf]
      %v1527 = vld [vmem:[%s5 + $0x234] sm:$0xff]
      %v1528 = vld [vmem:[%s5 + $0x23c] sm:$0xf]
      %v1529 = vld [vmem:[%s6] sm:$0x7]
      %v1531 = vlaneseq
      %v1532 = vshrl.u32 %v1531, 7
      %v1533 = vsub.s32 0, %v1532
      %v1534 = vrot.slane %v1529, %v1533
      %v1535 = vlaneseq
      %v1536 = vshrl.u32 %v1535, 7
      %v1537 = vsub.s32 1, %v1536
      %v1538 = vrot.slane %v1529, %v1537
      %v1539 = vlaneseq
      %v1540 = vshrl.u32 %v1539, 7
      %v1541 = vsub.s32 2, %v1540
      %v1542 = vrot.slane %v1529, %v1541
      %v1642 = vunpack.c.l.b16 %v1433
      %v1643 = vunpack.c.h.b16 %v1433
      %v1644 = vunpack.c.l.b16 %v1434
      %v1645 = vunpack.c.l.b16 %v1435
      %v1646 = vunpack.c.h.b16 %v1435
      %v1647 = vunpack.c.l.b16 %v1436
      %v1648 = vunpack.c.l.b16 %v1437
      %v1649 = vunpack.c.h.b16 %v1437
      %v1650 = vunpack.c.l.b16 %v1438
      %v1651 = vunpack.c.l.b16 %v1439
      %v1652 = vunpack.c.h.b16 %v1439
      %v1653 = vunpack.c.l.b16 %v1440
      %v1654 = vunpack.c.l.b16 %v1441
      %v1655 = vunpack.c.h.b16 %v1441
      %v1656 = vunpack.c.l.b16 %v1442
      %v1657 = vunpack.c.l.b16 %v1443
      %v1658 = vunpack.c.h.b16 %v1443
      %v1659 = vunpack.c.l.b16 %v1444
      %v1660 = vunpack.c.l.b16 %v1445
      %v1661 = vunpack.c.h.b16 %v1445
      %v1662 = vunpack.c.l.b16 %v1446
      %v1663 = vunpack.c.l.b16 %v1447
      %v1664 = vunpack.c.h.b16 %v1447
      %v1665 = vunpack.c.l.b16 %v1448
      %v1666 = vunpack.c.l.b16 %v1449
      %v1667 = vunpack.c.h.b16 %v1449
      %v1668 = vunpack.c.l.b16 %v1450
      %v1669 = vunpack.c.l.b16 %v1451
      %v1670 = vunpack.c.h.b16 %v1451
      %v1671 = vunpack.c.l.b16 %v1452
      %v1672 = vunpack.c.l.b16 %v1453
      %v1673 = vunpack.c.h.b16 %v1453
      %v1674 = vunpack.c.l.b16 %v1454
      %v1675 = vunpack.c.l.b16 %v1455
      %v1676 = vunpack.c.h.b16 %v1455
      %v1677 = vunpack.c.l.b16 %v1456
      %v1678 = vunpack.c.l.b16 %v1457
      %v1679 = vunpack.c.h.b16 %v1457
      %v1680 = vunpack.c.l.b16 %v1458
      %v1681 = vunpack.c.l.b16 %v1459
      %v1682 = vunpack.c.h.b16 %v1459
      %v1683 = vunpack.c.l.b16 %v1460
      %v1684 = vunpack.c.l.b16 %v1461
      %v1685 = vunpack.c.h.b16 %v1461
      %v1686 = vunpack.c.l.b16 %v1462
      %v1687 = vunpack.c.l.b16 %v1463
      %v1688 = vunpack.c.h.b16 %v1463
      %v1689 = vunpack.c.l.b16 %v1464
      %v1690 = vunpack.c.l.b16 %v1465
      %v1691 = vunpack.c.h.b16 %v1465
      %v1692 = vunpack.c.l.b16 %v1466
      %v1693 = vunpack.c.l.b16 %v1467
      %v1694 = vunpack.c.h.b16 %v1467
      %v1695 = vunpack.c.l.b16 %v1468
      %v1696 = vunpack.c.l.b16 %v1469
      %v1697 = vunpack.c.h.b16 %v1469
      %v1698 = vunpack.c.l.b16 %v1470
      %v1699 = vunpack.c.l.b16 %v1471
      %v1700 = vunpack.c.h.b16 %v1471
      %v1701 = vunpack.c.l.b16 %v1472
      %v1702 = vunpack.c.l.b16 %v1473
      %v1703 = vunpack.c.h.b16 %v1473
      %v1704 = vunpack.c.l.b16 %v1474
      %v1705 = vunpack.c.l.b16 %v1475
      %v1706 = vunpack.c.h.b16 %v1475
      %v1707 = vunpack.c.l.b16 %v1476
      %v1708 = vunpack.c.l.b16 %v1477
      %v1709 = vunpack.c.h.b16 %v1477
      %v1710 = vunpack.c.l.b16 %v1478
      %v1711 = vunpack.c.l.b16 %v1479
      %v1712 = vunpack.c.h.b16 %v1479
      %v1713 = vunpack.c.l.b16 %v1480
      %v1714 = vunpack.c.l.b16 %v1481
      %v1715 = vunpack.c.h.b16 %v1481
      %v1716 = vunpack.c.l.b16 %v1482
      %v1717 = vunpack.c.l.b16 %v1483
      %v1718 = vunpack.c.h.b16 %v1483
      %v1719 = vunpack.c.l.b16 %v1484
      %v1720 = vunpack.c.l.b16 %v1485
      %v1721 = vunpack.c.h.b16 %v1485
      %v1722 = vunpack.c.l.b16 %v1486
      %v1723 = vunpack.c.l.b16 %v1487
      %v1724 = vunpack.c.h.b16 %v1487
      %v1725 = vunpack.c.l.b16 %v1488
      %v1726 = vunpack.c.l.b16 %v1489
      %v1727 = vunpack.c.h.b16 %v1489
      %v1728 = vunpack.c.l.b16 %v1490
      %v1729 = vunpack.c.l.b16 %v1491
      %v1730 = vunpack.c.h.b16 %v1491
      %v1731 = vunpack.c.l.b16 %v1492
      %v1732 = vunpack.c.l.b16 %v1493
      %v1733 = vunpack.c.h.b16 %v1493
      %v1734 = vunpack.c.l.b16 %v1494
      %v1735 = vunpack.c.l.b16 %v1495
      %v1736 = vunpack.c.h.b16 %v1495
      %v1737 = vunpack.c.l.b16 %v1496
      %v1738 = vunpack.c.l.b16 %v1497
      %v1739 = vunpack.c.h.b16 %v1497
      %v1740 = vunpack.c.l.b16 %v1498
      %v1741 = vunpack.c.l.b16 %v1499
      %v1742 = vunpack.c.h.b16 %v1499
      %v1743 = vunpack.c.l.b16 %v1500
      %v1744 = vunpack.c.l.b16 %v1501
      %v1745 = vunpack.c.h.b16 %v1501
      %v1746 = vunpack.c.l.b16 %v1502
      %v1747 = vunpack.c.l.b16 %v1503
      %v1748 = vunpack.c.h.b16 %v1503
      %v1749 = vunpack.c.l.b16 %v1504
      %v1750 = vunpack.c.l.b16 %v1505
      %v1751 = vunpack.c.h.b16 %v1505
      %v1752 = vunpack.c.l.b16 %v1506
      %v1753 = vunpack.c.l.b16 %v1507
      %v1754 = vunpack.c.h.b16 %v1507
      %v1755 = vunpack.c.l.b16 %v1508
      %v1756 = vunpack.c.l.b16 %v1509
      %v1757 = vunpack.c.h.b16 %v1509
      %v1758 = vunpack.c.l.b16 %v1510
      %v1759 = vunpack.c.l.b16 %v1511
      %v1760 = vunpack.c.h.b16 %v1511
      %v1761 = vunpack.c.l.b16 %v1512
      %v1762 = vunpack.c.l.b16 %v1513
      %v1763 = vunpack.c.h.b16 %v1513
      %v1764 = vunpack.c.l.b16 %v1514
      %v1765 = vunpack.c.l.b16 %v1515
      %v1766 = vunpack.c.h.b16 %v1515
      %v1767 = vunpack.c.l.b16 %v1516
      %v1768 = vunpack.c.l.b16 %v1517
      %v1769 = vunpack.c.h.b16 %v1517
      %v1770 = vunpack.c.l.b16 %v1518
      %v1771 = vunpack.c.l.b16 %v1519
      %v1772 = vunpack.c.h.b16 %v1519
      %v1773 = vunpack.c.l.b16 %v1520
      %v1774 = vunpack.c.l.b16 %v1521
      %v1775 = vunpack.c.h.b16 %v1521
      %v1776 = vunpack.c.l.b16 %v1522
      %v1777 = vunpack.c.l.b16 %v1523
      %v1778 = vunpack.c.h.b16 %v1523
      %v1779 = vunpack.c.l.b16 %v1524
      %v1780 = vunpack.c.l.b16 %v1525
      %v1781 = vunpack.c.h.b16 %v1525
      %v1782 = vunpack.c.l.b16 %v1526
      %v1783 = vunpack.c.l.b16 %v1527
      %v1784 = vunpack.c.h.b16 %v1527
      %v1785 = vunpack.c.l.b16 %v1528
      %v1786 = vpack.c.b16 %v1645, %v1642
      %v1787 = vpack.c.b16 %v1646, %v1643
      %v1788 = vpack.c.b16 %v1647, %v1644
      %v1789 = vpack.c.b16 %v1651, %v1648
      %v1790 = vpack.c.b16 %v1652, %v1649
      %v1791 = vpack.c.b16 %v1653, %v1650
      %v1792 = vpack.c.b16 %v1657, %v1654
      %v1793 = vpack.c.b16 %v1658, %v1655
      %v1794 = vpack.c.b16 %v1659, %v1656
      %v1795 = vpack.c.b16 %v1663, %v1660
      %v1796 = vpack.c.b16 %v1664, %v1661
      %v1797 = vpack.c.b16 %v1665, %v1662
      %v1798 = vpack.c.b16 %v1669, %v1666
      %v1799 = vpack.c.b16 %v1670, %v1667
      %v1800 = vpack.c.b16 %v1671, %v1668
      %v1801 = vpack.c.b16 %v1675, %v1672
      %v1802 = vpack.c.b16 %v1676, %v1673
      %v1803 = vpack.c.b16 %v1677, %v1674
      %v1804 = vpack.c.b16 %v1681, %v1678
      %v1805 = vpack.c.b16 %v1682, %v1679
      %v1806 = vpack.c.b16 %v1683, %v1680
      %v1807 = vpack.c.b16 %v1687, %v1684
      %v1808 = vpack.c.b16 %v1688, %v1685
      %v1809 = vpack.c.b16 %v1689, %v1686
      %v1810 = vpack.c.b16 %v1693, %v1690
      %v1811 = vpack.c.b16 %v1694, %v1691
      %v1812 = vpack.c.b16 %v1695, %v1692
      %v1813 = vpack.c.b16 %v1699, %v1696
      %v1814 = vpack.c.b16 %v1700, %v1697
      %v1815 = vpack.c.b16 %v1701, %v1698
      %v1816 = vpack.c.b16 %v1705, %v1702
      %v1817 = vpack.c.b16 %v1706, %v1703
      %v1818 = vpack.c.b16 %v1707, %v1704
      %v1819 = vpack.c.b16 %v1711, %v1708
      %v1820 = vpack.c.b16 %v1712, %v1709
      %v1821 = vpack.c.b16 %v1713, %v1710
      %v1822 = vpack.c.b16 %v1717, %v1714
      %v1823 = vpack.c.b16 %v1718, %v1715
      %v1824 = vpack.c.b16 %v1719, %v1716
      %v1825 = vpack.c.b16 %v1723, %v1720
      %v1826 = vpack.c.b16 %v1724, %v1721
      %v1827 = vpack.c.b16 %v1725, %v1722
      %v1828 = vpack.c.b16 %v1729, %v1726
      %v1829 = vpack.c.b16 %v1730, %v1727
      %v1830 = vpack.c.b16 %v1731, %v1728
      %v1831 = vpack.c.b16 %v1735, %v1732
      %v1832 = vpack.c.b16 %v1736, %v1733
      %v1833 = vpack.c.b16 %v1737, %v1734
      %v1834 = vpack.c.b16 %v1741, %v1738
      %v1835 = vpack.c.b16 %v1742, %v1739
      %v1836 = vpack.c.b16 %v1743, %v1740
      %v1837 = vpack.c.b16 %v1747, %v1744
      %v1838 = vpack.c.b16 %v1748, %v1745
      %v1839 = vpack.c.b16 %v1749, %v1746
      %v1840 = vpack.c.b16 %v1753, %v1750
      %v1841 = vpack.c.b16 %v1754, %v1751
      %v1842 = vpack.c.b16 %v1755, %v1752
      %v1843 = vpack.c.b16 %v1759, %v1756
      %v1844 = vpack.c.b16 %v1760, %v1757
      %v1845 = vpack.c.b16 %v1761, %v1758
      %v1846 = vpack.c.b16 %v1765, %v1762
      %v1847 = vpack.c.b16 %v1766, %v1763
      %v1848 = vpack.c.b16 %v1767, %v1764
      %v1849 = vpack.c.b16 %v1771, %v1768
      %v1850 = vpack.c.b16 %v1772, %v1769
      %v1851 = vpack.c.b16 %v1773, %v1770
      %v1852 = vpack.c.b16 %v1777, %v1774
      %v1853 = vpack.c.b16 %v1778, %v1775
      %v1854 = vpack.c.b16 %v1779, %v1776
      %v1855 = vpack.c.b16 %v1783, %v1780
      %v1856 = vpack.c.b16 %v1784, %v1781
      %v1857 = vpack.c.b16 %v1785, %v1782
      %1930 = vmatprep.subr.bf16.mxu0 %v1808
      %1931 = vmatpush1.bf16.msra.mxu0 %v1807
      %1932 = vmatprep.subr.bf16.mxu0 %v1805
      %1933 = vmatpush1.bf16.msra.mxu0 %v1804
      %1934 = vmatprep.subr.bf16.mxu0 %v1802
      %1935 = vmatpush1.bf16.msra.mxu0 %v1801
      %1936 = vmatprep.subr.bf16.mxu0 %v1799
      %1937 = vmatpush1.bf16.msra.mxu0 %v1798
      %1938 = vmatprep.subr.bf16.mxu0 %v1796
      %1939 = vmatpush1.bf16.msra.mxu0 %v1795
      %1940 = vmatprep.subr.bf16.mxu0 %v1793
      %1941 = vmatpush1.bf16.msra.mxu0 %v1792
      %1942 = vmatprep.subr.bf16.mxu0 %v1790
      %1943 = vmatpush1.bf16.msra.mxu0 %v1789
      %1944 = vmatprep.subr.bf16.mxu0 %v1787
      %1945 = vmatpush1.bf16.msra.mxu0 %v1786
      %1946 = vmatprep.subr.bf16.mxu0 %v1832
      %1947 = vmatpush2.bf16.msra.mxu0 %v1831
      %1948 = vmatprep.subr.bf16.mxu0 %v1829
      %1949 = vmatpush2.bf16.msra.mxu0 %v1828
      %1950 = vmatprep.subr.bf16.mxu0 %v1826
      %1951 = vmatpush2.bf16.msra.mxu0 %v1825
      %1952 = vmatprep.subr.bf16.mxu0 %v1823
      %1953 = vmatpush2.bf16.msra.mxu0 %v1822
      %1954 = vmatprep.subr.bf16.mxu0 %v1820
      %1955 = vmatpush2.bf16.msra.mxu0 %v1819
      %1956 = vmatprep.subr.bf16.mxu0 %v1817
      %1957 = vmatpush2.bf16.msra.mxu0 %v1816
      %1958 = vmatprep.subr.bf16.mxu0 %v1814
      %1959 = vmatpush2.bf16.msra.mxu0 %v1813
      %1960 = vmatprep.subr.bf16.mxu0 %v1811
      %1961 = vmatpush2.bf16.msra.mxu0 %v1810
      %1962 = vmatprep.mubr.bf16.mxu0 %v1431
      %1963 = vmatmul.mubr.bf16.gmra.mxu0 %v1430
      %v1964 = vpop.f32.mrf.mxu0
      %v1965 = vadd.f32 %v1534, %v1964
      %v1966 = vpop.f32.mrf.mxu0
      %v1967 = vadd.f32 %v1538, %v1966
      %v1968 = vpop.f32.mrf.mxu0
      %v1969 = vpop.f32.mrf.mxu0
      %1970 = vdwg.mxu0
      %1971 = vmatprep.subr.bf16.mxu0 %v1856
      %1972 = vmatpush1.bf16.msra.mxu0 %v1855
      %1973 = vmatprep.subr.bf16.mxu0 %v1853
      %1974 = vmatpush1.bf16.msra.mxu0 %v1852
      %1975 = vmatprep.subr.bf16.mxu0 %v1850
      %1976 = vmatpush1.bf16.msra.mxu0 %v1849
      %1977 = vmatprep.subr.bf16.mxu0 %v1847
      %1978 = vmatpush1.bf16.msra.mxu0 %v1846
      %1979 = vmatprep.subr.bf16.mxu0 %v1844
      %1980 = vmatpush1.bf16.msra.mxu0 %v1843
      %1981 = vmatprep.subr.bf16.mxu0 %v1841
      %1982 = vmatpush1.bf16.msra.mxu0 %v1840
      %1983 = vmatprep.subr.bf16.mxu0 %v1838
      %1984 = vmatpush1.bf16.msra.mxu0 %v1837
      %1985 = vmatprep.subr.bf16.mxu0 %v1835
      %1986 = vmatpush1.bf16.msra.mxu0 %v1834
      %1987 = vmatprep.subr.bf16.mxu0 0
      %1988 = vmatpush2.bf16.msra.mxu0 0
      %1989 = vmatprep.subr.bf16.mxu0 0
      %1990 = vmatpush2.bf16.msra.mxu0 0
      %1991 = vmatprep.subr.bf16.mxu0 0
      %1992 = vmatpush2.bf16.msra.mxu0 0
      %1993 = vmatprep.subr.bf16.mxu0 0
      %1994 = vmatpush2.bf16.msra.mxu0 0
      %1995 = vmatprep.subr.bf16.mxu0 0
      %1996 = vmatpush2.bf16.msra.mxu0 0
      %1997 = vmatprep.subr.bf16.mxu0 0
      %1998 = vmatpush2.bf16.msra.mxu0 0
      %1999 = vmatprep.subr.bf16.mxu0 0
      %2000 = vmatpush2.bf16.msra.mxu0 0
      %2001 = vmatprep.subr.bf16.mxu0 0
      %2002 = vmatpush2.bf16.msra.mxu0 0
      %2003 = vmatprep.mubr.bf16.mxu0 0
      %2004 = vmatmul.mubr.bf16.gmra.mxu0 %v1432
      %v2005 = vpop.f32.mrf.mxu0
      %v2006 = vadd.f32 %v1965, %v2005
      %v2007 = vpop.f32.mrf.mxu0
      %v2008 = vadd.f32 %v1967, %v2007
      %v2009 = vpop.f32.mrf.mxu0
      %v2010 = vpop.f32.mrf.mxu0
      %2011 = vdwg.mxu0
      %2012 = vmatprep.subr.bf16.mxu0 0
      %2013 = vmatpush1.bf16.msra.mxu0 %v1809
      %2014 = vmatprep.subr.bf16.mxu0 0
      %2015 = vmatpush1.bf16.msra.mxu0 %v1806
      %2016 = vmatprep.subr.bf16.mxu0 0
      %2017 = vmatpush1.bf16.msra.mxu0 %v1803
      %2018 = vmatprep.subr.bf16.mxu0 0
      %2019 = vmatpush1.bf16.msra.mxu0 %v1800
      %2020 = vmatprep.subr.bf16.mxu0 0
      %2021 = vmatpush1.bf16.msra.mxu0 %v1797
      %2022 = vmatprep.subr.bf16.mxu0 0
      %2023 = vmatpush1.bf16.msra.mxu0 %v1794
      %2024 = vmatprep.subr.bf16.mxu0 0
      %2025 = vmatpush1.bf16.msra.mxu0 %v1791
      %2026 = vmatprep.subr.bf16.mxu0 0
      %2027 = vmatpush1.bf16.msra.mxu0 %v1788
      %2028 = vmatprep.subr.bf16.mxu0 0
      %2029 = vmatpush2.bf16.msra.mxu0 %v1833
      %2030 = vmatprep.subr.bf16.mxu0 0
      %2031 = vmatpush2.bf16.msra.mxu0 %v1830
      %2032 = vmatprep.subr.bf16.mxu0 0
      %2033 = vmatpush2.bf16.msra.mxu0 %v1827
      %2034 = vmatprep.subr.bf16.mxu0 0
      %2035 = vmatpush2.bf16.msra.mxu0 %v1824
      %2036 = vmatprep.subr.bf16.mxu0 0
      %2037 = vmatpush2.bf16.msra.mxu0 %v1821
      %2038 = vmatprep.subr.bf16.mxu0 0
      %2039 = vmatpush2.bf16.msra.mxu0 %v1818
      %2040 = vmatprep.subr.bf16.mxu0 0
      %2041 = vmatpush2.bf16.msra.mxu0 %v1815
      %2042 = vmatprep.subr.bf16.mxu0 0
      %2043 = vmatpush2.bf16.msra.mxu0 %v1812
      %2044 = vmatprep.mubr.bf16.mxu0 %v1431
      %2045 = vmatmul.mubr.bf16.gmra.mxu0 %v1430
      %v2046 = vpop.f32.mrf.mxu0
      %v2047 = vadd.f32 %v1542, %v2046
      %v2048 = vpop.f32.mrf.mxu0
      %v2049 = vpop.f32.mrf.mxu0
      %v2050 = vpop.f32.mrf.mxu0
      %2051 = vdwg.mxu0
      %2052 = vmatprep.subr.bf16.mxu0 0
      %2053 = vmatpush1.bf16.msra.mxu0 %v1857
      %2054 = vmatprep.subr.bf16.mxu0 0
      %2055 = vmatpush1.bf16.msra.mxu0 %v1854
      %2056 = vmatprep.subr.bf16.mxu0 0
      %2057 = vmatpush1.bf16.msra.mxu0 %v1851
      %2058 = vmatprep.subr.bf16.mxu0 0
      %2059 = vmatpush1.bf16.msra.mxu0 %v1848
      %2060 = vmatprep.subr.bf16.mxu0 0
      %2061 = vmatpush1.bf16.msra.mxu0 %v1845
      %2062 = vmatprep.subr.bf16.mxu0 0
      %2063 = vmatpush1.bf16.msra.mxu0 %v1842
      %2064 = vmatprep.subr.bf16.mxu0 0
      %2065 = vmatpush1.bf16.msra.mxu0 %v1839
      %2066 = vmatprep.subr.bf16.mxu0 0
      %2067 = vmatpush1.bf16.msra.mxu0 %v1836
      %2068 = vmatprep.subr.bf16.mxu0 0
      %2069 = vmatpush2.bf16.msra.mxu0 0
      %2070 = vmatprep.subr.bf16.mxu0 0
      %2071 = vmatpush2.bf16.msra.mxu0 0
      %2072 = vmatprep.subr.bf16.mxu0 0
      %2073 = vmatpush2.bf16.msra.mxu0 0
      %2074 = vmatprep.subr.bf16.mxu0 0
      %2075 = vmatpush2.bf16.msra.mxu0 0
      %2076 = vmatprep.subr.bf16.mxu0 0
      %2077 = vmatpush2.bf16.msra.mxu0 0
      %2078 = vmatprep.subr.bf16.mxu0 0
      %2079 = vmatpush2.bf16.msra.mxu0 0
      %2080 = vmatprep.subr.bf16.mxu0 0
      %2081 = vmatpush2.bf16.msra.mxu0 0
      %2082 = vmatprep.subr.bf16.mxu0 0
      %2083 = vmatpush2.bf16.msra.mxu0 0
      %2084 = vmatprep.mubr.bf16.mxu0 0
      %2085 = vmatmul.mubr.bf16.gmra.mxu0 %v1432
      %v2086 = vpop.f32.mrf.mxu0
      %v2087 = vadd.f32 %v2047, %v2086
      %v2088 = vpop.f32.mrf.mxu0
      %v2089 = vpop.f32.mrf.mxu0
      %v2090 = vpop.f32.mrf.mxu0
      %2091 = vdwg.mxu0
      %v2092 = vmax.f32 %v2006, 0.0
      %v2093 = vmax.f32 %v2008, 0.0
      %v2094 = vmax.f32 %v2087, 0.0
      %2095 = vst [vmem:[%s278] sm:$0xff] %v2092
      %2096 = vst [vmem:[%s278 + $0x8] sm:$0xff] %v2093
      %2097 = vst [vmem:[%s278 + $0x10] sm:$0xff] %v2094
      %p2098 = scmp.lt.s32.totalorder %s18, 1
      %s2099 = scalar_select %p2098, %s18, 1
      %s2100 = smul.addr %s2099, 3
      %s2101 = smul.addr %s2100, 8
      %s2102 = scalar_lea.vmem %s7, %s2101
      // Predicated region
      $region49: #{cnn_forward.5} parent=47 // pred_check
        %p2103 = pneg %p188
      $region50: #{cnn_forward.5} parent=47 // pred_check_branch
        %2105 = sbr.rel (%p2103) target = $region52
      $region51: #{cnn_forward.5} parent=47 // pred_region
        _
      $region52: #{cnn_forward.5} parent=47 // pred_fallthru
        _
    $region48: #{cnn_forward.5} parent=5 // pred_fallthru
      _
    %p2106 = scmp.le.s32.totalorder 2, %s13
    // Predicated region
    $region53: #{cnn_forward.5} parent=5 // pred_check
      %p2107 = pneg %p2106
    $region54: #{cnn_forward.5} parent=5 // pred_check_branch
      %2109 = sbr.rel (%p2107) target = $region56
    $region55: #{cnn_forward.5} parent=5 // pred_region
      %s2110 = ssub.s32 %s13, 2
      // Predicated region
      $region57: #{cnn_forward.5} parent=55 // pred_check
        %p2111 = pneg %p194
      $region58: #{cnn_forward.5} parent=55 // pred_check_branch
        %2113 = sbr.rel (%p2111) target = $region60
      $region59: #{cnn_forward.5} parent=55 // pred_region
        %p2114 = scmp.lt.s32.totalorder %s19, 1
        %s2115 = scalar_select %p2114, %s19, 1
        %s2116 = smul.addr %s2115, 3
        %s2117 = smul.addr %s2116, 8
        %s2118 = scalar_lea.vmem %s7, %s2117
      $region60: #{cnn_forward.5} parent=55 // pred_fallthru
        _
    $region56: #{cnn_forward.5} parent=5 // pred_fallthru
      _
  $region6: #{cnn_forward.5} parent=0 // loop_footer
    %s17 = sadd.s32 1, %s13
  $region7: #{cnn_forward.5} parent=0 // loop_footer_branch
    %12 = sbr.rel target = $region3
  $region8: #{cnn_forward.5} parent=0 // loop_exit
    _

</llo_original>
